<compile_context>
chip_gen: v6e
topology: v6e:2x2x1
jax: 0.10.0
libtpu: 0.0.40
codegen_flags: <defaults>
</compile_context>

<pallas_src>
import functools
import math

import jax
import jax.numpy as jnp
from jax.experimental import pallas as pl
from jax.experimental.pallas import tpu as pltpu

VMEM_SPEC = pl.BlockSpec(memory_space=pltpu.MemorySpace.VMEM)


# ---------------------------------------------------------------- kernels ----

def _conv_relu_pool_kernel(x_ref, w_ref, b_ref, o_ref, *, H, W, Cout):
    """Fused 3x3/pad-1 conv + bias + ReLU + 2x2/stride-2 max-pool for one image.

    x_ref: (1, H+2, W+2, Cin)  padded NHWC input block
    w_ref: (9*Cin, Cout)       weight, rows ordered (ky, kx, cin)   [bf16]
    b_ref: (1, Cout)           bias                                  [f32]
    o_ref: (1, H/2, W/2, Cout) pooled output                         [bf16]
    """
    H2, W2 = H // 2, W // 2
    xp = x_ref[0]                                            # (H+2, W+2, Cin)

    # im2col via static slices of the padded VMEM block (no HBM expansion).
    cols = [xp[ky:ky + H, kx:kx + W, :] for ky in range(3) for kx in range(3)]
    patches = jnp.concatenate(cols, axis=-1)                 # (H, W, 9*Cin)
    patches = patches.reshape(H * W, patches.shape[-1]).astype(w_ref.dtype)

    # MXU matmul, f32 accumulation; bias + ReLU epilogue stays f32 (v5e-safe).
    y = jnp.dot(patches, w_ref[...], preferred_element_type=jnp.float32)
    y = jnp.maximum(y + b_ref[...], 0.0)                     # (H*W, Cout)

    # 2x2 / stride-2 max-pool, fully in VMEM.
    y = y.reshape(H2, 2, W, Cout)
    y = jnp.maximum(y[:, 0], y[:, 1])                        # pool over rows -> (H2, W, Cout)
    y = y.reshape(H2, W2, 2, Cout)
    y = jnp.maximum(y[:, :, 0], y[:, :, 1])                  # pool over cols -> (H2, W2, Cout)

    o_ref[0] = y.astype(o_ref.dtype)


def _mlp_softmax_kernel(x_ref, w1_ref, b1_ref, w2_ref, b2_ref, logits_ref, proba_ref):
    """Fused fc1 + ReLU + fc2 + softmax.  x:(B,Din) w1:(Din,256) w2:(256,C)."""
    h = jnp.dot(x_ref[...], w1_ref[...], preferred_element_type=jnp.float32)
    h = jnp.maximum(h + b1_ref[...], 0.0)
    logits = jnp.dot(h.astype(w2_ref.dtype), w2_ref[...],
                     preferred_element_type=jnp.float32)
    logits = logits + b2_ref[...]
    logits_ref[...] = logits

    m = jnp.max(logits, axis=-1, keepdims=True)
    e = jnp.exp(logits - m)
    s = jnp.sum(e, axis=-1, keepdims=True)
    proba_ref[...] = e * pl.reciprocal(s, approx=True)


# --------------------------------------------------------------- wrappers ----

def conv_relu_pool(x_padded, w, b, out_dtype=jnp.bfloat16):
    """x_padded: (B, H+2, W+2, Cin) NHWC, w: (9*Cin, Cout), b: (1, Cout)."""
    B, Hp, Wp, Cin = x_padded.shape
    H, W = Hp - 2, Wp - 2
    H2, W2 = H // 2, W // 2
    Cout = w.shape[1]
    kernel = functools.partial(_conv_relu_pool_kernel, H=H, W=W, Cout=Cout)
    return pl.pallas_call(
        kernel,
        out_shape=jax.ShapeDtypeStruct((B, H2, W2, Cout), out_dtype),
        grid=(B,),
        in_specs=[
            pl.BlockSpec((1, Hp, Wp, Cin), lambda b_: (b_, 0, 0, 0)),
            pl.BlockSpec((9 * Cin, Cout), lambda b_: (0, 0)),
            pl.BlockSpec((1, Cout), lambda b_: (0, 0)),
        ],
        out_specs=pl.BlockSpec((1, H2, W2, Cout), lambda b_: (b_, 0, 0, 0)),
        compiler_params=pltpu.CompilerParams(dimension_semantics=("parallel",)),
    )(x_padded, w, b)


def mlp_head(x, w1, b1, w2, b2):
    B, Din = x.shape
    Dh = w1.shape[1]
    Dc = w2.shape[1]
    cost = pl.CostEstimate(
        flops=2 * B * (Din * Dh + Dh * Dc),
        transcendentals=B * Dc,
        bytes_accessed=(x.size * x.dtype.itemsize
                        + w1.size * w1.dtype.itemsize + w2.size * w2.dtype.itemsize
                        + b1.size * 4 + b2.size * 4 + 2 * B * Dc * 4),
    )
    return pl.pallas_call(
        _mlp_softmax_kernel,
        out_shape=(jax.ShapeDtypeStruct((B, Dc), jnp.float32),
                   jax.ShapeDtypeStruct((B, Dc), jnp.float32)),
        in_specs=[VMEM_SPEC] * 5,
        out_specs=(VMEM_SPEC, VMEM_SPEC),
        cost_estimate=cost,
    )(x, w1, b1, w2, b2)


# ------------------------------------------------------------------ params ----

def calc_out_dim(in_dim, kernel_size, stride=1, padding=0):
    return math.floor((in_dim - kernel_size + 2 * padding) / stride) + 1


def init_torch_params(key, input_dim, n_classes):
    """Torch-layout (Cout,Cin,kH,kW) / (Dout,Din) f32 params with torch-default uniform init."""
    out_dim = calc_out_dim(input_dim, 3, 1, 1)
    out_dim = calc_out_dim(out_dim, 2, 2)
    out_dim = calc_out_dim(out_dim, 3, 1, 1)
    out_dim = calc_out_dim(out_dim, 2, 2)
    flat_dim = out_dim * out_dim * 64
    ks = jax.random.split(key, 8)

    def u(kw, shape, fan_in):
        bound = 1.0 / math.sqrt(fan_in)
        return jax.random.uniform(kw, shape, jnp.float32, -bound, bound)

    tp = {
        "conv1_w": u(ks[0], (32, 1, 3, 3), 1 * 9),
        "conv1_b": u(ks[1], (32,), 1 * 9),
        "conv2_w": u(ks[2], (64, 32, 3, 3), 32 * 9),
        "conv2_b": u(ks[3], (64,), 32 * 9),
        "fc1_w":   u(ks[4], (256, flat_dim), flat_dim),
        "fc1_b":   u(ks[5], (256,), flat_dim),
        "fc2_w":   u(ks[6], (n_classes, 256), 256),
        "fc2_b":   u(ks[7], (n_classes,), 256),
    }
    return tp, out_dim


def prepare_params(tp, out_dim):
    """One-time re-layout + bf16 cast so the forward pass does zero weight transposes.

    * conv weights -> (9*Cin, Cout), rows ordered (ky, kx, cin) to match the in-kernel gather.
    * fc1 weight   -> (out*out*64, 256) with rows ordered (h, w, c) so the NHWC-pooled conv2
      output flattens into fc1's input order via a free contiguous reshape (replaces the
      torch (c,h,w) flatten + XLA transpose).
    * fc2 weight   -> (256, n_classes).
    """
    n_classes = tp["fc2_w"].shape[0]
    return {
        "conv1_w": tp["conv1_w"].transpose(2, 3, 1, 0).reshape(9 * 1, 32).astype(jnp.bfloat16),
        "conv1_b": tp["conv1_b"].reshape(1, 32).astype(jnp.float32),
        "conv2_w": tp["conv2_w"].transpose(2, 3, 1, 0).reshape(9 * 32, 64).astype(jnp.bfloat16),
        "conv2_b": tp["conv2_b"].reshape(1, 64).astype(jnp.float32),
        "fc1_w": tp["fc1_w"].reshape(256, 64, out_dim, out_dim)
                            .transpose(2, 3, 1, 0)
                            .reshape(out_dim * out_dim * 64, 256).astype(jnp.bfloat16),
        "fc1_b": tp["fc1_b"].reshape(1, 256).astype(jnp.float32),
        "fc2_w": tp["fc2_w"].T.astype(jnp.bfloat16),
        "fc2_b": tp["fc2_b"].reshape(1, n_classes).astype(jnp.float32),
    }


# ----------------------------------------------------------------- forward ----

@jax.jit
def network_forward(params, x_nchw):
    B = x_nchw.shape[0]

    # conv1 + ReLU + pool (fused).  Only glue: NHWC + 1-px border pad of the raw input.
    xp1 = jnp.pad(jnp.transpose(x_nchw, (0, 2, 3, 1)), ((0, 0), (1, 1), (1, 1), (0, 0)))
    y1 = conv_relu_pool(xp1, params["conv1_w"], params["conv1_b"])     # (B, 8, 8, 32) bf16

    # conv2 + ReLU + pool (fused).  Only glue: 1-px border pad of a (B,8,8,32) bf16 tensor.
    xp2 = jnp.pad(y1, ((0, 0), (1, 1), (1, 1), (0, 0)))
    y2 = conv_relu_pool(xp2, params["conv2_w"], params["conv2_b"])     # (B, 4, 4, 64) bf16

    # flatten is a free contiguous reshape (fc1 weight was pre-permuted to (h,w,c) order).
    flat = y2.reshape(B, -1)                                           # (B, 1024)

    # fc1 + ReLU + fc2 + softmax (fused).
    logits, proba = mlp_head(flat, params["fc1_w"], params["fc1_b"],
                             params["fc2_w"], params["fc2_b"])
    return logits, proba


# --------------------------------------------------------------- reference ----

def reference_forward(tp, x_nchw):
    """Pure-JAX f32 reference matching the PyTorch module exactly."""
    dn = ("NCHW", "OIHW", "NCHW")
    y = jax.lax.conv_general_dilated(x_nchw, tp["conv1_w"], (1, 1), "SAME", dimension_numbers=dn)
    y = jnp.maximum(y + tp["conv1_b"][None, :, None, None], 0.0)
    y = jax.lax.reduce_window(y, -jnp.inf, jax.lax.max, (1, 1, 2, 2), (1, 1, 2, 2), "VALID")
    y = jax.lax.conv_general_dilated(y, tp["conv2_w"], (1, 1), "SAME", dimension_numbers=dn)
    y = jnp.maximum(y + tp["conv2_b"][None, :, None, None], 0.0)
    y = jax.lax.reduce_window(y, -jnp.inf, jax.lax.max, (1, 1, 2, 2), (1, 1, 2, 2), "VALID")
    flat = y.reshape(y.shape[0], -1)                       # torch flatten: (c, h, w) order
    h = jnp.maximum(flat @ tp["fc1_w"].T + tp["fc1_b"], 0.0)
    logits = h @ tp["fc2_w"].T + tp["fc2_b"]
    proba = jax.nn.softmax(logits, axis=1)
    return logits, proba


# ------------------------------------------------------------------- main ----

if __name__ == "__main__":
    input_dim = 16
    n_classes = 10
    batch = 2

    key = jax.random.PRNGKey(0)
    k_param, k_x = jax.random.split(key)
    torch_params, out_dim = init_torch_params(k_param, input_dim, n_classes)
    assert out_dim == 4
    params = prepare_params(torch_params, out_dim)

    x = jax.random.normal(k_x, (batch, 1, input_dim, input_dim), jnp.float32)

    logits, proba = network_forward(params, x)
    jax.block_until_ready((logits, proba))

    assert logits.shape == (batch, n_classes)
    assert proba.shape == (batch, n_classes)
    assert bool(jnp.allclose(jnp.sum(proba, axis=1), 1.0, atol=1e-2))

    ref_logits, ref_proba = reference_forward(torch_params, x)
    assert bool(jnp.allclose(logits, ref_logits, atol=3e-2, rtol=3e-2)), (
        "logits mismatch, max abs err = %s" % float(jnp.max(jnp.abs(logits - ref_logits))))
    assert bool(jnp.allclose(proba, ref_proba, atol=1e-2)), (
        "proba mismatch, max abs err = %s" % float(jnp.max(jnp.abs(proba - ref_proba))))

    print("KERNEL_OK")
</pallas_src>

<mosaic_0001>
module attributes {stable_mosaic.version = 11 : i64} {
  func.func @_conv_relu_pool_kernel(%arg0: i32, %arg1: memref<1x18x18x1xf32, #tpu.memory_space<vmem>>, %arg2: memref<9x32xbf16, #tpu.memory_space<vmem>>, %arg3: memref<1x32xf32, #tpu.memory_space<vmem>>, %arg4: memref<1x8x8x32xbf16, #tpu.memory_space<vmem>>) attributes {dimension_semantics = [#tpu.dimension_semantics<parallel>], iteration_bounds = array<i64: 2>, scalar_prefetch = 0 : i64, scratch_operands = 0 : i64, tpu.core_type = #tpu.core_type<tc>, window_params = [{transform_indices = @transform_0, window_bounds = array<i64: 1, 18, 18, 1>}, {pipeline_mode = #tpu.pipeline_mode<synchronous>, transform_indices = @transform_1, window_bounds = array<i64: 9, 32>}, {pipeline_mode = #tpu.pipeline_mode<synchronous>, transform_indices = @transform_2, window_bounds = array<i64: 1, 32>}, {transform_indices = @transform_3, window_bounds = array<i64: 1, 8, 8, 32>}]} {
    %c0 = arith.constant 0 : index
    %c0_0 = arith.constant 0 : index
    %c0_1 = arith.constant 0 : index
    %c0_2 = arith.constant 0 : index
    %0 = vector.load %arg1[%c0, %c0_0, %c0_1, %c0_2] : memref<1x18x18x1xf32, #tpu.memory_space<vmem>>, vector<1x18x18x1xf32>
    %1 = vector.shape_cast %0 : vector<1x18x18x1xf32> to vector<18x18x1xf32>
    %2 = vector.extract_strided_slice %1 {offsets = [0, 0, 0], sizes = [16, 16, 1], strides = [1, 1, 1]} : vector<18x18x1xf32> to vector<16x16x1xf32>
    %3 = vector.extract_strided_slice %1 {offsets = [0, 1, 0], sizes = [16, 16, 1], strides = [1, 1, 1]} : vector<18x18x1xf32> to vector<16x16x1xf32>
    %4 = vector.extract_strided_slice %1 {offsets = [0, 2, 0], sizes = [16, 16, 1], strides = [1, 1, 1]} : vector<18x18x1xf32> to vector<16x16x1xf32>
    %5 = vector.extract_strided_slice %1 {offsets = [1, 0, 0], sizes = [16, 16, 1], strides = [1, 1, 1]} : vector<18x18x1xf32> to vector<16x16x1xf32>
    %6 = vector.extract_strided_slice %1 {offsets = [1, 1, 0], sizes = [16, 16, 1], strides = [1, 1, 1]} : vector<18x18x1xf32> to vector<16x16x1xf32>
    %7 = vector.extract_strided_slice %1 {offsets = [1, 2, 0], sizes = [16, 16, 1], strides = [1, 1, 1]} : vector<18x18x1xf32> to vector<16x16x1xf32>
    %8 = vector.extract_strided_slice %1 {offsets = [2, 0, 0], sizes = [16, 16, 1], strides = [1, 1, 1]} : vector<18x18x1xf32> to vector<16x16x1xf32>
    %9 = vector.extract_strided_slice %1 {offsets = [2, 1, 0], sizes = [16, 16, 1], strides = [1, 1, 1]} : vector<18x18x1xf32> to vector<16x16x1xf32>
    %10 = vector.extract_strided_slice %1 {offsets = [2, 2, 0], sizes = [16, 16, 1], strides = [1, 1, 1]} : vector<18x18x1xf32> to vector<16x16x1xf32>
    %11 = tpu.concatenate %2, %3, %4, %5, %6, %7, %8, %9, %10 in 2 : vector<16x16x1xf32>, vector<16x16x1xf32>, vector<16x16x1xf32>, vector<16x16x1xf32>, vector<16x16x1xf32>, vector<16x16x1xf32>, vector<16x16x1xf32>, vector<16x16x1xf32>, vector<16x16x1xf32> -> vector<16x16x9xf32>
    %12 = vector.shape_cast %11 : vector<16x16x9xf32> to vector<256x9xf32>
    %13 = arith.truncf %12 : vector<256x9xf32> to vector<256x9xbf16>
    %c0_3 = arith.constant 0 : index
    %c0_4 = arith.constant 0 : index
    %14 = vector.load %arg2[%c0_3, %c0_4] : memref<9x32xbf16, #tpu.memory_space<vmem>>, vector<9x32xbf16>
    %cst = arith.constant dense<0.000000e+00> : vector<256x32xf32>
    %15 = tpu.matmul %13, %14, %cst {dimension_numbers = #tpu.dot_dimension_numbers<[1], [0], [0], [1], [0, 0, 1, 1], [], []>} : vector<256x9xbf16>, vector<9x32xbf16>, vector<256x32xf32> -> vector<256x32xf32>
    %c0_5 = arith.constant 0 : index
    %c0_6 = arith.constant 0 : index
    %16 = vector.load %arg3[%c0_5, %c0_6] : memref<1x32xf32, #tpu.memory_space<vmem>>, vector<1x32xf32>
    %17 = vector.broadcast %16 : vector<1x32xf32> to vector<256x32xf32>
    %18 = arith.addf %15, %17 : vector<256x32xf32>
    %cst_7 = arith.constant 0.000000e+00 : f32
    %19 = vector.broadcast %cst_7 : f32 to vector<256x32xf32>
    %20 = arith.maximumf %18, %19 : vector<256x32xf32>
    %21 = vector.shape_cast %20 : vector<256x32xf32> to vector<8x2x16x32xf32>
    %22 = vector.extract_strided_slice %21 {offsets = [0, 0, 0, 0], sizes = [8, 1, 16, 32], strides = [1, 1, 1, 1]} : vector<8x2x16x32xf32> to vector<8x1x16x32xf32>
    %23 = vector.shape_cast %22 : vector<8x1x16x32xf32> to vector<8x16x32xf32>
    %24 = vector.extract_strided_slice %21 {offsets = [0, 1, 0, 0], sizes = [8, 1, 16, 32], strides = [1, 1, 1, 1]} : vector<8x2x16x32xf32> to vector<8x1x16x32xf32>
    %25 = vector.shape_cast %24 : vector<8x1x16x32xf32> to vector<8x16x32xf32>
    %26 = arith.maximumf %23, %25 : vector<8x16x32xf32>
    %27 = vector.shape_cast %26 : vector<8x16x32xf32> to vector<8x8x2x32xf32>
    %28 = vector.extract_strided_slice %27 {offsets = [0, 0, 0, 0], sizes = [8, 8, 1, 32], strides = [1, 1, 1, 1]} : vector<8x8x2x32xf32> to vector<8x8x1x32xf32>
    %29 = vector.shape_cast %28 : vector<8x8x1x32xf32> to vector<8x8x32xf32>
    %30 = vector.extract_strided_slice %27 {offsets = [0, 0, 1, 0], sizes = [8, 8, 1, 32], strides = [1, 1, 1, 1]} : vector<8x8x2x32xf32> to vector<8x8x1x32xf32>
    %31 = vector.shape_cast %30 : vector<8x8x1x32xf32> to vector<8x8x32xf32>
    %32 = arith.maximumf %29, %31 : vector<8x8x32xf32>
    %33 = arith.truncf %32 : vector<8x8x32xf32> to vector<8x8x32xbf16>
    %c0_8 = arith.constant 0 : index
    %c0_9 = arith.constant 0 : index
    %c0_10 = arith.constant 0 : index
    %c0_11 = arith.constant 0 : index
    %34 = vector.load %arg4[%c0_8, %c0_9, %c0_10, %c0_11] : memref<1x8x8x32xbf16, #tpu.memory_space<vmem>>, vector<1x8x8x32xbf16>
    %35 = vector.shape_cast %34 : vector<1x8x8x32xbf16> to vector<8x8x32xbf16>
    %36 = vector.shape_cast %33 : vector<8x8x32xbf16> to vector<1x8x8x32xbf16>
    tpu.vector_store %arg4[%c0_8, %c0_9, %c0_10, %c0_11], %36 {strides = array<i32>} : memref<1x8x8x32xbf16, #tpu.memory_space<vmem>>, vector<1x8x8x32xbf16>,
    return
  }
  func.func @transform_0(%arg0: i32) -> (i32, i32, i32, i32) {
    %c0_i32 = arith.constant 0 : i32
    %c0_i32_0 = arith.constant 0 : i32
    %c0_i32_1 = arith.constant 0 : i32
    %c0_i32_2 = arith.constant 0 : i32
    return %arg0, %c0_i32, %c0_i32_0, %c0_i32_1 : i32, i32, i32, i32
  }
  func.func @transform_1(%arg0: i32) -> (i32, i32) {
    %c0_i32 = arith.constant 0 : i32
    %c0_i32_0 = arith.constant 0 : i32
    %c0_i32_1 = arith.constant 0 : i32
    return %c0_i32, %c0_i32_0 : i32, i32
  }
  func.func @transform_2(%arg0: i32) -> (i32, i32) {
    %c0_i32 = arith.constant 0 : i32
    %c0_i32_0 = arith.constant 0 : i32
    %c0_i32_1 = arith.constant 0 : i32
    return %c0_i32, %c0_i32_0 : i32, i32
  }
  func.func @transform_3(%arg0: i32) -> (i32, i32, i32, i32) {
    %c0_i32 = arith.constant 0 : i32
    %c0_i32_0 = arith.constant 0 : i32
    %c0_i32_1 = arith.constant 0 : i32
    %c0_i32_2 = arith.constant 0 : i32
    return %arg0, %c0_i32, %c0_i32_0, %c0_i32_1 : i32, i32, i32, i32
  }
}

module attributes {stable_mosaic.version = 11 : i64} {
  func.func @_conv_relu_pool_kernel(%arg0: i32, %arg1: memref<1x10x10x32xbf16, #tpu.memory_space<vmem>>, %arg2: memref<288x64xbf16, #tpu.memory_space<vmem>>, %arg3: memref<1x64xf32, #tpu.memory_space<vmem>>, %arg4: memref<1x4x4x64xbf16, #tpu.memory_space<vmem>>) attributes {dimension_semantics = [#tpu.dimension_semantics<parallel>], iteration_bounds = array<i64: 2>, scalar_prefetch = 0 : i64, scratch_operands = 0 : i64, tpu.core_type = #tpu.core_type<tc>, window_params = [{transform_indices = @transform_0, window_bounds = array<i64: 1, 10, 10, 32>}, {pipeline_mode = #tpu.pipeline_mode<synchronous>, transform_indices = @transform_1, window_bounds = array<i64: 288, 64>}, {pipeline_mode = #tpu.pipeline_mode<synchronous>, transform_indices = @transform_2, window_bounds = array<i64: 1, 64>}, {transform_indices = @transform_3, window_bounds = array<i64: 1, 4, 4, 64>}]} {
    %c0 = arith.constant 0 : index
    %c0_0 = arith.constant 0 : index
    %c0_1 = arith.constant 0 : index
    %c0_2 = arith.constant 0 : index
    %0 = vector.load %arg1[%c0, %c0_0, %c0_1, %c0_2] : memref<1x10x10x32xbf16, #tpu.memory_space<vmem>>, vector<1x10x10x32xbf16>
    %1 = vector.shape_cast %0 : vector<1x10x10x32xbf16> to vector<10x10x32xbf16>
    %2 = vector.extract_strided_slice %1 {offsets = [0, 0, 0], sizes = [8, 8, 32], strides = [1, 1, 1]} : vector<10x10x32xbf16> to vector<8x8x32xbf16>
    %3 = vector.extract_strided_slice %1 {offsets = [0, 1, 0], sizes = [8, 8, 32], strides = [1, 1, 1]} : vector<10x10x32xbf16> to vector<8x8x32xbf16>
    %4 = vector.extract_strided_slice %1 {offsets = [0, 2, 0], sizes = [8, 8, 32], strides = [1, 1, 1]} : vector<10x10x32xbf16> to vector<8x8x32xbf16>
    %5 = vector.extract_strided_slice %1 {offsets = [1, 0, 0], sizes = [8, 8, 32], strides = [1, 1, 1]} : vector<10x10x32xbf16> to vector<8x8x32xbf16>
    %6 = vector.extract_strided_slice %1 {offsets = [1, 1, 0], sizes = [8, 8, 32], strides = [1, 1, 1]} : vector<10x10x32xbf16> to vector<8x8x32xbf16>
    %7 = vector.extract_strided_slice %1 {offsets = [1, 2, 0], sizes = [8, 8, 32], strides = [1, 1, 1]} : vector<10x10x32xbf16> to vector<8x8x32xbf16>
    %8 = vector.extract_strided_slice %1 {offsets = [2, 0, 0], sizes = [8, 8, 32], strides = [1, 1, 1]} : vector<10x10x32xbf16> to vector<8x8x32xbf16>
    %9 = vector.extract_strided_slice %1 {offsets = [2, 1, 0], sizes = [8, 8, 32], strides = [1, 1, 1]} : vector<10x10x32xbf16> to vector<8x8x32xbf16>
    %10 = vector.extract_strided_slice %1 {offsets = [2, 2, 0], sizes = [8, 8, 32], strides = [1, 1, 1]} : vector<10x10x32xbf16> to vector<8x8x32xbf16>
    %11 = tpu.concatenate %2, %3, %4, %5, %6, %7, %8, %9, %10 in 2 : vector<8x8x32xbf16>, vector<8x8x32xbf16>, vector<8x8x32xbf16>, vector<8x8x32xbf16>, vector<8x8x32xbf16>, vector<8x8x32xbf16>, vector<8x8x32xbf16>, vector<8x8x32xbf16>, vector<8x8x32xbf16> -> vector<8x8x288xbf16>
    %12 = vector.shape_cast %11 : vector<8x8x288xbf16> to vector<64x288xbf16>
    %c0_3 = arith.constant 0 : index
    %c0_4 = arith.constant 0 : index
    %13 = vector.load %arg2[%c0_3, %c0_4] : memref<288x64xbf16, #tpu.memory_space<vmem>>, vector<288x64xbf16>
    %cst = arith.constant dense<0.000000e+00> : vector<64x64xf32>
    %14 = tpu.matmul %12, %13, %cst {dimension_numbers = #tpu.dot_dimension_numbers<[1], [0], [0], [1], [0, 0, 1, 1], [], []>} : vector<64x288xbf16>, vector<288x64xbf16>, vector<64x64xf32> -> vector<64x64xf32>
    %c0_5 = arith.constant 0 : index
    %c0_6 = arith.constant 0 : index
    %15 = vector.load %arg3[%c0_5, %c0_6] : memref<1x64xf32, #tpu.memory_space<vmem>>, vector<1x64xf32>
    %16 = vector.broadcast %15 : vector<1x64xf32> to vector<64x64xf32>
    %17 = arith.addf %14, %16 : vector<64x64xf32>
    %cst_7 = arith.constant 0.000000e+00 : f32
    %18 = vector.broadcast %cst_7 : f32 to vector<64x64xf32>
    %19 = arith.maximumf %17, %18 : vector<64x64xf32>
    %20 = vector.shape_cast %19 : vector<64x64xf32> to vector<4x2x8x64xf32>
    %21 = vector.extract_strided_slice %20 {offsets = [0, 0, 0, 0], sizes = [4, 1, 8, 64], strides = [1, 1, 1, 1]} : vector<4x2x8x64xf32> to vector<4x1x8x64xf32>
    %22 = vector.shape_cast %21 : vector<4x1x8x64xf32> to vector<4x8x64xf32>
    %23 = vector.extract_strided_slice %20 {offsets = [0, 1, 0, 0], sizes = [4, 1, 8, 64], strides = [1, 1, 1, 1]} : vector<4x2x8x64xf32> to vector<4x1x8x64xf32>
    %24 = vector.shape_cast %23 : vector<4x1x8x64xf32> to vector<4x8x64xf32>
    %25 = arith.maximumf %22, %24 : vector<4x8x64xf32>
    %26 = vector.shape_cast %25 : vector<4x8x64xf32> to vector<4x4x2x64xf32>
    %27 = vector.extract_strided_slice %26 {offsets = [0, 0, 0, 0], sizes = [4, 4, 1, 64], strides = [1, 1, 1, 1]} : vector<4x4x2x64xf32> to vector<4x4x1x64xf32>
    %28 = vector.shape_cast %27 : vector<4x4x1x64xf32> to vector<4x4x64xf32>
    %29 = vector.extract_strided_slice %26 {offsets = [0, 0, 1, 0], sizes = [4, 4, 1, 64], strides = [1, 1, 1, 1]} : vector<4x4x2x64xf32> to vector<4x4x1x64xf32>
    %30 = vector.shape_cast %29 : vector<4x4x1x64xf32> to vector<4x4x64xf32>
    %31 = arith.maximumf %28, %30 : vector<4x4x64xf32>
    %32 = arith.truncf %31 : vector<4x4x64xf32> to vector<4x4x64xbf16>
    %c0_8 = arith.constant 0 : index
    %c0_9 = arith.constant 0 : index
    %c0_10 = arith.constant 0 : index
    %c0_11 = arith.constant 0 : index
    %33 = vector.load %arg4[%c0_8, %c0_9, %c0_10, %c0_11] : memref<1x4x4x64xbf16, #tpu.memory_space<vmem>>, vector<1x4x4x64xbf16>
    %34 = vector.shape_cast %33 : vector<1x4x4x64xbf16> to vector<4x4x64xbf16>
    %35 = vector.shape_cast %32 : vector<4x4x64xbf16> to vector<1x4x4x64xbf16>
    tpu.vector_store %arg4[%c0_8, %c0_9, %c0_10, %c0_11], %35 {strides = array<i32>} : memref<1x4x4x64xbf16, #tpu.memory_space<vmem>>, vector<1x4x4x64xbf16>,
    return
  }
  func.func @transform_0(%arg0: i32) -> (i32, i32, i32, i32) {
    %c0_i32 = arith.constant 0 : i32
    %c0_i32_0 = arith.constant 0 : i32
    %c0_i32_1 = arith.constant 0 : i32
    %c0_i32_2 = arith.constant 0 : i32
    return %arg0, %c0_i32, %c0_i32_0, %c0_i32_1 : i32, i32, i32, i32
  }
  func.func @transform_1(%arg0: i32) -> (i32, i32) {
    %c0_i32 = arith.constant 0 : i32
    %c0_i32_0 = arith.constant 0 : i32
    %c0_i32_1 = arith.constant 0 : i32
    return %c0_i32, %c0_i32_0 : i32, i32
  }
  func.func @transform_2(%arg0: i32) -> (i32, i32) {
    %c0_i32 = arith.constant 0 : i32
    %c0_i32_0 = arith.constant 0 : i32
    %c0_i32_1 = arith.constant 0 : i32
    return %c0_i32, %c0_i32_0 : i32, i32
  }
  func.func @transform_3(%arg0: i32) -> (i32, i32, i32, i32) {
    %c0_i32 = arith.constant 0 : i32
    %c0_i32_0 = arith.constant 0 : i32
    %c0_i32_1 = arith.constant 0 : i32
    %c0_i32_2 = arith.constant 0 : i32
    return %arg0, %c0_i32, %c0_i32_0, %c0_i32_1 : i32, i32, i32, i32
  }
}

module attributes {stable_mosaic.version = 11 : i64} {
  func.func @_mlp_softmax_kernel(%arg0: memref<2x1024xbf16, #tpu.memory_space<vmem>>, %arg1: memref<1024x256xbf16, #tpu.memory_space<vmem>>, %arg2: memref<1x256xf32, #tpu.memory_space<vmem>>, %arg3: memref<256x10xbf16, #tpu.memory_space<vmem>>, %arg4: memref<1x10xf32, #tpu.memory_space<vmem>>, %arg5: memref<2x10xf32, #tpu.memory_space<vmem>>, %arg6: memref<2x10xf32, #tpu.memory_space<vmem>>) attributes {dimension_semantics = [], scalar_prefetch = 0 : i64, scratch_operands = 0 : i64, tpu.core_type = #tpu.core_type<tc>} {
    %c0 = arith.constant 0 : index
    %c0_0 = arith.constant 0 : index
    %0 = vector.load %arg0[%c0, %c0_0] : memref<2x1024xbf16, #tpu.memory_space<vmem>>, vector<2x1024xbf16>
    %c0_1 = arith.constant 0 : index
    %c0_2 = arith.constant 0 : index
    %1 = vector.load %arg1[%c0_1, %c0_2] : memref<1024x256xbf16, #tpu.memory_space<vmem>>, vector<1024x256xbf16>
    %cst = arith.constant dense<0.000000e+00> : vector<2x256xf32>
    %2 = tpu.matmul %0, %1, %cst {dimension_numbers = #tpu.dot_dimension_numbers<[1], [0], [0], [1], [0, 0, 1, 1], [], []>} : vector<2x1024xbf16>, vector<1024x256xbf16>, vector<2x256xf32> -> vector<2x256xf32>
    %c0_3 = arith.constant 0 : index
    %c0_4 = arith.constant 0 : index
    %3 = vector.load %arg2[%c0_3, %c0_4] : memref<1x256xf32, #tpu.memory_space<vmem>>, vector<1x256xf32>
    %4 = vector.broadcast %3 : vector<1x256xf32> to vector<2x256xf32>
    %5 = arith.addf %2, %4 : vector<2x256xf32>
    %cst_5 = arith.constant 0.000000e+00 : f32
    %6 = vector.broadcast %cst_5 : f32 to vector<2x256xf32>
    %7 = arith.maximumf %5, %6 : vector<2x256xf32>
    %8 = arith.truncf %7 : vector<2x256xf32> to vector<2x256xbf16>
    %c0_6 = arith.constant 0 : index
    %c0_7 = arith.constant 0 : index
    %9 = vector.load %arg3[%c0_6, %c0_7] : memref<256x10xbf16, #tpu.memory_space<vmem>>, vector<256x10xbf16>
    %cst_8 = arith.constant dense<0.000000e+00> : vector<2x10xf32>
    %10 = tpu.matmul %8, %9, %cst_8 {dimension_numbers = #tpu.dot_dimension_numbers<[1], [0], [0], [1], [0, 0, 1, 1], [], []>} : vector<2x256xbf16>, vector<256x10xbf16>, vector<2x10xf32> -> vector<2x10xf32>
    %c0_9 = arith.constant 0 : index
    %c0_10 = arith.constant 0 : index
    %11 = vector.load %arg4[%c0_9, %c0_10] : memref<1x10xf32, #tpu.memory_space<vmem>>, vector<1x10xf32>
    %12 = vector.broadcast %11 : vector<1x10xf32> to vector<2x10xf32>
    %13 = arith.addf %10, %12 : vector<2x10xf32>
    %c0_11 = arith.constant 0 : index
    %c0_12 = arith.constant 0 : index
    %14 = vector.load %arg5[%c0_11, %c0_12] : memref<2x10xf32, #tpu.memory_space<vmem>>, vector<2x10xf32>
    tpu.vector_store %arg5[%c0_11, %c0_12], %13 {strides = array<i32>} : memref<2x10xf32, #tpu.memory_space<vmem>>, vector<2x10xf32>,
    %cst_13 = arith.constant dense<0xFF800000> : vector<2xf32>
    %15 = vector.multi_reduction <maximumf>, %13, %cst_13 [1] : vector<2x10xf32> to vector<2xf32>
    %16 = vector.shape_cast %15 : vector<2xf32> to vector<2x1xf32>
    %17 = vector.broadcast %16 : vector<2x1xf32> to vector<2x10xf32>
    %18 = arith.subf %13, %17 : vector<2x10xf32>
    %19 = math.exp %18 : vector<2x10xf32>
    %cst_14 = arith.constant dense<0.000000e+00> : vector<2xf32>
    %20 = vector.multi_reduction <add>, %19, %cst_14 [1] : vector<2x10xf32> to vector<2xf32>
    %21 = vector.shape_cast %20 : vector<2xf32> to vector<2x1xf32>
    %22 = tpu.reciprocal %21 {approx = true} : vector<2x1xf32> -> vector<2x1xf32>
    %23 = vector.broadcast %22 : vector<2x1xf32> to vector<2x10xf32>
    %24 = arith.mulf %19, %23 : vector<2x10xf32>
    %c0_15 = arith.constant 0 : index
    %c0_16 = arith.constant 0 : index
    %25 = vector.load %arg6[%c0_15, %c0_16] : memref<2x10xf32, #tpu.memory_space<vmem>>, vector<2x10xf32>
    tpu.vector_store %arg6[%c0_15, %c0_16], %24 {strides = array<i32>} : memref<2x10xf32, #tpu.memory_space<vmem>>, vector<2x10xf32>,
    return
  }
}

</mosaic_0001>

<llo_original>
// kernel: network_forward.4
$region0: #{network_forward.4}
  #allocation0 [shape = 'u32[]', space=smem, size = 0x4, offset = 0x4, fixed_abs, tag = 'smem constant byte address 0x4 - core index']
  #allocation1 [shape = 'u32[144,128]{1,0:T(1,128)}', space=vmem, size = 0x12000, scoped, tag = 'internal scratch']
  %s0 = inlined_call_operand.vmem [shape: bf16[2,10,10,32], index: 0, kind: input, shape index: {}]
  %s1 = inlined_call_operand.vmem [shape: bf16[288,64], index: 1, kind: input, shape index: {}]
  %s2 = inlined_call_operand.vmem [shape: f32[1,64], index: 2, kind: input, shape index: {}]
  %s3 = inlined_call_operand.vmem [shape: bf16[2,4,4,64], index: 3, kind: output, shape index: {}]
  %s4 = sld [smem:[#allocation0]]
  $region45: #{network_forward.4} parent=0
    _
  %s6 = ssub.s32 1, %s4
  %s7 = scalar_select 0, %s6, %s4
  loop: start=0, step=1, limit=4
  $region2: #{network_forward.4} parent=0 // loop_pre_header
    _
  $region3: #{network_forward.4} parent=0 // loop_header
    %s9 = sphi 0, %s13
    %p10 = scmp.ge.s32.totalorder %s9, 4
    %s19 = sphi 0, %s21
    %s22 = sphi 0, %s19
    %s23 = sphi 0, %s22
    %s39 = sphi 0, %s23
    %s43 = sphi 0, %s43
    %s45 = sphi 0, %s43
    %s46 = sphi 0, %s45
    %s60 = sphi 0, %s46
    %s64 = sphi 0, %s64
    %s66 = sphi 0, %s64
    %s67 = sphi 0, %s66
    %s81 = sphi 0, %s67
    %s87 = sphi 0, %s89
    %s90 = sphi 0, %s87
    %s91 = sphi 0, %s90
    %s107 = sphi 0, %s91
  $region4: #{network_forward.4} parent=0 // loop_header_branch
    %12 = sbr.rel (%p10) target = $region8
  $region5: #{network_forward.4} parent=0 // loop_body
    %s14 = ssub.s32 %s9, 1
    %s15 = ssub.s32 %s9, 2
    %s16 = sadd.s32 %s9, 1
    %s17 = ssub.s32 %s9, %s16
    %p18 = scmp.eq.s32.totalorder %s17, 0
    %s20 = sadd.s32 %s19, 1
    %s21 = scalar_select %p18, %s19, %s20
    %p24 = pneg %p18
    %p25 = scmp.eq.s32.totalorder %s9, 1
    %p26 = por %p24, %p25
    %p27 = scmp.ne.s32.totalorder %s19, %s22
    %p28 = scmp.eq.s32.totalorder %s9, 0
    %p29 = por %p27, %p28
    %p30 = scmp.ne.s32.totalorder %s19, %s22
    %p31 = scmp.eq.s32.totalorder %s14, 1
    %p32 = por %p30, %p31
    %p33 = scmp.ne.s32.totalorder %s22, %s23
    %p34 = scmp.eq.s32.totalorder %s14, 0
    %p35 = por %p33, %p34
    %p36 = scmp.ne.s32.totalorder %s22, %s23
    %p37 = scmp.eq.s32.totalorder %s15, 1
    %p38 = por %p36, %p37
    %p40 = scmp.ne.s32.totalorder %s23, %s39
    %p41 = scmp.eq.s32.totalorder %s15, 0
    %p42 = por %p40, %p41
    %s44 = sadd.s32 %s43, 1
    %p47 = scmp.eq.s32.totalorder %s9, 1
    %p48 = scmp.ne.s32.totalorder %s43, %s45
    %p49 = scmp.eq.s32.totalorder %s9, 0
    %p50 = por %p48, %p49
    %p51 = scmp.ne.s32.totalorder %s43, %s45
    %p52 = scmp.eq.s32.totalorder %s14, 1
    %p53 = por %p51, %p52
    %p54 = scmp.ne.s32.totalorder %s45, %s46
    %p55 = scmp.eq.s32.totalorder %s14, 0
    %p56 = por %p54, %p55
    %p57 = scmp.ne.s32.totalorder %s45, %s46
    %p58 = scmp.eq.s32.totalorder %s15, 1
    %p59 = por %p57, %p58
    %p61 = scmp.ne.s32.totalorder %s46, %s60
    %p62 = scmp.eq.s32.totalorder %s15, 0
    %p63 = por %p61, %p62
    %s65 = sadd.s32 %s64, 1
    %p68 = scmp.eq.s32.totalorder %s9, 1
    %p69 = scmp.ne.s32.totalorder %s64, %s66
    %p70 = scmp.eq.s32.totalorder %s9, 0
    %p71 = por %p69, %p70
    %p72 = scmp.ne.s32.totalorder %s64, %s66
    %p73 = scmp.eq.s32.totalorder %s14, 1
    %p74 = por %p72, %p73
    %p75 = scmp.ne.s32.totalorder %s66, %s67
    %p76 = scmp.eq.s32.totalorder %s14, 0
    %p77 = por %p75, %p76
    %p78 = scmp.ne.s32.totalorder %s66, %s67
    %p79 = scmp.eq.s32.totalorder %s15, 1
    %p80 = por %p78, %p79
    %p82 = scmp.ne.s32.totalorder %s67, %s81
    %p83 = scmp.eq.s32.totalorder %s15, 0
    %p84 = por %p82, %p83
    %s85 = ssub.s32 %s9, %s16
    %p86 = scmp.eq.s32.totalorder %s85, 0
    %s88 = sadd.s32 %s87, 1
    %s89 = scalar_select %p86, %s87, %s88
    %p92 = pneg %p86
    %p93 = scmp.eq.s32.totalorder %s9, 1
    %p94 = por %p92, %p93
    %p95 = scmp.ne.s32.totalorder %s87, %s90
    %p96 = scmp.eq.s32.totalorder %s9, 0
    %p97 = por %p95, %p96
    %p98 = scmp.ne.s32.totalorder %s87, %s90
    %p99 = scmp.eq.s32.totalorder %s14, 1
    %p100 = por %p98, %p99
    %p101 = scmp.ne.s32.totalorder %s90, %s91
    %p102 = scmp.eq.s32.totalorder %s14, 0
    %p103 = por %p101, %p102
    %p104 = scmp.ne.s32.totalorder %s90, %s91
    %p105 = scmp.eq.s32.totalorder %s15, 1
    %p106 = por %p104, %p105
    %p108 = scmp.ne.s32.totalorder %s91, %s107
    %p109 = scmp.eq.s32.totalorder %s15, 0
    %p110 = por %p108, %p109
    %p111 = scmp.le.s32.totalorder 1, %s9
    %p112 = scmp.lt.s32.totalorder %s9, 3
    %p113 = pnand %p111, %p112
    %p114 = pneg %p113
    // Predicated region
    $region9: #{network_forward.4} parent=5 // pred_check
      _
    $region10: #{network_forward.4} parent=5 // pred_check_branch
      %116 = sbr.rel (%p113) target = $region12
    $region11: #{network_forward.4} parent=5 // pred_region
      %s117 = ssub.s32 %s9, 1
      // Predicated region
      $region13: #{network_forward.4} parent=11 // pred_check
        %p118 = pneg %p56
      $region14: #{network_forward.4} parent=11 // pred_check_branch
        %120 = sbr.rel (%p118) target = $region16
      $region15: #{network_forward.4} parent=11 // pred_region
        _
      $region16: #{network_forward.4} parent=11 // pred_fallthru
        _
      // Predicated region
      $region17: #{network_forward.4} parent=11 // pred_check
        %p121 = pneg %p77
      $region18: #{network_forward.4} parent=11 // pred_check_branch
        %123 = sbr.rel (%p121) target = $region20
      $region19: #{network_forward.4} parent=11 // pred_region
        _
      $region20: #{network_forward.4} parent=11 // pred_fallthru
        _
    $region12: #{network_forward.4} parent=5 // pred_fallthru
      _
    %p124 = scmp.lt.s32.totalorder %s9, 2
    // Predicated region
    $region21: #{network_forward.4} parent=5 // pred_check
      %p125 = pneg %p124
    $region22: #{network_forward.4} parent=5 // pred_check_branch
      %127 = sbr.rel (%p125) target = $region24
    $region23: #{network_forward.4} parent=5 // pred_region
      // Predicated region
      $region25: #{network_forward.4} parent=23 // pred_check
        %p128 = pneg %p29
      $region26: #{network_forward.4} parent=23 // pred_check_branch
        %130 = sbr.rel (%p128) target = $region28
      $region27: #{network_forward.4} parent=23 // pred_region
        %p131 = scmp.lt.s32.totalorder %s9, 1
        %s132 = scalar_select %p131, %s9, 1
        %s133 = smul.addr %s132, 20
        %s134 = smul.addr %s133, 4
        %s135 = scalar_lea.vmem %s0, %s134
      $region28: #{network_forward.4} parent=23 // pred_fallthru
        _
    $region24: #{network_forward.4} parent=5 // pred_fallthru
      _
    %p136 = scmp.le.s32.totalorder 1, %s9
    %p137 = scmp.lt.s32.totalorder %s9, 3
    %p138 = pnand %p136, %p137
    %p139 = pneg %p138
    // Predicated region
    $region29: #{network_forward.4} parent=5 // pred_check
      _
    $region30: #{network_forward.4} parent=5 // pred_check_branch
      %141 = sbr.rel (%p138) target = $region32
    $region31: #{network_forward.4} parent=5 // pred_region
      %s142 = ssub.s32 %s9, 1
      %p143 = scmp.lt.s32.totalorder %s14, 1
      %s144 = scalar_select %p143, %s14, 1
      %s145 = smul.addr %s144, 20
      %s146 = smul.addr %s145, 4
      %s147 = scalar_lea.vmem %s0, %s146
      %p148 = pneg %p35
      %p149 = pneg %p32
      %p150 = pneg %p56
      %p151 = pneg %p53
      %p152 = pneg %p77
      %p153 = pneg %p74
      %p154 = pneg %p103
      %p155 = pneg %p100
      %p156 = scmp.lt.s32.totalorder %s14, 1
      %s157 = scalar_select %p156, %s14, 1
      %s158 = smul.addr %s157, 4
      %s159 = smul.addr %s158, 2
      %s160 = scalar_lea.vmem %s3, %s159
      %p161 = scmp.lt.s32.totalorder %s14, 1
      %s162 = scalar_select %p161, %s14, 1
      %s163 = smul.addr %s162, 20
      %s164 = smul.addr %s163, 4
      %s165 = scalar_lea.vmem %s0, %s164
      %p166 = scmp.lt.s32.totalorder %s14, 1
      %s167 = scalar_select %p166, %s14, 1
      %s168 = smul.addr %s167, 4
      %s169 = smul.addr %s168, 2
      %s170 = scalar_lea.vmem %s3, %s169
      %v172 = vld [vmem:[%s165] sm:$0xf]
      %v173 = vld [vmem:[%s165 + $0x4] sm:$0x1]
      %v174 = vld [vmem:[%s165 + $0x8] sm:$0xf]
      %v175 = vld [vmem:[%s165 + $0xc] sm:$0x1]
      %v176 = vld [vmem:[%s165 + $0x10] sm:$0xf]
      %v177 = vld [vmem:[%s165 + $0x14] sm:$0x1]
      %v178 = vld [vmem:[%s165 + $0x18] sm:$0xf]
      %v179 = vld [vmem:[%s165 + $0x1c] sm:$0x1]
      %v180 = vld [vmem:[%s165 + $0x20] sm:$0xf]
      %v181 = vld [vmem:[%s165 + $0x24] sm:$0x1]
      %v182 = vld [vmem:[%s165 + $0x28] sm:$0xf]
      %v183 = vld [vmem:[%s165 + $0x2c] sm:$0x1]
      %v184 = vld [vmem:[%s165 + $0x30] sm:$0xf]
      %v185 = vld [vmem:[%s165 + $0x34] sm:$0x1]
      %v186 = vld [vmem:[%s165 + $0x38] sm:$0xf]
      %v187 = vld [vmem:[%s165 + $0x3c] sm:$0x1]
      %v188 = vld [vmem:[%s165 + $0x40] sm:$0xf]
      %v189 = vld [vmem:[%s165 + $0x44] sm:$0x1]
      %v190 = vld [vmem:[%s165 + $0x48] sm:$0xf]
      %v191 = vld [vmem:[%s165 + $0x4c] sm:$0x1]
      %v208 = vunpack.c.l.b16 %v172
      %v209 = vunpack.c.l.b16 %v173
      %v210 = vunpack.c.l.b16 %v174
      %v211 = vunpack.c.l.b16 %v175
      %v212 = vunpack.c.l.b16 %v176
      %v213 = vunpack.c.l.b16 %v177
      %v214 = vunpack.c.l.b16 %v178
      %v215 = vunpack.c.l.b16 %v179
      %v216 = vunpack.c.l.b16 %v180
      %v217 = vunpack.c.l.b16 %v181
      %v218 = vunpack.c.l.b16 %v182
      %v219 = vunpack.c.l.b16 %v183
      %v220 = vunpack.c.l.b16 %v184
      %v221 = vunpack.c.l.b16 %v185
      %v222 = vunpack.c.l.b16 %v186
      %v223 = vunpack.c.l.b16 %v187
      %v224 = vpack.c.b16 %v209, %v208
      %v225 = vpack.c.b16 %v211, %v210
      %v226 = vpack.c.b16 %v213, %v212
      %v227 = vpack.c.b16 %v215, %v214
      %v228 = vpack.c.b16 %v217, %v216
      %v229 = vpack.c.b16 %v219, %v218
      %v230 = vpack.c.b16 %v221, %v220
      %v231 = vpack.c.b16 %v223, %v222
      %v233 = vshrl.u32 %v224, 16
      %v235 = vshll.u32 %v224, 16
      %v237 = vrot.slane %v235, 1
      %v238 = vor.u32 %v233, %v237
      %v240 = vshrl.u32 %v225, 16
      %v242 = vshll.u32 %v225, 16
      %v244 = vrot.slane %v242, 1
      %v245 = vor.u32 %v240, %v244
      %v247 = vshrl.u32 %v226, 16
      %v249 = vshll.u32 %v226, 16
      %v251 = vrot.slane %v249, 1
      %v252 = vor.u32 %v247, %v251
      %v254 = vshrl.u32 %v227, 16
      %v256 = vshll.u32 %v227, 16
      %v258 = vrot.slane %v256, 1
      %v259 = vor.u32 %v254, %v258
      %v261 = vshrl.u32 %v228, 16
      %v263 = vshll.u32 %v228, 16
      %v265 = vrot.slane %v263, 1
      %v266 = vor.u32 %v261, %v265
      %v268 = vshrl.u32 %v229, 16
      %v270 = vshll.u32 %v229, 16
      %v272 = vrot.slane %v270, 1
      %v273 = vor.u32 %v268, %v272
      %v275 = vshrl.u32 %v230, 16
      %v277 = vshll.u32 %v230, 16
      %v279 = vrot.slane %v277, 1
      %v280 = vor.u32 %v275, %v279
      %v282 = vshrl.u32 %v231, 16
      %v284 = vshll.u32 %v231, 16
      %v286 = vrot.slane %v284, 1
      %v287 = vor.u32 %v282, %v286
      %288 = vrot.lane.b32.xlu0 %v238, 32
      %v289 = vpop.permute.xlu0 %288
      %290 = vrot.lane.b32.xlu0 %v245, 32
      %v291 = vpop.permute.xlu0 %290
      %292 = vrot.lane.b32.xlu0 %v252, 32
      %v293 = vpop.permute.xlu0 %292
      %294 = vrot.lane.b32.xlu0 %v259, 32
      %v295 = vpop.permute.xlu0 %294
      %296 = vrot.lane.b32.xlu0 %v266, 32
      %v297 = vpop.permute.xlu0 %296
      %298 = vrot.lane.b32.xlu0 %v273, 32
      %v299 = vpop.permute.xlu0 %298
      %300 = vrot.lane.b32.xlu0 %v280, 32
      %v301 = vpop.permute.xlu0 %300
      %302 = vrot.lane.b32.xlu0 %v287, 32
      %v303 = vpop.permute.xlu0 %302
      %v304 = vrot.slane %v224, 1
      %v305 = vrot.slane %v225, 1
      %v306 = vrot.slane %v226, 1
      %v307 = vrot.slane %v227, 1
      %v308 = vrot.slane %v228, 1
      %v309 = vrot.slane %v229, 1
      %v310 = vrot.slane %v230, 1
      %v311 = vrot.slane %v231, 1
      %312 = vrot.lane.b32.xlu0 %v304, 64
      %v313 = vpop.permute.xlu0 %312
      %314 = vrot.lane.b32.xlu0 %v305, 64
      %v315 = vpop.permute.xlu0 %314
      %316 = vrot.lane.b32.xlu0 %v306, 64
      %v317 = vpop.permute.xlu0 %316
      %318 = vrot.lane.b32.xlu0 %v307, 64
      %v319 = vpop.permute.xlu0 %318
      %320 = vrot.lane.b32.xlu0 %v308, 64
      %v321 = vpop.permute.xlu0 %320
      %322 = vrot.lane.b32.xlu0 %v309, 64
      %v323 = vpop.permute.xlu0 %322
      %324 = vrot.lane.b32.xlu0 %v310, 64
      %v325 = vpop.permute.xlu0 %324
      %326 = vrot.lane.b32.xlu0 %v311, 64
      %v327 = vpop.permute.xlu0 %326
      %v329 = vunpack.c.l.b16 %v188
      %v330 = vpack.c.b16 %v210, %v210
      %v331 = vpack.c.b16 %v212, %v212
      %v332 = vpack.c.b16 %v214, %v214
      %v333 = vpack.c.b16 %v216, %v216
      %v334 = vpack.c.b16 %v218, %v218
      %v335 = vpack.c.b16 %v220, %v220
      %v336 = vpack.c.b16 %v222, %v222
      %v337 = vpack.c.b16 %v329, %v329
      %338 = vrot.lane.b32.xlu0 %v330, 96
      %v339 = vpop.permute.xlu0 %338
      %340 = vrot.lane.b32.xlu0 %v331, 96
      %v341 = vpop.permute.xlu0 %340
      %342 = vrot.lane.b32.xlu0 %v332, 96
      %v343 = vpop.permute.xlu0 %342
      %344 = vrot.lane.b32.xlu0 %v333, 96
      %v345 = vpop.permute.xlu0 %344
      %346 = vrot.lane.b32.xlu0 %v334, 96
      %v347 = vpop.permute.xlu0 %346
      %348 = vrot.lane.b32.xlu0 %v335, 96
      %v349 = vpop.permute.xlu0 %348
      %350 = vrot.lane.b32.xlu0 %v336, 96
      %v351 = vpop.permute.xlu0 %350
      %352 = vrot.lane.b32.xlu0 %v337, 96
      %v353 = vpop.permute.xlu0 %352
      %v355 = vunpack.c.l.b16 %v189
      %v356 = vpack.c.b16 %v355, %v329
      %v358 = vshrl.u32 %v356, 16
      %v360 = vshll.u32 %v356, 16
      %v362 = vrot.slane %v360, 1
      %v363 = vor.u32 %v358, %v362
      %v364 = vrot.slane %v356, 1
      %365 = vrot.lane.b32.xlu0 %v305, 32
      %v366 = vpop.permute.xlu0 %365
      %367 = vrot.lane.b32.xlu0 %v306, 32
      %v368 = vpop.permute.xlu0 %367
      %369 = vrot.lane.b32.xlu0 %v307, 32
      %v370 = vpop.permute.xlu0 %369
      %371 = vrot.lane.b32.xlu0 %v308, 32
      %v372 = vpop.permute.xlu0 %371
      %373 = vrot.lane.b32.xlu0 %v309, 32
      %v374 = vpop.permute.xlu0 %373
      %375 = vrot.lane.b32.xlu0 %v310, 32
      %v376 = vpop.permute.xlu0 %375
      %377 = vrot.lane.b32.xlu0 %v311, 32
      %v378 = vpop.permute.xlu0 %377
      %379 = vrot.lane.b32.xlu0 %v364, 32
      %v380 = vpop.permute.xlu0 %379
      %v382 = vunpack.c.l.b16 %v190
      %v383 = vpack.c.b16 %v382, %v382
      %384 = vrot.lane.b32.xlu0 %v331, 64
      %v385 = vpop.permute.xlu0 %384
      %386 = vrot.lane.b32.xlu0 %v332, 64
      %v387 = vpop.permute.xlu0 %386
      %388 = vrot.lane.b32.xlu0 %v333, 64
      %v389 = vpop.permute.xlu0 %388
      %390 = vrot.lane.b32.xlu0 %v334, 64
      %v391 = vpop.permute.xlu0 %390
      %392 = vrot.lane.b32.xlu0 %v335, 64
      %v393 = vpop.permute.xlu0 %392
      %394 = vrot.lane.b32.xlu0 %v336, 64
      %v395 = vpop.permute.xlu0 %394
      %396 = vrot.lane.b32.xlu0 %v337, 64
      %v397 = vpop.permute.xlu0 %396
      %398 = vrot.lane.b32.xlu0 %v383, 64
      %v399 = vpop.permute.xlu0 %398
      %v401 = vunpack.c.l.b16 %v191
      %v402 = vpack.c.b16 %v401, %v382
      %v404 = vshrl.u32 %v402, 16
      %v406 = vshll.u32 %v402, 16
      %v408 = vrot.slane %v406, 1
      %v409 = vor.u32 %v404, %v408
      %410 = vrot.lane.b32.xlu0 %v252, 96
      %v411 = vpop.permute.xlu0 %410
      %412 = vrot.lane.b32.xlu0 %v259, 96
      %v413 = vpop.permute.xlu0 %412
      %414 = vrot.lane.b32.xlu0 %v266, 96
      %v415 = vpop.permute.xlu0 %414
      %416 = vrot.lane.b32.xlu0 %v273, 96
      %v417 = vpop.permute.xlu0 %416
      %418 = vrot.lane.b32.xlu0 %v280, 96
      %v419 = vpop.permute.xlu0 %418
      %420 = vrot.lane.b32.xlu0 %v287, 96
      %v421 = vpop.permute.xlu0 %420
      %422 = vrot.lane.b32.xlu0 %v363, 96
      %v423 = vpop.permute.xlu0 %422
      %424 = vrot.lane.b32.xlu0 %v409, 96
      %v425 = vpop.permute.xlu0 %424
      %v426 = vrot.slane %v402, 1
      %vm427 = vcmask 261120
      %v430 = vsel %vm427, %v172, %v289
      %v433 = vsel %vm427, %v174, %v291
      %v436 = vsel %vm427, %v176, %v293
      %v439 = vsel %vm427, %v178, %v295
      %v442 = vsel %vm427, %v180, %v297
      %v445 = vsel %vm427, %v182, %v299
      %v448 = vsel %vm427, %v184, %v301
      %v451 = vsel %vm427, %v186, %v303
      %vm452 = vcmask 523264
      %v454 = vsel %vm452, %v430, %v313
      %v456 = vsel %vm452, %v433, %v315
      %v458 = vsel %vm452, %v436, %v317
      %v460 = vsel %vm452, %v439, %v319
      %v462 = vsel %vm452, %v442, %v321
      %v464 = vsel %vm452, %v445, %v323
      %v466 = vsel %vm452, %v448, %v325
      %v468 = vsel %vm452, %v451, %v327
      %vm469 = vcmask 785408
      %v471 = vsel %vm469, %v454, %v339
      %v473 = vsel %vm469, %v456, %v341
      %v475 = vsel %vm469, %v458, %v343
      %v477 = vsel %vm469, %v460, %v345
      %v479 = vsel %vm469, %v462, %v347
      %v481 = vsel %vm469, %v464, %v349
      %v483 = vsel %vm469, %v466, %v351
      %v485 = vsel %vm469, %v468, %v353
      %v488 = vsel %vm427, %v245, %v366
      %v491 = vsel %vm427, %v252, %v368
      %v494 = vsel %vm427, %v259, %v370
      %v497 = vsel %vm427, %v266, %v372
      %v500 = vsel %vm427, %v273, %v374
      %v503 = vsel %vm427, %v280, %v376
      %v506 = vsel %vm427, %v287, %v378
      %v509 = vsel %vm427, %v363, %v380
      %v511 = vsel %vm452, %v488, %v385
      %v513 = vsel %vm452, %v491, %v387
      %v515 = vsel %vm452, %v494, %v389
      %v517 = vsel %vm452, %v497, %v391
      %v519 = vsel %vm452, %v500, %v393
      %v521 = vsel %vm452, %v503, %v395
      %v523 = vsel %vm452, %v506, %v397
      %v525 = vsel %vm452, %v509, %v399
      %v527 = vsel %vm469, %v511, %v411
      %v529 = vsel %vm469, %v513, %v413
      %v531 = vsel %vm469, %v515, %v415
      %v533 = vsel %vm469, %v517, %v417
      %v535 = vsel %vm469, %v519, %v419
      %v537 = vsel %vm469, %v521, %v421
      %v539 = vsel %vm469, %v523, %v423
      %v541 = vsel %vm469, %v525, %v425
      %v558 = vunpack.c.l.b16 %v471
      %v559 = vunpack.c.l.b16 %v527
      %v560 = vunpack.c.l.b16 %v306
      %v561 = vunpack.c.l.b16 %v473
      %v562 = vunpack.c.l.b16 %v529
      %v563 = vunpack.c.l.b16 %v307
      %v564 = vunpack.c.l.b16 %v475
      %v565 = vunpack.c.l.b16 %v531
      %v566 = vunpack.c.l.b16 %v308
      %v567 = vunpack.c.l.b16 %v477
      %v568 = vunpack.c.l.b16 %v533
      %v569 = vunpack.c.l.b16 %v309
      %v570 = vunpack.c.l.b16 %v479
      %v571 = vunpack.c.l.b16 %v535
      %v572 = vunpack.c.l.b16 %v310
      %v573 = vunpack.c.l.b16 %v481
      %v574 = vunpack.c.l.b16 %v537
      %v575 = vunpack.c.l.b16 %v311
      %v576 = vunpack.c.l.b16 %v483
      %v577 = vunpack.c.l.b16 %v539
      %v578 = vunpack.c.l.b16 %v364
      %v579 = vunpack.c.l.b16 %v485
      %v580 = vunpack.c.l.b16 %v541
      %v581 = vunpack.c.l.b16 %v426
      %v582 = vld [vmem:[%s1] sm:$0xf]
      %v583 = vld [vmem:[%s1 + $0x4] sm:$0xf]
      %v584 = vld [vmem:[%s1 + $0x8] sm:$0xf]
      %v585 = vld [vmem:[%s1 + $0xc] sm:$0xf]
      %v586 = vld [vmem:[%s1 + $0x10] sm:$0xf]
      %v587 = vld [vmem:[%s1 + $0x14] sm:$0xf]
      %v588 = vld [vmem:[%s1 + $0x18] sm:$0xf]
      %v589 = vld [vmem:[%s1 + $0x1c] sm:$0xf]
      %v590 = vld [vmem:[%s1 + $0x20] sm:$0xf]
      %v591 = vld [vmem:[%s1 + $0x24] sm:$0xf]
      %v592 = vld [vmem:[%s1 + $0x28] sm:$0xf]
      %v593 = vld [vmem:[%s1 + $0x2c] sm:$0xf]
      %v594 = vld [vmem:[%s1 + $0x30] sm:$0xf]
      %v595 = vld [vmem:[%s1 + $0x34] sm:$0xf]
      %v596 = vld [vmem:[%s1 + $0x38] sm:$0xf]
      %v597 = vld [vmem:[%s1 + $0x3c] sm:$0xf]
      %v598 = vld [vmem:[%s1 + $0x40] sm:$0xf]
      %v599 = vld [vmem:[%s1 + $0x44] sm:$0xf]
      %v600 = vld [vmem:[%s1 + $0x48] sm:$0xf]
      %v601 = vld [vmem:[%s1 + $0x4c] sm:$0xf]
      %v602 = vld [vmem:[%s1 + $0x50] sm:$0xf]
      %v603 = vld [vmem:[%s1 + $0x54] sm:$0xf]
      %v604 = vld [vmem:[%s1 + $0x58] sm:$0xf]
      %v605 = vld [vmem:[%s1 + $0x5c] sm:$0xf]
      %v606 = vld [vmem:[%s1 + $0x60] sm:$0xf]
      %v607 = vld [vmem:[%s1 + $0x64] sm:$0xf]
      %v608 = vld [vmem:[%s1 + $0x68] sm:$0xf]
      %v609 = vld [vmem:[%s1 + $0x6c] sm:$0xf]
      %v610 = vld [vmem:[%s1 + $0x70] sm:$0xf]
      %v611 = vld [vmem:[%s1 + $0x74] sm:$0xf]
      %v612 = vld [vmem:[%s1 + $0x78] sm:$0xf]
      %v613 = vld [vmem:[%s1 + $0x7c] sm:$0xf]
      %v614 = vld [vmem:[%s1 + $0x80] sm:$0xf]
      %v615 = vld [vmem:[%s1 + $0x84] sm:$0xf]
      %v616 = vld [vmem:[%s1 + $0x88] sm:$0xf]
      %v617 = vld [vmem:[%s1 + $0x8c] sm:$0xf]
      %v618 = vld [vmem:[%s2] sm:$0x1]
      %v620 = vlaneseq
      %v621 = vshrl.u32 %v620, 7
      %v622 = vsub.s32 0, %v621
      %v623 = vrot.slane %v618, %v622
      %v625 = vpack.c.b16 %v561, %v558
      %v626 = vpack.c.b16 %v562, %v559
      %v627 = vpack.c.b16 %v563, %v560
      %v628 = vpack.c.b16 %v567, %v564
      %v629 = vpack.c.b16 %v568, %v565
      %v630 = vpack.c.b16 %v569, %v566
      %v631 = vpack.c.b16 %v573, %v570
      %v632 = vpack.c.b16 %v574, %v571
      %v633 = vpack.c.b16 %v575, %v572
      %v634 = vpack.c.b16 %v579, %v576
      %v635 = vpack.c.b16 %v580, %v577
      %v636 = vpack.c.b16 %v581, %v578
      %v681 = vunpack.c.l.b16 %v582
      %v682 = vunpack.c.l.b16 %v583
      %v683 = vunpack.c.l.b16 %v584
      %v684 = vunpack.c.l.b16 %v585
      %v685 = vunpack.c.l.b16 %v586
      %v686 = vunpack.c.l.b16 %v587
      %v687 = vunpack.c.l.b16 %v588
      %v688 = vunpack.c.l.b16 %v589
      %v689 = vunpack.c.l.b16 %v590
      %v690 = vunpack.c.l.b16 %v591
      %v691 = vunpack.c.l.b16 %v592
      %v692 = vunpack.c.l.b16 %v593
      %v693 = vunpack.c.l.b16 %v594
      %v694 = vunpack.c.l.b16 %v595
      %v695 = vunpack.c.l.b16 %v596
      %v696 = vunpack.c.l.b16 %v597
      %v697 = vunpack.c.l.b16 %v598
      %v698 = vunpack.c.l.b16 %v599
      %v699 = vunpack.c.l.b16 %v600
      %v700 = vunpack.c.l.b16 %v601
      %v701 = vunpack.c.l.b16 %v602
      %v702 = vunpack.c.l.b16 %v603
      %v703 = vunpack.c.l.b16 %v604
      %v704 = vunpack.c.l.b16 %v605
      %v705 = vunpack.c.l.b16 %v606
      %v706 = vunpack.c.l.b16 %v607
      %v707 = vunpack.c.l.b16 %v608
      %v708 = vunpack.c.l.b16 %v609
      %v709 = vunpack.c.l.b16 %v610
      %v710 = vunpack.c.l.b16 %v611
      %v711 = vunpack.c.l.b16 %v612
      %v712 = vunpack.c.l.b16 %v613
      %v713 = vunpack.c.l.b16 %v614
      %v714 = vunpack.c.l.b16 %v615
      %v715 = vunpack.c.l.b16 %v616
      %v716 = vunpack.c.l.b16 %v617
      %v717 = vpack.c.b16 %v682, %v681
      %v718 = vpack.c.b16 %v684, %v683
      %v719 = vpack.c.b16 %v686, %v685
      %v720 = vpack.c.b16 %v688, %v687
      %v721 = vpack.c.b16 %v690, %v689
      %v722 = vpack.c.b16 %v692, %v691
      %v723 = vpack.c.b16 %v694, %v693
      %v724 = vpack.c.b16 %v696, %v695
      %v725 = vpack.c.b16 %v698, %v697
      %v726 = vpack.c.b16 %v700, %v699
      %v727 = vpack.c.b16 %v702, %v701
      %v728 = vpack.c.b16 %v704, %v703
      %v729 = vpack.c.b16 %v706, %v705
      %v730 = vpack.c.b16 %v708, %v707
      %v731 = vpack.c.b16 %v710, %v709
      %v732 = vpack.c.b16 %v712, %v711
      %v733 = vpack.c.b16 %v714, %v713
      %v734 = vpack.c.b16 %v716, %v715
      %v754 = vsel %vm427, %v627, 0
      %v757 = vsel %vm427, %v630, 0
      %v760 = vsel %vm427, %v633, 0
      %v763 = vsel %vm427, %v636, 0
      %765 = vmatprep.subr.bf16.mxu0 0
      %766 = vmatpush1.bf16.msra.mxu0 %v724
      %767 = vmatprep.subr.bf16.mxu0 0
      %768 = vmatpush1.bf16.msra.mxu0 %v723
      %769 = vmatprep.subr.bf16.mxu0 0
      %770 = vmatpush1.bf16.msra.mxu0 %v722
      %771 = vmatprep.subr.bf16.mxu0 0
      %772 = vmatpush1.bf16.msra.mxu0 %v721
      %773 = vmatprep.subr.bf16.mxu0 0
      %774 = vmatpush1.bf16.msra.mxu0 %v720
      %775 = vmatprep.subr.bf16.mxu0 0
      %776 = vmatpush1.bf16.msra.mxu0 %v719
      %777 = vmatprep.subr.bf16.mxu0 0
      %778 = vmatpush1.bf16.msra.mxu0 %v718
      %779 = vmatprep.subr.bf16.mxu0 0
      %780 = vmatpush1.bf16.msra.mxu0 %v717
      %781 = vmatprep.subr.bf16.mxu0 0
      %782 = vmatpush2.bf16.msra.mxu0 %v732
      %783 = vmatprep.subr.bf16.mxu0 0
      %784 = vmatpush2.bf16.msra.mxu0 %v731
      %785 = vmatprep.subr.bf16.mxu0 0
      %786 = vmatpush2.bf16.msra.mxu0 %v730
      %787 = vmatprep.subr.bf16.mxu0 0
      %788 = vmatpush2.bf16.msra.mxu0 %v729
      %789 = vmatprep.subr.bf16.mxu0 0
      %790 = vmatpush2.bf16.msra.mxu0 %v728
      %791 = vmatprep.subr.bf16.mxu0 0
      %792 = vmatpush2.bf16.msra.mxu0 %v727
      %793 = vmatprep.subr.bf16.mxu0 0
      %794 = vmatpush2.bf16.msra.mxu0 %v726
      %795 = vmatprep.subr.bf16.mxu0 0
      %796 = vmatpush2.bf16.msra.mxu0 %v725
      %797 = vmatprep.mubr.bf16.mxu0 %v626
      %798 = vmatmul.mubr.bf16.gmra.mxu0 %v625
      %v799 = vpop.f32.mrf.mxu0
      %v800 = vadd.f32 %v623, %v799
      %v801 = vpop.f32.mrf.mxu0
      %v802 = vpop.f32.mrf.mxu0
      %v803 = vadd.f32 %v623, %v802
      %v804 = vpop.f32.mrf.mxu0
      %805 = vmatprep.mubr.bf16.mxu0 %v629
      %806 = vmatmul.mubr.bf16.gmra.mxu0 %v628
      %v807 = vpop.f32.mrf.mxu0
      %v808 = vadd.f32 %v623, %v807
      %v809 = vpop.f32.mrf.mxu0
      %v810 = vpop.f32.mrf.mxu0
      %v811 = vadd.f32 %v623, %v810
      %v812 = vpop.f32.mrf.mxu0
      %813 = vmatprep.mubr.bf16.mxu0 %v632
      %814 = vmatmul.mubr.bf16.gmra.mxu0 %v631
      %v815 = vpop.f32.mrf.mxu0
      %v816 = vadd.f32 %v623, %v815
      %v817 = vpop.f32.mrf.mxu0
      %v818 = vpop.f32.mrf.mxu0
      %v819 = vadd.f32 %v623, %v818
      %v820 = vpop.f32.mrf.mxu0
      %821 = vmatprep.mubr.bf16.mxu0 %v635
      %822 = vmatmul.mubr.bf16.gmra.mxu0 %v634
      %v823 = vpop.f32.mrf.mxu0
      %v824 = vadd.f32 %v623, %v823
      %v825 = vpop.f32.mrf.mxu0
      %v826 = vpop.f32.mrf.mxu0
      %v827 = vadd.f32 %v623, %v826
      %v828 = vpop.f32.mrf.mxu0
      %829 = vdwg.mxu0
      %830 = vmatprep.subr.bf16.mxu0 0
      %831 = vmatpush1.bf16.msra.mxu0 0
      %832 = vmatprep.subr.bf16.mxu0 0
      %833 = vmatpush1.bf16.msra.mxu0 0
      %834 = vmatprep.subr.bf16.mxu0 0
      %835 = vmatpush1.bf16.msra.mxu0 0
      %836 = vmatprep.subr.bf16.mxu0 0
      %837 = vmatpush1.bf16.msra.mxu0 0
      %838 = vmatprep.subr.bf16.mxu0 0
      %839 = vmatpush1.bf16.msra.mxu0 0
      %840 = vmatprep.subr.bf16.mxu0 0
      %841 = vmatpush1.bf16.msra.mxu0 0
      %842 = vmatprep.subr.bf16.mxu0 0
      %843 = vmatpush1.bf16.msra.mxu0 %v734
      %844 = vmatprep.subr.bf16.mxu0 0
      %845 = vmatpush1.bf16.msra.mxu0 %v733
      %846 = vmatprep.subr.bf16.mxu0 0
      %847 = vmatpush2.bf16.msra.mxu0 0
      %848 = vmatprep.subr.bf16.mxu0 0
      %849 = vmatpush2.bf16.msra.mxu0 0
      %850 = vmatprep.subr.bf16.mxu0 0
      %851 = vmatpush2.bf16.msra.mxu0 0
      %852 = vmatprep.subr.bf16.mxu0 0
      %853 = vmatpush2.bf16.msra.mxu0 0
      %854 = vmatprep.subr.bf16.mxu0 0
      %855 = vmatpush2.bf16.msra.mxu0 0
      %856 = vmatprep.subr.bf16.mxu0 0
      %857 = vmatpush2.bf16.msra.mxu0 0
      %858 = vmatprep.subr.bf16.mxu0 0
      %859 = vmatpush2.bf16.msra.mxu0 0
      %860 = vmatprep.subr.bf16.mxu0 0
      %861 = vmatpush2.bf16.msra.mxu0 0
      %862 = vmatprep.mubr.bf16.mxu0 0
      %863 = vmatmul.mubr.bf16.gmra.mxu0 %v754
      %v864 = vpop.f32.mrf.mxu0
      %v865 = vadd.f32 %v800, %v864
      %v866 = vpop.f32.mrf.mxu0
      %v867 = vpop.f32.mrf.mxu0
      %v868 = vadd.f32 %v803, %v867
      %v869 = vpop.f32.mrf.mxu0
      %870 = vmatprep.mubr.bf16.mxu0 0
      %871 = vmatmul.mubr.bf16.gmra.mxu0 %v757
      %v872 = vpop.f32.mrf.mxu0
      %v873 = vadd.f32 %v808, %v872
      %v874 = vpop.f32.mrf.mxu0
      %v875 = vpop.f32.mrf.mxu0
      %v876 = vadd.f32 %v811, %v875
      %v877 = vpop.f32.mrf.mxu0
      %878 = vmatprep.mubr.bf16.mxu0 0
      %879 = vmatmul.mubr.bf16.gmra.mxu0 %v760
      %v880 = vpop.f32.mrf.mxu0
      %v881 = vadd.f32 %v816, %v880
      %v882 = vpop.f32.mrf.mxu0
      %v883 = vpop.f32.mrf.mxu0
      %v884 = vadd.f32 %v819, %v883
      %v885 = vpop.f32.mrf.mxu0
      %886 = vmatprep.mubr.bf16.mxu0 0
      %887 = vmatmul.mubr.bf16.gmra.mxu0 %v763
      %v888 = vpop.f32.mrf.mxu0
      %v889 = vadd.f32 %v824, %v888
      %v890 = vpop.f32.mrf.mxu0
      %v891 = vpop.f32.mrf.mxu0
      %v892 = vadd.f32 %v827, %v891
      %v893 = vpop.f32.mrf.mxu0
      %894 = vdwg.mxu0
      %v895 = vmax.f32 %v865, 0.0
      %v896 = vmax.f32 %v868, 0.0
      %v897 = vmax.f32 %v873, 0.0
      %v898 = vmax.f32 %v876, 0.0
      %v899 = vmax.f32 %v881, 0.0
      %v900 = vmax.f32 %v884, 0.0
      %v901 = vmax.f32 %v889, 0.0
      %v902 = vmax.f32 %v892, 0.0
      %v903 = vmax.f32 %v895, %v896
      %v904 = vmax.f32 %v897, %v898
      %v905 = vmax.f32 %v899, %v900
      %v906 = vmax.f32 %v901, %v902
      %v911 = vcombine.high %v903, %v903
      %v913 = vunpack.c.l.s4 1983009808
      %v914 = vunpack.c.0.s8 %v913
      %v915 = vlaneseq
      %v916 = vshrl.u32 %v915, 7
      %v917 = vsub.s32 %v914, %v916
      %v918 = vrot.slane %v903, %v917
      %v920 = vunpack.c.l.s4 1983009808
      %v921 = vunpack.c.0.s8 %v920
      %v922 = vlaneseq
      %v923 = vshrl.u32 %v922, 7
      %v924 = vsub.s32 %v921, %v923
      %v925 = vrot.slane %v911, %v924
      %v926 = vcombine.high %v918, %v918
      %v927 = vcombine.high %v925, %v925
      %v928 = vcombine.high %v904, %v904
      %v930 = vunpack.c.l.s4 1983009808
      %v931 = vunpack.c.0.s8 %v930
      %v932 = vlaneseq
      %v933 = vshrl.u32 %v932, 7
      %v934 = vsub.s32 %v931, %v933
      %v935 = vrot.slane %v904, %v934
      %v937 = vunpack.c.l.s4 1983009808
      %v938 = vunpack.c.0.s8 %v937
      %v939 = vlaneseq
      %v940 = vshrl.u32 %v939, 7
      %v941 = vsub.s32 %v938, %v940
      %v942 = vrot.slane %v928, %v941
      %v943 = vcombine.high %v935, %v935
      %v944 = vcombine.high %v942, %v942
      %v945 = vcombine.high %v905, %v905
      %v947 = vunpack.c.l.s4 1983009808
      %v948 = vunpack.c.0.s8 %v947
      %v949 = vlaneseq
      %v950 = vshrl.u32 %v949, 7
      %v951 = vsub.s32 %v948, %v950
      %v952 = vrot.slane %v905, %v951
      %v954 = vunpack.c.l.s4 1983009808
      %v955 = vunpack.c.0.s8 %v954
      %v956 = vlaneseq
      %v957 = vshrl.u32 %v956, 7
      %v958 = vsub.s32 %v955, %v957
      %v959 = vrot.slane %v945, %v958
      %v960 = vcombine.high %v952, %v952
      %v961 = vcombine.high %v959, %v959
      %v962 = vcombine.high %v906, %v906
      %v964 = vunpack.c.l.s4 1983009808
      %v965 = vunpack.c.0.s8 %v964
      %v966 = vlaneseq
      %v967 = vshrl.u32 %v966, 7
      %v968 = vsub.s32 %v965, %v967
      %v969 = vrot.slane %v906, %v968
      %v971 = vunpack.c.l.s4 1983009808
      %v972 = vunpack.c.0.s8 %v971
      %v973 = vlaneseq
      %v974 = vshrl.u32 %v973, 7
      %v975 = vsub.s32 %v972, %v974
      %v976 = vrot.slane %v962, %v975
      %v977 = vcombine.high %v969, %v969
      %v978 = vcombine.high %v976, %v976
      %v995 = vrot.slane %v918, 7
      %v996 = vrot.slane %v995, 2
      %v997 = vrot.slane %v926, 7
      %v998 = vrot.slane %v997, 2
      %v999 = vrot.slane %v925, 7
      %v1000 = vrot.slane %v999, 2
      %v1001 = vrot.slane %v927, 7
      %v1002 = vrot.slane %v1001, 2
      %v1003 = vrot.slane %v935, 7
      %v1004 = vrot.slane %v1003, 2
      %v1005 = vrot.slane %v943, 7
      %v1006 = vrot.slane %v1005, 2
      %v1007 = vrot.slane %v942, 7
      %v1008 = vrot.slane %v1007, 2
      %v1009 = vrot.slane %v944, 7
      %v1010 = vrot.slane %v1009, 2
      %v1011 = vrot.slane %v952, 7
      %v1012 = vrot.slane %v1011, 2
      %v1013 = vrot.slane %v960, 7
      %v1014 = vrot.slane %v1013, 2
      %v1015 = vrot.slane %v959, 7
      %v1016 = vrot.slane %v1015, 2
      %v1017 = vrot.slane %v961, 7
      %v1018 = vrot.slane %v1017, 2
      %v1019 = vrot.slane %v969, 7
      %v1020 = vrot.slane %v1019, 2
      %v1021 = vrot.slane %v977, 7
      %v1022 = vrot.slane %v1021, 2
      %v1023 = vrot.slane %v976, 7
      %v1024 = vrot.slane %v1023, 2
      %v1025 = vrot.slane %v978, 7
      %v1026 = vrot.slane %v1025, 2
      %v1043 = vmax.f32 %v918, %v996
      %v1044 = vmax.f32 %v926, %v998
      %v1045 = vmax.f32 %v925, %v1000
      %v1046 = vmax.f32 %v927, %v1002
      %v1047 = vmax.f32 %v935, %v1004
      %v1048 = vmax.f32 %v943, %v1006
      %v1049 = vmax.f32 %v942, %v1008
      %v1050 = vmax.f32 %v944, %v1010
      %v1051 = vmax.f32 %v952, %v1012
      %v1052 = vmax.f32 %v960, %v1014
      %v1053 = vmax.f32 %v959, %v1016
      %v1054 = vmax.f32 %v961, %v1018
      %v1055 = vmax.f32 %v969, %v1020
      %v1056 = vmax.f32 %v977, %v1022
      %v1057 = vmax.f32 %v976, %v1024
      %v1058 = vmax.f32 %v978, %v1026
      %v1059 = vpack.c.bf16 %v1043, %v1043
      %v1060 = vpack.c.bf16 %v1044, %v1044
      %v1061 = vpack.c.bf16 %v1045, %v1045
      %v1062 = vpack.c.bf16 %v1046, %v1046
      %v1063 = vpack.c.bf16 %v1047, %v1047
      %v1064 = vpack.c.bf16 %v1048, %v1048
      %v1065 = vpack.c.bf16 %v1049, %v1049
      %v1066 = vpack.c.bf16 %v1050, %v1050
      %v1067 = vpack.c.bf16 %v1051, %v1051
      %v1068 = vpack.c.bf16 %v1052, %v1052
      %v1069 = vpack.c.bf16 %v1053, %v1053
      %v1070 = vpack.c.bf16 %v1054, %v1054
      %v1071 = vpack.c.bf16 %v1055, %v1055
      %v1072 = vpack.c.bf16 %v1056, %v1056
      %v1073 = vpack.c.bf16 %v1057, %v1057
      %v1074 = vpack.c.bf16 %v1058, %v1058
      %v1092 = vunpack.c.l.s4 1983009808
      %v1093 = vunpack.c.0.s8 %v1092
      %v1094 = vlaneseq
      %v1095 = vshrl.u32 %v1094, 7
      %v1096 = vsub.s32 %v1093, %v1095
      %v1097 = vrot.slane %v1059, %v1096
      %v1099 = vunpack.c.l.s4 1983009808
      %v1100 = vunpack.c.0.s8 %v1099
      %v1101 = vlaneseq
      %v1102 = vshrl.u32 %v1101, 7
      %v1103 = vsub.s32 %v1100, %v1102
      %v1104 = vrot.slane %v1060, %v1103
      %v1106 = vunpack.c.l.s4 1983009808
      %v1107 = vunpack.c.0.s8 %v1106
      %v1108 = vlaneseq
      %v1109 = vshrl.u32 %v1108, 7
      %v1110 = vsub.s32 %v1107, %v1109
      %v1111 = vrot.slane %v1061, %v1110
      %v1113 = vunpack.c.l.s4 1983009808
      %v1114 = vunpack.c.0.s8 %v1113
      %v1115 = vlaneseq
      %v1116 = vshrl.u32 %v1115, 7
      %v1117 = vsub.s32 %v1114, %v1116
      %v1118 = vrot.slane %v1062, %v1117
      %v1120 = vunpack.c.l.s4 1983009808
      %v1121 = vunpack.c.0.s8 %v1120
      %v1122 = vlaneseq
      %v1123 = vshrl.u32 %v1122, 7
      %v1124 = vsub.s32 %v1121, %v1123
      %v1125 = vrot.slane %v1063, %v1124
      %v1127 = vunpack.c.l.s4 1983009808
      %v1128 = vunpack.c.0.s8 %v1127
      %v1129 = vlaneseq
      %v1130 = vshrl.u32 %v1129, 7
      %v1131 = vsub.s32 %v1128, %v1130
      %v1132 = vrot.slane %v1064, %v1131
      %v1134 = vunpack.c.l.s4 1983009808
      %v1135 = vunpack.c.0.s8 %v1134
      %v1136 = vlaneseq
      %v1137 = vshrl.u32 %v1136, 7
      %v1138 = vsub.s32 %v1135, %v1137
      %v1139 = vrot.slane %v1065, %v1138
      %v1141 = vunpack.c.l.s4 1983009808
      %v1142 = vunpack.c.0.s8 %v1141
      %v1143 = vlaneseq
      %v1144 = vshrl.u32 %v1143, 7
      %v1145 = vsub.s32 %v1142, %v1144
      %v1146 = vrot.slane %v1066, %v1145
      %v1148 = vunpack.c.l.s4 1983009808
      %v1149 = vunpack.c.0.s8 %v1148
      %v1150 = vlaneseq
      %v1151 = vshrl.u32 %v1150, 7
      %v1152 = vsub.s32 %v1149, %v1151
      %v1153 = vrot.slane %v1067, %v1152
      %v1155 = vunpack.c.l.s4 1983009808
      %v1156 = vunpack.c.0.s8 %v1155
      %v1157 = vlaneseq
      %v1158 = vshrl.u32 %v1157, 7
      %v1159 = vsub.s32 %v1156, %v1158
      %v1160 = vrot.slane %v1068, %v1159
      %v1162 = vunpack.c.l.s4 1983009808
      %v1163 = vunpack.c.0.s8 %v1162
      %v1164 = vlaneseq
      %v1165 = vshrl.u32 %v1164, 7
      %v1166 = vsub.s32 %v1163, %v1165
      %v1167 = vrot.slane %v1069, %v1166
      %v1169 = vunpack.c.l.s4 1983009808
      %v1170 = vunpack.c.0.s8 %v1169
      %v1171 = vlaneseq
      %v1172 = vshrl.u32 %v1171, 7
      %v1173 = vsub.s32 %v1170, %v1172
      %v1174 = vrot.slane %v1070, %v1173
      %v1176 = vunpack.c.l.s4 1983009808
      %v1177 = vunpack.c.0.s8 %v1176
      %v1178 = vlaneseq
      %v1179 = vshrl.u32 %v1178, 7
      %v1180 = vsub.s32 %v1177, %v1179
      %v1181 = vrot.slane %v1071, %v1180
      %v1183 = vunpack.c.l.s4 1983009808
      %v1184 = vunpack.c.0.s8 %v1183
      %v1185 = vlaneseq
      %v1186 = vshrl.u32 %v1185, 7
      %v1187 = vsub.s32 %v1184, %v1186
      %v1188 = vrot.slane %v1072, %v1187
      %v1190 = vunpack.c.l.s4 1983009808
      %v1191 = vunpack.c.0.s8 %v1190
      %v1192 = vlaneseq
      %v1193 = vshrl.u32 %v1192, 7
      %v1194 = vsub.s32 %v1191, %v1193
      %v1195 = vrot.slane %v1073, %v1194
      %v1197 = vunpack.c.l.s4 1983009808
      %v1198 = vunpack.c.0.s8 %v1197
      %v1199 = vlaneseq
      %v1200 = vshrl.u32 %v1199, 7
      %v1201 = vsub.s32 %v1198, %v1200
      %v1202 = vrot.slane %v1074, %v1201
      %v1204 = vunpack.c.l.s4 1983009808
      %v1205 = vunpack.c.0.s8 %v1204
      %v1206 = vlaneseq
      %v1207 = vshrl.u32 %v1206, 7
      %v1208 = vsub.s32 %v1205, %v1207
      %v1209 = vrot.slane %v1097, %v1208
      %v1211 = vunpack.c.l.s4 1983009808
      %v1212 = vunpack.c.0.s8 %v1211
      %v1213 = vlaneseq
      %v1214 = vshrl.u32 %v1213, 7
      %v1215 = vsub.s32 %v1212, %v1214
      %v1216 = vrot.slane %v1104, %v1215
      %v1218 = vunpack.c.l.s4 1983009808
      %v1219 = vunpack.c.0.s8 %v1218
      %v1220 = vlaneseq
      %v1221 = vshrl.u32 %v1220, 7
      %v1222 = vsub.s32 %v1219, %v1221
      %v1223 = vrot.slane %v1111, %v1222
      %v1225 = vunpack.c.l.s4 1983009808
      %v1226 = vunpack.c.0.s8 %v1225
      %v1227 = vlaneseq
      %v1228 = vshrl.u32 %v1227, 7
      %v1229 = vsub.s32 %v1226, %v1228
      %v1230 = vrot.slane %v1118, %v1229
      %v1232 = vunpack.c.l.s4 1983009808
      %v1233 = vunpack.c.0.s8 %v1232
      %v1234 = vlaneseq
      %v1235 = vshrl.u32 %v1234, 7
      %v1236 = vsub.s32 %v1233, %v1235
      %v1237 = vrot.slane %v1125, %v1236
      %v1239 = vunpack.c.l.s4 1983009808
      %v1240 = vunpack.c.0.s8 %v1239
      %v1241 = vlaneseq
      %v1242 = vshrl.u32 %v1241, 7
      %v1243 = vsub.s32 %v1240, %v1242
      %v1244 = vrot.slane %v1132, %v1243
      %v1246 = vunpack.c.l.s4 1983009808
      %v1247 = vunpack.c.0.s8 %v1246
      %v1248 = vlaneseq
      %v1249 = vshrl.u32 %v1248, 7
      %v1250 = vsub.s32 %v1247, %v1249
      %v1251 = vrot.slane %v1139, %v1250
      %v1253 = vunpack.c.l.s4 1983009808
      %v1254 = vunpack.c.0.s8 %v1253
      %v1255 = vlaneseq
      %v1256 = vshrl.u32 %v1255, 7
      %v1257 = vsub.s32 %v1254, %v1256
      %v1258 = vrot.slane %v1146, %v1257
      %v1260 = vunpack.c.l.s4 1983009808
      %v1261 = vunpack.c.0.s8 %v1260
      %v1262 = vlaneseq
      %v1263 = vshrl.u32 %v1262, 7
      %v1264 = vsub.s32 %v1261, %v1263
      %v1265 = vrot.slane %v1153, %v1264
      %v1267 = vunpack.c.l.s4 1983009808
      %v1268 = vunpack.c.0.s8 %v1267
      %v1269 = vlaneseq
      %v1270 = vshrl.u32 %v1269, 7
      %v1271 = vsub.s32 %v1268, %v1270
      %v1272 = vrot.slane %v1160, %v1271
      %v1274 = vunpack.c.l.s4 1983009808
      %v1275 = vunpack.c.0.s8 %v1274
      %v1276 = vlaneseq
      %v1277 = vshrl.u32 %v1276, 7
      %v1278 = vsub.s32 %v1275, %v1277
      %v1279 = vrot.slane %v1167, %v1278
      %v1281 = vunpack.c.l.s4 1983009808
      %v1282 = vunpack.c.0.s8 %v1281
      %v1283 = vlaneseq
      %v1284 = vshrl.u32 %v1283, 7
      %v1285 = vsub.s32 %v1282, %v1284
      %v1286 = vrot.slane %v1174, %v1285
      %v1288 = vunpack.c.l.s4 1983009808
      %v1289 = vunpack.c.0.s8 %v1288
      %v1290 = vlaneseq
      %v1291 = vshrl.u32 %v1290, 7
      %v1292 = vsub.s32 %v1289, %v1291
      %v1293 = vrot.slane %v1181, %v1292
      %v1295 = vunpack.c.l.s4 1983009808
      %v1296 = vunpack.c.0.s8 %v1295
      %v1297 = vlaneseq
      %v1298 = vshrl.u32 %v1297, 7
      %v1299 = vsub.s32 %v1296, %v1298
      %v1300 = vrot.slane %v1188, %v1299
      %v1302 = vunpack.c.l.s4 1983009808
      %v1303 = vunpack.c.0.s8 %v1302
      %v1304 = vlaneseq
      %v1305 = vshrl.u32 %v1304, 7
      %v1306 = vsub.s32 %v1303, %v1305
      %v1307 = vrot.slane %v1195, %v1306
      %v1309 = vunpack.c.l.s4 1983009808
      %v1310 = vunpack.c.0.s8 %v1309
      %v1311 = vlaneseq
      %v1312 = vshrl.u32 %v1311, 7
      %v1313 = vsub.s32 %v1310, %v1312
      %v1314 = vrot.slane %v1202, %v1313
      %v1315 = vunpack.c.l.b16 %v1209
      %v1316 = vunpack.c.l.b16 %v1216
      %v1317 = vunpack.c.l.b16 %v1223
      %v1318 = vunpack.c.l.b16 %v1230
      %v1319 = vunpack.c.l.b16 %v1237
      %v1320 = vunpack.c.l.b16 %v1244
      %v1321 = vunpack.c.l.b16 %v1251
      %v1322 = vunpack.c.l.b16 %v1258
      %v1323 = vunpack.c.l.b16 %v1265
      %v1324 = vunpack.c.l.b16 %v1272
      %v1325 = vunpack.c.l.b16 %v1279
      %v1326 = vunpack.c.l.b16 %v1286
      %v1327 = vunpack.c.l.b16 %v1293
      %v1328 = vunpack.c.l.b16 %v1300
      %v1329 = vunpack.c.l.b16 %v1307
      %v1330 = vunpack.c.l.b16 %v1314
      %v1331 = vrot.slane %v1316, 7
      %vm1332 = vcmask 1041409
      %v1333 = vsel %vm1332, %v1331, %v1315
      %v1334 = vrot.slane %v1317, 6
      %vm1335 = vcmask 1042434
      %v1336 = vsel %vm1335, %v1334, %v1333
      %v1337 = vrot.slane %v1318, 5
      %vm1338 = vcmask 1043459
      %v1339 = vsel %vm1338, %v1337, %v1336
      %v1340 = vrot.slane %v1320, 7
      %v1341 = vsel %vm1332, %v1340, %v1319
      %v1342 = vrot.slane %v1321, 6
      %v1343 = vsel %vm1335, %v1342, %v1341
      %v1344 = vrot.slane %v1322, 5
      %v1345 = vsel %vm1338, %v1344, %v1343
      %v1346 = vrot.slane %v1324, 7
      %v1347 = vsel %vm1332, %v1346, %v1323
      %v1348 = vrot.slane %v1325, 6
      %v1349 = vsel %vm1335, %v1348, %v1347
      %v1350 = vrot.slane %v1326, 5
      %v1351 = vsel %vm1338, %v1350, %v1349
      %v1352 = vrot.slane %v1328, 7
      %v1353 = vsel %vm1332, %v1352, %v1327
      %v1354 = vrot.slane %v1329, 6
      %v1355 = vsel %vm1335, %v1354, %v1353
      %v1356 = vrot.slane %v1330, 5
      %v1357 = vsel %vm1338, %v1356, %v1355
      %v1358 = vpack.c.b16 %v1339, %v1339
      %v1359 = vpack.c.b16 %v1345, %v1345
      %v1360 = vpack.c.b16 %v1351, %v1351
      %v1361 = vpack.c.b16 %v1357, %v1357
      %v1363 = vunpack.c.l.s4 1983009808
      %v1364 = vunpack.c.0.s8 %v1363
      %v1365 = vlaneseq
      %v1366 = vshrl.u32 %v1365, 7
      %v1367 = vsub.s32 %v1364, %v1366
      %v1368 = vrot.slane %v1358, %v1367
      %v1370 = vunpack.c.l.s4 1983009808
      %v1371 = vunpack.c.0.s8 %v1370
      %v1372 = vlaneseq
      %v1373 = vshrl.u32 %v1372, 7
      %v1374 = vsub.s32 %v1371, %v1373
      %v1375 = vrot.slane %v1359, %v1374
      %v1377 = vunpack.c.l.s4 1983009808
      %v1378 = vunpack.c.0.s8 %v1377
      %v1379 = vlaneseq
      %v1380 = vshrl.u32 %v1379, 7
      %v1381 = vsub.s32 %v1378, %v1380
      %v1382 = vrot.slane %v1360, %v1381
      %v1384 = vunpack.c.l.s4 1983009808
      %v1385 = vunpack.c.0.s8 %v1384
      %v1386 = vlaneseq
      %v1387 = vshrl.u32 %v1386, 7
      %v1388 = vsub.s32 %v1385, %v1387
      %v1389 = vrot.slane %v1361, %v1388
      %vm1394 = vcmask 517120
      %1395 = vst.msk [vmem:[%s170] sm:$0x3] %vm1394, %v1368
      %1396 = vst.msk [vmem:[%s170 + $0x2] sm:$0x3] %vm1394, %v1375
      %1397 = vst.msk [vmem:[%s170 + $0x4] sm:$0x3] %vm1394, %v1382
      %1398 = vst.msk [vmem:[%s170 + $0x6] sm:$0x3] %vm1394, %v1389
      %p1399 = scmp.lt.s32.totalorder %s14, 1
      %s1400 = scalar_select %p1399, %s14, 1
      %s1401 = smul.addr %s1400, 4
      %s1402 = smul.addr %s1401, 2
      %s1403 = scalar_lea.vmem %s3, %s1402
      // Predicated region
      $region33: #{network_forward.4} parent=31 // pred_check
        %p1404 = pneg %p100
      $region34: #{network_forward.4} parent=31 // pred_check_branch
        %1406 = sbr.rel (%p1404) target = $region36
      $region35: #{network_forward.4} parent=31 // pred_region
        _
      $region36: #{network_forward.4} parent=31 // pred_fallthru
        _
    $region32: #{network_forward.4} parent=5 // pred_fallthru
      _
    %p1407 = scmp.le.s32.totalorder 2, %s9
    // Predicated region
    $region37: #{network_forward.4} parent=5 // pred_check
      %p1408 = pneg %p1407
    $region38: #{network_forward.4} parent=5 // pred_check_branch
      %1410 = sbr.rel (%p1408) target = $region40
    $region39: #{network_forward.4} parent=5 // pred_region
      %s1411 = ssub.s32 %s9, 2
      // Predicated region
      $region41: #{network_forward.4} parent=39 // pred_check
        %p1412 = pneg %p106
      $region42: #{network_forward.4} parent=39 // pred_check_branch
        %1414 = sbr.rel (%p1412) target = $region44
      $region43: #{network_forward.4} parent=39 // pred_region
        %p1415 = scmp.lt.s32.totalorder %s15, 1
        %s1416 = scalar_select %p1415, %s15, 1
        %s1417 = smul.addr %s1416, 4
        %s1418 = smul.addr %s1417, 2
        %s1419 = scalar_lea.vmem %s3, %s1418
      $region44: #{network_forward.4} parent=39 // pred_fallthru
        _
    $region40: #{network_forward.4} parent=5 // pred_fallthru
      _
  $region6: #{network_forward.4} parent=0 // loop_footer
    %s13 = sadd.s32 1, %s9
  $region7: #{network_forward.4} parent=0 // loop_footer_branch
    %8 = sbr.rel target = $region3
  $region8: #{network_forward.4} parent=0 // loop_exit
    _

// kernel: network_forward.3
$region0: #{network_forward.3}
  #allocation0 [shape = 'u32[]', space=smem, size = 0x4, offset = 0x4, fixed_abs, tag = 'smem constant byte address 0x4 - core index']
  #allocation1 [shape = 'u32[144,128]{1,0:T(1,128)}', space=vmem, size = 0x12000, scoped, tag = 'internal scratch']
  %s0 = inlined_call_operand.vmem [shape: f32[2,18,18,1], index: 0, kind: input, shape index: {}]
  %s1 = inlined_call_operand.vmem [shape: bf16[9,32], index: 1, kind: input, shape index: {}]
  %s2 = inlined_call_operand.vmem [shape: f32[1,32], index: 2, kind: input, shape index: {}]
  %s3 = inlined_call_operand.vmem [shape: bf16[2,8,8,32], index: 3, kind: output, shape index: {}]
  %s4 = sld [smem:[#allocation0]]
  $region45: #{network_forward.3} parent=0
    _
  %s6 = ssub.s32 1, %s4
  %s7 = scalar_select 0, %s6, %s4
  loop: start=0, step=1, limit=4
  $region2: #{network_forward.3} parent=0 // loop_pre_header
    _
  $region3: #{network_forward.3} parent=0 // loop_header
    %s9 = sphi 0, %s13
    %p10 = scmp.ge.s32.totalorder %s9, 4
    %s19 = sphi 0, %s21
    %s22 = sphi 0, %s19
    %s23 = sphi 0, %s22
    %s39 = sphi 0, %s23
    %s43 = sphi 0, %s43
    %s45 = sphi 0, %s43
    %s46 = sphi 0, %s45
    %s60 = sphi 0, %s46
    %s64 = sphi 0, %s64
    %s66 = sphi 0, %s64
    %s67 = sphi 0, %s66
    %s81 = sphi 0, %s67
    %s87 = sphi 0, %s89
    %s90 = sphi 0, %s87
    %s91 = sphi 0, %s90
    %s107 = sphi 0, %s91
  $region4: #{network_forward.3} parent=0 // loop_header_branch
    %12 = sbr.rel (%p10) target = $region8
  $region5: #{network_forward.3} parent=0 // loop_body
    %s14 = ssub.s32 %s9, 1
    %s15 = ssub.s32 %s9, 2
    %s16 = sadd.s32 %s9, 1
    %s17 = ssub.s32 %s9, %s16
    %p18 = scmp.eq.s32.totalorder %s17, 0
    %s20 = sadd.s32 %s19, 1
    %s21 = scalar_select %p18, %s19, %s20
    %p24 = pneg %p18
    %p25 = scmp.eq.s32.totalorder %s9, 1
    %p26 = por %p24, %p25
    %p27 = scmp.ne.s32.totalorder %s19, %s22
    %p28 = scmp.eq.s32.totalorder %s9, 0
    %p29 = por %p27, %p28
    %p30 = scmp.ne.s32.totalorder %s19, %s22
    %p31 = scmp.eq.s32.totalorder %s14, 1
    %p32 = por %p30, %p31
    %p33 = scmp.ne.s32.totalorder %s22, %s23
    %p34 = scmp.eq.s32.totalorder %s14, 0
    %p35 = por %p33, %p34
    %p36 = scmp.ne.s32.totalorder %s22, %s23
    %p37 = scmp.eq.s32.totalorder %s15, 1
    %p38 = por %p36, %p37
    %p40 = scmp.ne.s32.totalorder %s23, %s39
    %p41 = scmp.eq.s32.totalorder %s15, 0
    %p42 = por %p40, %p41
    %s44 = sadd.s32 %s43, 1
    %p47 = scmp.eq.s32.totalorder %s9, 1
    %p48 = scmp.ne.s32.totalorder %s43, %s45
    %p49 = scmp.eq.s32.totalorder %s9, 0
    %p50 = por %p48, %p49
    %p51 = scmp.ne.s32.totalorder %s43, %s45
    %p52 = scmp.eq.s32.totalorder %s14, 1
    %p53 = por %p51, %p52
    %p54 = scmp.ne.s32.totalorder %s45, %s46
    %p55 = scmp.eq.s32.totalorder %s14, 0
    %p56 = por %p54, %p55
    %p57 = scmp.ne.s32.totalorder %s45, %s46
    %p58 = scmp.eq.s32.totalorder %s15, 1
    %p59 = por %p57, %p58
    %p61 = scmp.ne.s32.totalorder %s46, %s60
    %p62 = scmp.eq.s32.totalorder %s15, 0
    %p63 = por %p61, %p62
    %s65 = sadd.s32 %s64, 1
    %p68 = scmp.eq.s32.totalorder %s9, 1
    %p69 = scmp.ne.s32.totalorder %s64, %s66
    %p70 = scmp.eq.s32.totalorder %s9, 0
    %p71 = por %p69, %p70
    %p72 = scmp.ne.s32.totalorder %s64, %s66
    %p73 = scmp.eq.s32.totalorder %s14, 1
    %p74 = por %p72, %p73
    %p75 = scmp.ne.s32.totalorder %s66, %s67
    %p76 = scmp.eq.s32.totalorder %s14, 0
    %p77 = por %p75, %p76
    %p78 = scmp.ne.s32.totalorder %s66, %s67
    %p79 = scmp.eq.s32.totalorder %s15, 1
    %p80 = por %p78, %p79
    %p82 = scmp.ne.s32.totalorder %s67, %s81
    %p83 = scmp.eq.s32.totalorder %s15, 0
    %p84 = por %p82, %p83
    %s85 = ssub.s32 %s9, %s16
    %p86 = scmp.eq.s32.totalorder %s85, 0
    %s88 = sadd.s32 %s87, 1
    %s89 = scalar_select %p86, %s87, %s88
    %p92 = pneg %p86
    %p93 = scmp.eq.s32.totalorder %s9, 1
    %p94 = por %p92, %p93
    %p95 = scmp.ne.s32.totalorder %s87, %s90
    %p96 = scmp.eq.s32.totalorder %s9, 0
    %p97 = por %p95, %p96
    %p98 = scmp.ne.s32.totalorder %s87, %s90
    %p99 = scmp.eq.s32.totalorder %s14, 1
    %p100 = por %p98, %p99
    %p101 = scmp.ne.s32.totalorder %s90, %s91
    %p102 = scmp.eq.s32.totalorder %s14, 0
    %p103 = por %p101, %p102
    %p104 = scmp.ne.s32.totalorder %s90, %s91
    %p105 = scmp.eq.s32.totalorder %s15, 1
    %p106 = por %p104, %p105
    %p108 = scmp.ne.s32.totalorder %s91, %s107
    %p109 = scmp.eq.s32.totalorder %s15, 0
    %p110 = por %p108, %p109
    %p111 = scmp.le.s32.totalorder 1, %s9
    %p112 = scmp.lt.s32.totalorder %s9, 3
    %p113 = pnand %p111, %p112
    %p114 = pneg %p113
    // Predicated region
    $region9: #{network_forward.3} parent=5 // pred_check
      _
    $region10: #{network_forward.3} parent=5 // pred_check_branch
      %116 = sbr.rel (%p113) target = $region12
    $region11: #{network_forward.3} parent=5 // pred_region
      %s117 = ssub.s32 %s9, 1
      // Predicated region
      $region13: #{network_forward.3} parent=11 // pred_check
        %p118 = pneg %p56
      $region14: #{network_forward.3} parent=11 // pred_check_branch
        %120 = sbr.rel (%p118) target = $region16
      $region15: #{network_forward.3} parent=11 // pred_region
        _
      $region16: #{network_forward.3} parent=11 // pred_fallthru
        _
      // Predicated region
      $region17: #{network_forward.3} parent=11 // pred_check
        %p121 = pneg %p77
      $region18: #{network_forward.3} parent=11 // pred_check_branch
        %123 = sbr.rel (%p121) target = $region20
      $region19: #{network_forward.3} parent=11 // pred_region
        _
      $region20: #{network_forward.3} parent=11 // pred_fallthru
        _
    $region12: #{network_forward.3} parent=5 // pred_fallthru
      _
    %p124 = scmp.lt.s32.totalorder %s9, 2
    // Predicated region
    $region21: #{network_forward.3} parent=5 // pred_check
      %p125 = pneg %p124
    $region22: #{network_forward.3} parent=5 // pred_check_branch
      %127 = sbr.rel (%p125) target = $region24
    $region23: #{network_forward.3} parent=5 // pred_region
      // Predicated region
      $region25: #{network_forward.3} parent=23 // pred_check
        %p128 = pneg %p29
      $region26: #{network_forward.3} parent=23 // pred_check_branch
        %130 = sbr.rel (%p128) target = $region28
      $region27: #{network_forward.3} parent=23 // pred_region
        %p131 = scmp.lt.s32.totalorder %s9, 1
        %s132 = scalar_select %p131, %s9, 1
        %s133 = smul.addr %s132, 54
        %s134 = smul.addr %s133, 8
        %s135 = scalar_lea.vmem %s0, %s134
      $region28: #{network_forward.3} parent=23 // pred_fallthru
        _
    $region24: #{network_forward.3} parent=5 // pred_fallthru
      _
    %p136 = scmp.le.s32.totalorder 1, %s9
    %p137 = scmp.lt.s32.totalorder %s9, 3
    %p138 = pnand %p136, %p137
    %p139 = pneg %p138
    // Predicated region
    $region29: #{network_forward.3} parent=5 // pred_check
      _
    $region30: #{network_forward.3} parent=5 // pred_check_branch
      %141 = sbr.rel (%p138) target = $region32
    $region31: #{network_forward.3} parent=5 // pred_region
      %s142 = ssub.s32 %s9, 1
      %p143 = scmp.lt.s32.totalorder %s14, 1
      %s144 = scalar_select %p143, %s14, 1
      %s145 = smul.addr %s144, 54
      %s146 = smul.addr %s145, 8
      %s147 = scalar_lea.vmem %s0, %s146
      %p148 = pneg %p35
      %p149 = pneg %p32
      %p150 = pneg %p56
      %p151 = pneg %p53
      %p152 = pneg %p77
      %p153 = pneg %p74
      %p154 = pneg %p103
      %p155 = pneg %p100
      %p156 = scmp.lt.s32.totalorder %s14, 1
      %s157 = scalar_select %p156, %s14, 1
      %s158 = smul.addr %s157, 8
      %s159 = smul.addr %s158, 4
      %s160 = scalar_lea.vmem %s3, %s159
      %p161 = scmp.lt.s32.totalorder %s14, 1
      %s162 = scalar_select %p161, %s14, 1
      %s163 = smul.addr %s162, 54
      %s164 = smul.addr %s163, 8
      %s165 = scalar_lea.vmem %s0, %s164
      %p166 = scmp.lt.s32.totalorder %s14, 1
      %s167 = scalar_select %p166, %s14, 1
      %s168 = smul.addr %s167, 8
      %s169 = smul.addr %s168, 4
      %s170 = scalar_lea.vmem %s3, %s169
      %v172 = vld [vmem:[%s165] sm:$0xff]
      %v173 = vld [vmem:[%s165 + $0x8] sm:$0xff]
      %v174 = vld [vmem:[%s165 + $0x10] sm:$0x3]
      %v175 = vld [vmem:[%s165 + $0x18] sm:$0xff]
      %v176 = vld [vmem:[%s165 + $0x20] sm:$0xff]
      %v177 = vld [vmem:[%s165 + $0x28] sm:$0x3]
      %v178 = vld [vmem:[%s165 + $0x30] sm:$0xff]
      %v179 = vld [vmem:[%s165 + $0x38] sm:$0xff]
      %v180 = vld [vmem:[%s165 + $0x40] sm:$0x3]
      %v181 = vld [vmem:[%s165 + $0x48] sm:$0xff]
      %v182 = vld [vmem:[%s165 + $0x50] sm:$0xff]
      %v183 = vld [vmem:[%s165 + $0x58] sm:$0x3]
      %v184 = vld [vmem:[%s165 + $0x60] sm:$0xff]
      %v185 = vld [vmem:[%s165 + $0x68] sm:$0xff]
      %v186 = vld [vmem:[%s165 + $0x70] sm:$0x3]
      %v187 = vld [vmem:[%s165 + $0x78] sm:$0xff]
      %v188 = vld [vmem:[%s165 + $0x80] sm:$0xff]
      %v189 = vld [vmem:[%s165 + $0x88] sm:$0x3]
      %v190 = vld [vmem:[%s165 + $0x90] sm:$0xff]
      %v191 = vld [vmem:[%s165 + $0x98] sm:$0xff]
      %v192 = vld [vmem:[%s165 + $0xa0] sm:$0x3]
      %v193 = vld [vmem:[%s165 + $0xa8] sm:$0xff]
      %v194 = vld [vmem:[%s165 + $0xb0] sm:$0xff]
      %v195 = vld [vmem:[%s165 + $0xb8] sm:$0x3]
      %v196 = vld [vmem:[%s165 + $0xc0] sm:$0xff]
      %v197 = vld [vmem:[%s165 + $0xc8] sm:$0xff]
      %v198 = vld [vmem:[%s165 + $0xd0] sm:$0x3]
      %v199 = vld [vmem:[%s165 + $0xd8] sm:$0xff]
      %v200 = vld [vmem:[%s165 + $0xe0] sm:$0xff]
      %v201 = vld [vmem:[%s165 + $0xe8] sm:$0x3]
      %v202 = vld [vmem:[%s165 + $0xf0] sm:$0xff]
      %v203 = vld [vmem:[%s165 + $0xf8] sm:$0xff]
      %v204 = vld [vmem:[%s165 + $0x100] sm:$0x3]
      %v205 = vld [vmem:[%s165 + $0x108] sm:$0xff]
      %v206 = vld [vmem:[%s165 + $0x110] sm:$0xff]
      %v207 = vld [vmem:[%s165 + $0x118] sm:$0x3]
      %v208 = vld [vmem:[%s165 + $0x120] sm:$0xff]
      %v209 = vld [vmem:[%s165 + $0x128] sm:$0xff]
      %v210 = vld [vmem:[%s165 + $0x130] sm:$0x3]
      %v211 = vld [vmem:[%s165 + $0x138] sm:$0xff]
      %v212 = vld [vmem:[%s165 + $0x140] sm:$0xff]
      %v213 = vld [vmem:[%s165 + $0x148] sm:$0x3]
      %v214 = vld [vmem:[%s165 + $0x150] sm:$0xff]
      %v215 = vld [vmem:[%s165 + $0x158] sm:$0xff]
      %v216 = vld [vmem:[%s165 + $0x160] sm:$0x3]
      %v217 = vld [vmem:[%s165 + $0x168] sm:$0xff]
      %v218 = vld [vmem:[%s165 + $0x170] sm:$0xff]
      %v219 = vld [vmem:[%s165 + $0x178] sm:$0x3]
      %v220 = vld [vmem:[%s165 + $0x180] sm:$0xff]
      %v221 = vld [vmem:[%s165 + $0x188] sm:$0xff]
      %v222 = vld [vmem:[%s165 + $0x190] sm:$0x3]
      %v223 = vld [vmem:[%s165 + $0x198] sm:$0xff]
      %v224 = vld [vmem:[%s165 + $0x1a0] sm:$0xff]
      %v225 = vld [vmem:[%s165 + $0x1a8] sm:$0x3]
      %vm274 = vcmask 1046528
      %v275 = vrot.slane %v172, 1
      %v276 = vrot.slane %v173, 1
      %v277 = vsel %vm274, %v275, %v276
      %v278 = vrot.slane %v174, 1
      %v279 = vsel %vm274, %v276, %v278
      %v280 = vrot.slane %v175, 1
      %v281 = vrot.slane %v176, 1
      %v282 = vsel %vm274, %v280, %v281
      %v283 = vrot.slane %v177, 1
      %v284 = vsel %vm274, %v281, %v283
      %v285 = vrot.slane %v178, 1
      %v286 = vrot.slane %v179, 1
      %v287 = vsel %vm274, %v285, %v286
      %v288 = vrot.slane %v180, 1
      %v289 = vsel %vm274, %v286, %v288
      %v290 = vrot.slane %v181, 1
      %v291 = vrot.slane %v182, 1
      %v292 = vsel %vm274, %v290, %v291
      %v293 = vrot.slane %v183, 1
      %v294 = vsel %vm274, %v291, %v293
      %v295 = vrot.slane %v184, 1
      %v296 = vrot.slane %v185, 1
      %v297 = vsel %vm274, %v295, %v296
      %v298 = vrot.slane %v186, 1
      %v299 = vsel %vm274, %v296, %v298
      %v300 = vrot.slane %v187, 1
      %v301 = vrot.slane %v188, 1
      %v302 = vsel %vm274, %v300, %v301
      %v303 = vrot.slane %v189, 1
      %v304 = vsel %vm274, %v301, %v303
      %v305 = vrot.slane %v190, 1
      %v306 = vrot.slane %v191, 1
      %v307 = vsel %vm274, %v305, %v306
      %v308 = vrot.slane %v192, 1
      %v309 = vsel %vm274, %v306, %v308
      %v310 = vrot.slane %v193, 1
      %v311 = vrot.slane %v194, 1
      %v312 = vsel %vm274, %v310, %v311
      %v313 = vrot.slane %v195, 1
      %v314 = vsel %vm274, %v311, %v313
      %v315 = vrot.slane %v196, 1
      %v316 = vrot.slane %v197, 1
      %v317 = vsel %vm274, %v315, %v316
      %v318 = vrot.slane %v198, 1
      %v319 = vsel %vm274, %v316, %v318
      %v320 = vrot.slane %v199, 1
      %v321 = vrot.slane %v200, 1
      %v322 = vsel %vm274, %v320, %v321
      %v323 = vrot.slane %v201, 1
      %v324 = vsel %vm274, %v321, %v323
      %v325 = vrot.slane %v202, 1
      %v326 = vrot.slane %v203, 1
      %v327 = vsel %vm274, %v325, %v326
      %v328 = vrot.slane %v204, 1
      %v329 = vsel %vm274, %v326, %v328
      %v330 = vrot.slane %v205, 1
      %v331 = vrot.slane %v206, 1
      %v332 = vsel %vm274, %v330, %v331
      %v333 = vrot.slane %v207, 1
      %v334 = vsel %vm274, %v331, %v333
      %v335 = vrot.slane %v208, 1
      %v336 = vrot.slane %v209, 1
      %v337 = vsel %vm274, %v335, %v336
      %v338 = vrot.slane %v210, 1
      %v339 = vsel %vm274, %v336, %v338
      %v340 = vrot.slane %v211, 1
      %v341 = vrot.slane %v212, 1
      %v342 = vsel %vm274, %v340, %v341
      %v343 = vrot.slane %v213, 1
      %v344 = vsel %vm274, %v341, %v343
      %v345 = vrot.slane %v214, 1
      %v346 = vrot.slane %v215, 1
      %v347 = vsel %vm274, %v345, %v346
      %v348 = vrot.slane %v216, 1
      %v349 = vsel %vm274, %v346, %v348
      %v350 = vrot.slane %v217, 1
      %v351 = vrot.slane %v218, 1
      %v352 = vsel %vm274, %v350, %v351
      %v353 = vrot.slane %v219, 1
      %v354 = vsel %vm274, %v351, %v353
      %355 = vrot.lane.b32.xlu0 %v277, 1
      %v356 = vpop.permute.xlu0 %355
      %357 = vrot.lane.b32.xlu0 %v279, 1
      %v358 = vpop.permute.xlu0 %357
      %359 = vrot.lane.b32.xlu0 %v282, 1
      %v360 = vpop.permute.xlu0 %359
      %361 = vrot.lane.b32.xlu0 %v284, 1
      %v362 = vpop.permute.xlu0 %361
      %363 = vrot.lane.b32.xlu0 %v287, 1
      %v364 = vpop.permute.xlu0 %363
      %365 = vrot.lane.b32.xlu0 %v289, 1
      %v366 = vpop.permute.xlu0 %365
      %367 = vrot.lane.b32.xlu0 %v292, 1
      %v368 = vpop.permute.xlu0 %367
      %369 = vrot.lane.b32.xlu0 %v294, 1
      %v370 = vpop.permute.xlu0 %369
      %371 = vrot.lane.b32.xlu0 %v297, 1
      %v372 = vpop.permute.xlu0 %371
      %373 = vrot.lane.b32.xlu0 %v299, 1
      %v374 = vpop.permute.xlu0 %373
      %375 = vrot.lane.b32.xlu0 %v302, 1
      %v376 = vpop.permute.xlu0 %375
      %377 = vrot.lane.b32.xlu0 %v304, 1
      %v378 = vpop.permute.xlu0 %377
      %379 = vrot.lane.b32.xlu0 %v307, 1
      %v380 = vpop.permute.xlu0 %379
      %381 = vrot.lane.b32.xlu0 %v309, 1
      %v382 = vpop.permute.xlu0 %381
      %383 = vrot.lane.b32.xlu0 %v312, 1
      %v384 = vpop.permute.xlu0 %383
      %385 = vrot.lane.b32.xlu0 %v314, 1
      %v386 = vpop.permute.xlu0 %385
      %387 = vrot.lane.b32.xlu0 %v317, 1
      %v388 = vpop.permute.xlu0 %387
      %389 = vrot.lane.b32.xlu0 %v319, 1
      %v390 = vpop.permute.xlu0 %389
      %391 = vrot.lane.b32.xlu0 %v322, 1
      %v392 = vpop.permute.xlu0 %391
      %393 = vrot.lane.b32.xlu0 %v324, 1
      %v394 = vpop.permute.xlu0 %393
      %395 = vrot.lane.b32.xlu0 %v327, 1
      %v396 = vpop.permute.xlu0 %395
      %397 = vrot.lane.b32.xlu0 %v329, 1
      %v398 = vpop.permute.xlu0 %397
      %399 = vrot.lane.b32.xlu0 %v332, 1
      %v400 = vpop.permute.xlu0 %399
      %401 = vrot.lane.b32.xlu0 %v334, 1
      %v402 = vpop.permute.xlu0 %401
      %403 = vrot.lane.b32.xlu0 %v337, 1
      %v404 = vpop.permute.xlu0 %403
      %405 = vrot.lane.b32.xlu0 %v339, 1
      %v406 = vpop.permute.xlu0 %405
      %407 = vrot.lane.b32.xlu0 %v342, 1
      %v408 = vpop.permute.xlu0 %407
      %409 = vrot.lane.b32.xlu0 %v344, 1
      %v410 = vpop.permute.xlu0 %409
      %411 = vrot.lane.b32.xlu0 %v347, 1
      %v412 = vpop.permute.xlu0 %411
      %413 = vrot.lane.b32.xlu0 %v349, 1
      %v414 = vpop.permute.xlu0 %413
      %415 = vrot.lane.b32.xlu0 %v352, 1
      %v416 = vpop.permute.xlu0 %415
      %417 = vrot.lane.b32.xlu0 %v354, 1
      %v418 = vpop.permute.xlu0 %417
      %vm451 = vcmask 1045504
      %v452 = vrot.slane %v172, 2
      %v453 = vrot.slane %v173, 2
      %v454 = vsel %vm451, %v452, %v453
      %v455 = vrot.slane %v174, 2
      %v456 = vsel %vm451, %v453, %v455
      %v457 = vrot.slane %v175, 2
      %v458 = vrot.slane %v176, 2
      %v459 = vsel %vm451, %v457, %v458
      %v460 = vrot.slane %v177, 2
      %v461 = vsel %vm451, %v458, %v460
      %v462 = vrot.slane %v178, 2
      %v463 = vrot.slane %v179, 2
      %v464 = vsel %vm451, %v462, %v463
      %v465 = vrot.slane %v180, 2
      %v466 = vsel %vm451, %v463, %v465
      %v467 = vrot.slane %v181, 2
      %v468 = vrot.slane %v182, 2
      %v469 = vsel %vm451, %v467, %v468
      %v470 = vrot.slane %v183, 2
      %v471 = vsel %vm451, %v468, %v470
      %v472 = vrot.slane %v184, 2
      %v473 = vrot.slane %v185, 2
      %v474 = vsel %vm451, %v472, %v473
      %v475 = vrot.slane %v186, 2
      %v476 = vsel %vm451, %v473, %v475
      %v477 = vrot.slane %v187, 2
      %v478 = vrot.slane %v188, 2
      %v479 = vsel %vm451, %v477, %v478
      %v480 = vrot.slane %v189, 2
      %v481 = vsel %vm451, %v478, %v480
      %v482 = vrot.slane %v190, 2
      %v483 = vrot.slane %v191, 2
      %v484 = vsel %vm451, %v482, %v483
      %v485 = vrot.slane %v192, 2
      %v486 = vsel %vm451, %v483, %v485
      %v487 = vrot.slane %v193, 2
      %v488 = vrot.slane %v194, 2
      %v489 = vsel %vm451, %v487, %v488
      %v490 = vrot.slane %v195, 2
      %v491 = vsel %vm451, %v488, %v490
      %v492 = vrot.slane %v196, 2
      %v493 = vrot.slane %v197, 2
      %v494 = vsel %vm451, %v492, %v493
      %v495 = vrot.slane %v198, 2
      %v496 = vsel %vm451, %v493, %v495
      %v497 = vrot.slane %v199, 2
      %v498 = vrot.slane %v200, 2
      %v499 = vsel %vm451, %v497, %v498
      %v500 = vrot.slane %v201, 2
      %v501 = vsel %vm451, %v498, %v500
      %v502 = vrot.slane %v202, 2
      %v503 = vrot.slane %v203, 2
      %v504 = vsel %vm451, %v502, %v503
      %v505 = vrot.slane %v204, 2
      %v506 = vsel %vm451, %v503, %v505
      %v507 = vrot.slane %v205, 2
      %v508 = vrot.slane %v206, 2
      %v509 = vsel %vm451, %v507, %v508
      %v510 = vrot.slane %v207, 2
      %v511 = vsel %vm451, %v508, %v510
      %v512 = vrot.slane %v208, 2
      %v513 = vrot.slane %v209, 2
      %v514 = vsel %vm451, %v512, %v513
      %v515 = vrot.slane %v210, 2
      %v516 = vsel %vm451, %v513, %v515
      %v517 = vrot.slane %v211, 2
      %v518 = vrot.slane %v212, 2
      %v519 = vsel %vm451, %v517, %v518
      %v520 = vrot.slane %v213, 2
      %v521 = vsel %vm451, %v518, %v520
      %v522 = vrot.slane %v214, 2
      %v523 = vrot.slane %v215, 2
      %v524 = vsel %vm451, %v522, %v523
      %v525 = vrot.slane %v216, 2
      %v526 = vsel %vm451, %v523, %v525
      %v527 = vrot.slane %v217, 2
      %v528 = vrot.slane %v218, 2
      %v529 = vsel %vm451, %v527, %v528
      %v530 = vrot.slane %v219, 2
      %v531 = vsel %vm451, %v528, %v530
      %532 = vrot.lane.b32.xlu0 %v454, 2
      %v533 = vpop.permute.xlu0 %532
      %534 = vrot.lane.b32.xlu0 %v456, 2
      %v535 = vpop.permute.xlu0 %534
      %536 = vrot.lane.b32.xlu0 %v459, 2
      %v537 = vpop.permute.xlu0 %536
      %538 = vrot.lane.b32.xlu0 %v461, 2
      %v539 = vpop.permute.xlu0 %538
      %540 = vrot.lane.b32.xlu0 %v464, 2
      %v541 = vpop.permute.xlu0 %540
      %542 = vrot.lane.b32.xlu0 %v466, 2
      %v543 = vpop.permute.xlu0 %542
      %544 = vrot.lane.b32.xlu0 %v469, 2
      %v545 = vpop.permute.xlu0 %544
      %546 = vrot.lane.b32.xlu0 %v471, 2
      %v547 = vpop.permute.xlu0 %546
      %548 = vrot.lane.b32.xlu0 %v474, 2
      %v549 = vpop.permute.xlu0 %548
      %550 = vrot.lane.b32.xlu0 %v476, 2
      %v551 = vpop.permute.xlu0 %550
      %552 = vrot.lane.b32.xlu0 %v479, 2
      %v553 = vpop.permute.xlu0 %552
      %554 = vrot.lane.b32.xlu0 %v481, 2
      %v555 = vpop.permute.xlu0 %554
      %556 = vrot.lane.b32.xlu0 %v484, 2
      %v557 = vpop.permute.xlu0 %556
      %558 = vrot.lane.b32.xlu0 %v486, 2
      %v559 = vpop.permute.xlu0 %558
      %560 = vrot.lane.b32.xlu0 %v489, 2
      %v561 = vpop.permute.xlu0 %560
      %562 = vrot.lane.b32.xlu0 %v491, 2
      %v563 = vpop.permute.xlu0 %562
      %564 = vrot.lane.b32.xlu0 %v494, 2
      %v565 = vpop.permute.xlu0 %564
      %566 = vrot.lane.b32.xlu0 %v496, 2
      %v567 = vpop.permute.xlu0 %566
      %568 = vrot.lane.b32.xlu0 %v499, 2
      %v569 = vpop.permute.xlu0 %568
      %570 = vrot.lane.b32.xlu0 %v501, 2
      %v571 = vpop.permute.xlu0 %570
      %572 = vrot.lane.b32.xlu0 %v504, 2
      %v573 = vpop.permute.xlu0 %572
      %574 = vrot.lane.b32.xlu0 %v506, 2
      %v575 = vpop.permute.xlu0 %574
      %576 = vrot.lane.b32.xlu0 %v509, 2
      %v577 = vpop.permute.xlu0 %576
      %578 = vrot.lane.b32.xlu0 %v511, 2
      %v579 = vpop.permute.xlu0 %578
      %580 = vrot.lane.b32.xlu0 %v514, 2
      %v581 = vpop.permute.xlu0 %580
      %582 = vrot.lane.b32.xlu0 %v516, 2
      %v583 = vpop.permute.xlu0 %582
      %584 = vrot.lane.b32.xlu0 %v519, 2
      %v585 = vpop.permute.xlu0 %584
      %586 = vrot.lane.b32.xlu0 %v521, 2
      %v587 = vpop.permute.xlu0 %586
      %588 = vrot.lane.b32.xlu0 %v524, 2
      %v589 = vpop.permute.xlu0 %588
      %590 = vrot.lane.b32.xlu0 %v526, 2
      %v591 = vpop.permute.xlu0 %590
      %592 = vrot.lane.b32.xlu0 %v529, 2
      %v593 = vpop.permute.xlu0 %592
      %594 = vrot.lane.b32.xlu0 %v531, 2
      %v595 = vpop.permute.xlu0 %594
      %630 = vrot.lane.b32.xlu0 %v175, 3
      %v631 = vpop.permute.xlu0 %630
      %632 = vrot.lane.b32.xlu0 %v176, 3
      %v633 = vpop.permute.xlu0 %632
      %634 = vrot.lane.b32.xlu0 %v178, 3
      %v635 = vpop.permute.xlu0 %634
      %636 = vrot.lane.b32.xlu0 %v179, 3
      %v637 = vpop.permute.xlu0 %636
      %638 = vrot.lane.b32.xlu0 %v181, 3
      %v639 = vpop.permute.xlu0 %638
      %640 = vrot.lane.b32.xlu0 %v182, 3
      %v641 = vpop.permute.xlu0 %640
      %642 = vrot.lane.b32.xlu0 %v184, 3
      %v643 = vpop.permute.xlu0 %642
      %644 = vrot.lane.b32.xlu0 %v185, 3
      %v645 = vpop.permute.xlu0 %644
      %646 = vrot.lane.b32.xlu0 %v187, 3
      %v647 = vpop.permute.xlu0 %646
      %648 = vrot.lane.b32.xlu0 %v188, 3
      %v649 = vpop.permute.xlu0 %648
      %650 = vrot.lane.b32.xlu0 %v190, 3
      %v651 = vpop.permute.xlu0 %650
      %652 = vrot.lane.b32.xlu0 %v191, 3
      %v653 = vpop.permute.xlu0 %652
      %654 = vrot.lane.b32.xlu0 %v193, 3
      %v655 = vpop.permute.xlu0 %654
      %656 = vrot.lane.b32.xlu0 %v194, 3
      %v657 = vpop.permute.xlu0 %656
      %658 = vrot.lane.b32.xlu0 %v196, 3
      %v659 = vpop.permute.xlu0 %658
      %660 = vrot.lane.b32.xlu0 %v197, 3
      %v661 = vpop.permute.xlu0 %660
      %662 = vrot.lane.b32.xlu0 %v199, 3
      %v663 = vpop.permute.xlu0 %662
      %664 = vrot.lane.b32.xlu0 %v200, 3
      %v665 = vpop.permute.xlu0 %664
      %666 = vrot.lane.b32.xlu0 %v202, 3
      %v667 = vpop.permute.xlu0 %666
      %668 = vrot.lane.b32.xlu0 %v203, 3
      %v669 = vpop.permute.xlu0 %668
      %670 = vrot.lane.b32.xlu0 %v205, 3
      %v671 = vpop.permute.xlu0 %670
      %672 = vrot.lane.b32.xlu0 %v206, 3
      %v673 = vpop.permute.xlu0 %672
      %674 = vrot.lane.b32.xlu0 %v208, 3
      %v675 = vpop.permute.xlu0 %674
      %676 = vrot.lane.b32.xlu0 %v209, 3
      %v677 = vpop.permute.xlu0 %676
      %678 = vrot.lane.b32.xlu0 %v211, 3
      %v679 = vpop.permute.xlu0 %678
      %680 = vrot.lane.b32.xlu0 %v212, 3
      %v681 = vpop.permute.xlu0 %680
      %682 = vrot.lane.b32.xlu0 %v214, 3
      %v683 = vpop.permute.xlu0 %682
      %684 = vrot.lane.b32.xlu0 %v215, 3
      %v685 = vpop.permute.xlu0 %684
      %686 = vrot.lane.b32.xlu0 %v217, 3
      %v687 = vpop.permute.xlu0 %686
      %688 = vrot.lane.b32.xlu0 %v218, 3
      %v689 = vpop.permute.xlu0 %688
      %690 = vrot.lane.b32.xlu0 %v220, 3
      %v691 = vpop.permute.xlu0 %690
      %692 = vrot.lane.b32.xlu0 %v221, 3
      %v693 = vpop.permute.xlu0 %692
      %v727 = vrot.slane %v220, 1
      %v728 = vrot.slane %v221, 1
      %v729 = vsel %vm274, %v727, %v728
      %v730 = vrot.slane %v222, 1
      %v731 = vsel %vm274, %v728, %v730
      %732 = vrot.lane.b32.xlu0 %v282, 4
      %v733 = vpop.permute.xlu0 %732
      %734 = vrot.lane.b32.xlu0 %v284, 4
      %v735 = vpop.permute.xlu0 %734
      %736 = vrot.lane.b32.xlu0 %v287, 4
      %v737 = vpop.permute.xlu0 %736
      %738 = vrot.lane.b32.xlu0 %v289, 4
      %v739 = vpop.permute.xlu0 %738
      %740 = vrot.lane.b32.xlu0 %v292, 4
      %v741 = vpop.permute.xlu0 %740
      %742 = vrot.lane.b32.xlu0 %v294, 4
      %v743 = vpop.permute.xlu0 %742
      %744 = vrot.lane.b32.xlu0 %v297, 4
      %v745 = vpop.permute.xlu0 %744
      %746 = vrot.lane.b32.xlu0 %v299, 4
      %v747 = vpop.permute.xlu0 %746
      %748 = vrot.lane.b32.xlu0 %v302, 4
      %v749 = vpop.permute.xlu0 %748
      %750 = vrot.lane.b32.xlu0 %v304, 4
      %v751 = vpop.permute.xlu0 %750
      %752 = vrot.lane.b32.xlu0 %v307, 4
      %v753 = vpop.permute.xlu0 %752
      %754 = vrot.lane.b32.xlu0 %v309, 4
      %v755 = vpop.permute.xlu0 %754
      %756 = vrot.lane.b32.xlu0 %v312, 4
      %v757 = vpop.permute.xlu0 %756
      %758 = vrot.lane.b32.xlu0 %v314, 4
      %v759 = vpop.permute.xlu0 %758
      %760 = vrot.lane.b32.xlu0 %v317, 4
      %v761 = vpop.permute.xlu0 %760
      %762 = vrot.lane.b32.xlu0 %v319, 4
      %v763 = vpop.permute.xlu0 %762
      %764 = vrot.lane.b32.xlu0 %v322, 4
      %v765 = vpop.permute.xlu0 %764
      %766 = vrot.lane.b32.xlu0 %v324, 4
      %v767 = vpop.permute.xlu0 %766
      %768 = vrot.lane.b32.xlu0 %v327, 4
      %v769 = vpop.permute.xlu0 %768
      %770 = vrot.lane.b32.xlu0 %v329, 4
      %v771 = vpop.permute.xlu0 %770
      %772 = vrot.lane.b32.xlu0 %v332, 4
      %v773 = vpop.permute.xlu0 %772
      %774 = vrot.lane.b32.xlu0 %v334, 4
      %v775 = vpop.permute.xlu0 %774
      %776 = vrot.lane.b32.xlu0 %v337, 4
      %v777 = vpop.permute.xlu0 %776
      %778 = vrot.lane.b32.xlu0 %v339, 4
      %v779 = vpop.permute.xlu0 %778
      %780 = vrot.lane.b32.xlu0 %v342, 4
      %v781 = vpop.permute.xlu0 %780
      %782 = vrot.lane.b32.xlu0 %v344, 4
      %v783 = vpop.permute.xlu0 %782
      %784 = vrot.lane.b32.xlu0 %v347, 4
      %v785 = vpop.permute.xlu0 %784
      %786 = vrot.lane.b32.xlu0 %v349, 4
      %v787 = vpop.permute.xlu0 %786
      %788 = vrot.lane.b32.xlu0 %v352, 4
      %v789 = vpop.permute.xlu0 %788
      %790 = vrot.lane.b32.xlu0 %v354, 4
      %v791 = vpop.permute.xlu0 %790
      %792 = vrot.lane.b32.xlu0 %v729, 4
      %v793 = vpop.permute.xlu0 %792
      %794 = vrot.lane.b32.xlu0 %v731, 4
      %v795 = vpop.permute.xlu0 %794
      %v828 = vrot.slane %v220, 2
      %v829 = vrot.slane %v221, 2
      %v830 = vsel %vm451, %v828, %v829
      %v831 = vrot.slane %v222, 2
      %v832 = vsel %vm451, %v829, %v831
      %833 = vrot.lane.b32.xlu0 %v459, 5
      %v834 = vpop.permute.xlu0 %833
      %835 = vrot.lane.b32.xlu0 %v461, 5
      %v836 = vpop.permute.xlu0 %835
      %837 = vrot.lane.b32.xlu0 %v464, 5
      %v838 = vpop.permute.xlu0 %837
      %839 = vrot.lane.b32.xlu0 %v466, 5
      %v840 = vpop.permute.xlu0 %839
      %841 = vrot.lane.b32.xlu0 %v469, 5
      %v842 = vpop.permute.xlu0 %841
      %843 = vrot.lane.b32.xlu0 %v471, 5
      %v844 = vpop.permute.xlu0 %843
      %845 = vrot.lane.b32.xlu0 %v474, 5
      %v846 = vpop.permute.xlu0 %845
      %847 = vrot.lane.b32.xlu0 %v476, 5
      %v848 = vpop.permute.xlu0 %847
      %849 = vrot.lane.b32.xlu0 %v479, 5
      %v850 = vpop.permute.xlu0 %849
      %851 = vrot.lane.b32.xlu0 %v481, 5
      %v852 = vpop.permute.xlu0 %851
      %853 = vrot.lane.b32.xlu0 %v484, 5
      %v854 = vpop.permute.xlu0 %853
      %855 = vrot.lane.b32.xlu0 %v486, 5
      %v856 = vpop.permute.xlu0 %855
      %857 = vrot.lane.b32.xlu0 %v489, 5
      %v858 = vpop.permute.xlu0 %857
      %859 = vrot.lane.b32.xlu0 %v491, 5
      %v860 = vpop.permute.xlu0 %859
      %861 = vrot.lane.b32.xlu0 %v494, 5
      %v862 = vpop.permute.xlu0 %861
      %863 = vrot.lane.b32.xlu0 %v496, 5
      %v864 = vpop.permute.xlu0 %863
      %865 = vrot.lane.b32.xlu0 %v499, 5
      %v866 = vpop.permute.xlu0 %865
      %867 = vrot.lane.b32.xlu0 %v501, 5
      %v868 = vpop.permute.xlu0 %867
      %869 = vrot.lane.b32.xlu0 %v504, 5
      %v870 = vpop.permute.xlu0 %869
      %871 = vrot.lane.b32.xlu0 %v506, 5
      %v872 = vpop.permute.xlu0 %871
      %873 = vrot.lane.b32.xlu0 %v509, 5
      %v874 = vpop.permute.xlu0 %873
      %875 = vrot.lane.b32.xlu0 %v511, 5
      %v876 = vpop.permute.xlu0 %875
      %877 = vrot.lane.b32.xlu0 %v514, 5
      %v878 = vpop.permute.xlu0 %877
      %879 = vrot.lane.b32.xlu0 %v516, 5
      %v880 = vpop.permute.xlu0 %879
      %881 = vrot.lane.b32.xlu0 %v519, 5
      %v882 = vpop.permute.xlu0 %881
      %883 = vrot.lane.b32.xlu0 %v521, 5
      %v884 = vpop.permute.xlu0 %883
      %885 = vrot.lane.b32.xlu0 %v524, 5
      %v886 = vpop.permute.xlu0 %885
      %887 = vrot.lane.b32.xlu0 %v526, 5
      %v888 = vpop.permute.xlu0 %887
      %889 = vrot.lane.b32.xlu0 %v529, 5
      %v890 = vpop.permute.xlu0 %889
      %891 = vrot.lane.b32.xlu0 %v531, 5
      %v892 = vpop.permute.xlu0 %891
      %893 = vrot.lane.b32.xlu0 %v830, 5
      %v894 = vpop.permute.xlu0 %893
      %895 = vrot.lane.b32.xlu0 %v832, 5
      %v896 = vpop.permute.xlu0 %895
      %931 = vrot.lane.b32.xlu0 %v178, 6
      %v932 = vpop.permute.xlu0 %931
      %933 = vrot.lane.b32.xlu0 %v179, 6
      %v934 = vpop.permute.xlu0 %933
      %935 = vrot.lane.b32.xlu0 %v181, 6
      %v936 = vpop.permute.xlu0 %935
      %937 = vrot.lane.b32.xlu0 %v182, 6
      %v938 = vpop.permute.xlu0 %937
      %939 = vrot.lane.b32.xlu0 %v184, 6
      %v940 = vpop.permute.xlu0 %939
      %941 = vrot.lane.b32.xlu0 %v185, 6
      %v942 = vpop.permute.xlu0 %941
      %943 = vrot.lane.b32.xlu0 %v187, 6
      %v944 = vpop.permute.xlu0 %943
      %945 = vrot.lane.b32.xlu0 %v188, 6
      %v946 = vpop.permute.xlu0 %945
      %947 = vrot.lane.b32.xlu0 %v190, 6
      %v948 = vpop.permute.xlu0 %947
      %949 = vrot.lane.b32.xlu0 %v191, 6
      %v950 = vpop.permute.xlu0 %949
      %951 = vrot.lane.b32.xlu0 %v193, 6
      %v952 = vpop.permute.xlu0 %951
      %953 = vrot.lane.b32.xlu0 %v194, 6
      %v954 = vpop.permute.xlu0 %953
      %955 = vrot.lane.b32.xlu0 %v196, 6
      %v956 = vpop.permute.xlu0 %955
      %957 = vrot.lane.b32.xlu0 %v197, 6
      %v958 = vpop.permute.xlu0 %957
      %959 = vrot.lane.b32.xlu0 %v199, 6
      %v960 = vpop.permute.xlu0 %959
      %961 = vrot.lane.b32.xlu0 %v200, 6
      %v962 = vpop.permute.xlu0 %961
      %963 = vrot.lane.b32.xlu0 %v202, 6
      %v964 = vpop.permute.xlu0 %963
      %965 = vrot.lane.b32.xlu0 %v203, 6
      %v966 = vpop.permute.xlu0 %965
      %967 = vrot.lane.b32.xlu0 %v205, 6
      %v968 = vpop.permute.xlu0 %967
      %969 = vrot.lane.b32.xlu0 %v206, 6
      %v970 = vpop.permute.xlu0 %969
      %971 = vrot.lane.b32.xlu0 %v208, 6
      %v972 = vpop.permute.xlu0 %971
      %973 = vrot.lane.b32.xlu0 %v209, 6
      %v974 = vpop.permute.xlu0 %973
      %975 = vrot.lane.b32.xlu0 %v211, 6
      %v976 = vpop.permute.xlu0 %975
      %977 = vrot.lane.b32.xlu0 %v212, 6
      %v978 = vpop.permute.xlu0 %977
      %979 = vrot.lane.b32.xlu0 %v214, 6
      %v980 = vpop.permute.xlu0 %979
      %981 = vrot.lane.b32.xlu0 %v215, 6
      %v982 = vpop.permute.xlu0 %981
      %983 = vrot.lane.b32.xlu0 %v217, 6
      %v984 = vpop.permute.xlu0 %983
      %985 = vrot.lane.b32.xlu0 %v218, 6
      %v986 = vpop.permute.xlu0 %985
      %987 = vrot.lane.b32.xlu0 %v220, 6
      %v988 = vpop.permute.xlu0 %987
      %989 = vrot.lane.b32.xlu0 %v221, 6
      %v990 = vpop.permute.xlu0 %989
      %991 = vrot.lane.b32.xlu0 %v223, 6
      %v992 = vpop.permute.xlu0 %991
      %993 = vrot.lane.b32.xlu0 %v224, 6
      %v994 = vpop.permute.xlu0 %993
      %v1028 = vrot.slane %v223, 1
      %v1029 = vrot.slane %v224, 1
      %v1030 = vsel %vm274, %v1028, %v1029
      %v1031 = vrot.slane %v225, 1
      %v1032 = vsel %vm274, %v1029, %v1031
      %1033 = vrot.lane.b32.xlu0 %v287, 7
      %v1034 = vpop.permute.xlu0 %1033
      %1035 = vrot.lane.b32.xlu0 %v289, 7
      %v1036 = vpop.permute.xlu0 %1035
      %1037 = vrot.lane.b32.xlu0 %v292, 7
      %v1038 = vpop.permute.xlu0 %1037
      %1039 = vrot.lane.b32.xlu0 %v294, 7
      %v1040 = vpop.permute.xlu0 %1039
      %1041 = vrot.lane.b32.xlu0 %v297, 7
      %v1042 = vpop.permute.xlu0 %1041
      %1043 = vrot.lane.b32.xlu0 %v299, 7
      %v1044 = vpop.permute.xlu0 %1043
      %1045 = vrot.lane.b32.xlu0 %v302, 7
      %v1046 = vpop.permute.xlu0 %1045
      %1047 = vrot.lane.b32.xlu0 %v304, 7
      %v1048 = vpop.permute.xlu0 %1047
      %1049 = vrot.lane.b32.xlu0 %v307, 7
      %v1050 = vpop.permute.xlu0 %1049
      %1051 = vrot.lane.b32.xlu0 %v309, 7
      %v1052 = vpop.permute.xlu0 %1051
      %1053 = vrot.lane.b32.xlu0 %v312, 7
      %v1054 = vpop.permute.xlu0 %1053
      %1055 = vrot.lane.b32.xlu0 %v314, 7
      %v1056 = vpop.permute.xlu0 %1055
      %1057 = vrot.lane.b32.xlu0 %v317, 7
      %v1058 = vpop.permute.xlu0 %1057
      %1059 = vrot.lane.b32.xlu0 %v319, 7
      %v1060 = vpop.permute.xlu0 %1059
      %1061 = vrot.lane.b32.xlu0 %v322, 7
      %v1062 = vpop.permute.xlu0 %1061
      %1063 = vrot.lane.b32.xlu0 %v324, 7
      %v1064 = vpop.permute.xlu0 %1063
      %1065 = vrot.lane.b32.xlu0 %v327, 7
      %v1066 = vpop.permute.xlu0 %1065
      %1067 = vrot.lane.b32.xlu0 %v329, 7
      %v1068 = vpop.permute.xlu0 %1067
      %1069 = vrot.lane.b32.xlu0 %v332, 7
      %v1070 = vpop.permute.xlu0 %1069
      %1071 = vrot.lane.b32.xlu0 %v334, 7
      %v1072 = vpop.permute.xlu0 %1071
      %1073 = vrot.lane.b32.xlu0 %v337, 7
      %v1074 = vpop.permute.xlu0 %1073
      %1075 = vrot.lane.b32.xlu0 %v339, 7
      %v1076 = vpop.permute.xlu0 %1075
      %1077 = vrot.lane.b32.xlu0 %v342, 7
      %v1078 = vpop.permute.xlu0 %1077
      %1079 = vrot.lane.b32.xlu0 %v344, 7
      %v1080 = vpop.permute.xlu0 %1079
      %1081 = vrot.lane.b32.xlu0 %v347, 7
      %v1082 = vpop.permute.xlu0 %1081
      %1083 = vrot.lane.b32.xlu0 %v349, 7
      %v1084 = vpop.permute.xlu0 %1083
      %1085 = vrot.lane.b32.xlu0 %v352, 7
      %v1086 = vpop.permute.xlu0 %1085
      %1087 = vrot.lane.b32.xlu0 %v354, 7
      %v1088 = vpop.permute.xlu0 %1087
      %1089 = vrot.lane.b32.xlu0 %v729, 7
      %v1090 = vpop.permute.xlu0 %1089
      %1091 = vrot.lane.b32.xlu0 %v731, 7
      %v1092 = vpop.permute.xlu0 %1091
      %1093 = vrot.lane.b32.xlu0 %v1030, 7
      %v1094 = vpop.permute.xlu0 %1093
      %1095 = vrot.lane.b32.xlu0 %v1032, 7
      %v1096 = vpop.permute.xlu0 %1095
      %v1129 = vrot.slane %v223, 2
      %v1130 = vrot.slane %v224, 2
      %v1131 = vsel %vm451, %v1129, %v1130
      %v1132 = vrot.slane %v225, 2
      %v1133 = vsel %vm451, %v1130, %v1132
      %1134 = vrot.lane.b32.xlu0 %v464, 8
      %v1135 = vpop.permute.xlu0 %1134
      %1136 = vrot.lane.b32.xlu0 %v466, 8
      %v1137 = vpop.permute.xlu0 %1136
      %1138 = vrot.lane.b32.xlu0 %v469, 8
      %v1139 = vpop.permute.xlu0 %1138
      %1140 = vrot.lane.b32.xlu0 %v471, 8
      %v1141 = vpop.permute.xlu0 %1140
      %1142 = vrot.lane.b32.xlu0 %v474, 8
      %v1143 = vpop.permute.xlu0 %1142
      %1144 = vrot.lane.b32.xlu0 %v476, 8
      %v1145 = vpop.permute.xlu0 %1144
      %1146 = vrot.lane.b32.xlu0 %v479, 8
      %v1147 = vpop.permute.xlu0 %1146
      %1148 = vrot.lane.b32.xlu0 %v481, 8
      %v1149 = vpop.permute.xlu0 %1148
      %1150 = vrot.lane.b32.xlu0 %v484, 8
      %v1151 = vpop.permute.xlu0 %1150
      %1152 = vrot.lane.b32.xlu0 %v486, 8
      %v1153 = vpop.permute.xlu0 %1152
      %1154 = vrot.lane.b32.xlu0 %v489, 8
      %v1155 = vpop.permute.xlu0 %1154
      %1156 = vrot.lane.b32.xlu0 %v491, 8
      %v1157 = vpop.permute.xlu0 %1156
      %1158 = vrot.lane.b32.xlu0 %v494, 8
      %v1159 = vpop.permute.xlu0 %1158
      %1160 = vrot.lane.b32.xlu0 %v496, 8
      %v1161 = vpop.permute.xlu0 %1160
      %1162 = vrot.lane.b32.xlu0 %v499, 8
      %v1163 = vpop.permute.xlu0 %1162
      %1164 = vrot.lane.b32.xlu0 %v501, 8
      %v1165 = vpop.permute.xlu0 %1164
      %1166 = vrot.lane.b32.xlu0 %v504, 8
      %v1167 = vpop.permute.xlu0 %1166
      %1168 = vrot.lane.b32.xlu0 %v506, 8
      %v1169 = vpop.permute.xlu0 %1168
      %1170 = vrot.lane.b32.xlu0 %v509, 8
      %v1171 = vpop.permute.xlu0 %1170
      %1172 = vrot.lane.b32.xlu0 %v511, 8
      %v1173 = vpop.permute.xlu0 %1172
      %1174 = vrot.lane.b32.xlu0 %v514, 8
      %v1175 = vpop.permute.xlu0 %1174
      %1176 = vrot.lane.b32.xlu0 %v516, 8
      %v1177 = vpop.permute.xlu0 %1176
      %1178 = vrot.lane.b32.xlu0 %v519, 8
      %v1179 = vpop.permute.xlu0 %1178
      %1180 = vrot.lane.b32.xlu0 %v521, 8
      %v1181 = vpop.permute.xlu0 %1180
      %1182 = vrot.lane.b32.xlu0 %v524, 8
      %v1183 = vpop.permute.xlu0 %1182
      %1184 = vrot.lane.b32.xlu0 %v526, 8
      %v1185 = vpop.permute.xlu0 %1184
      %1186 = vrot.lane.b32.xlu0 %v529, 8
      %v1187 = vpop.permute.xlu0 %1186
      %1188 = vrot.lane.b32.xlu0 %v531, 8
      %v1189 = vpop.permute.xlu0 %1188
      %1190 = vrot.lane.b32.xlu0 %v830, 8
      %v1191 = vpop.permute.xlu0 %1190
      %1192 = vrot.lane.b32.xlu0 %v832, 8
      %v1193 = vpop.permute.xlu0 %1192
      %1194 = vrot.lane.b32.xlu0 %v1131, 8
      %v1195 = vpop.permute.xlu0 %1194
      %1196 = vrot.lane.b32.xlu0 %v1133, 8
      %v1197 = vpop.permute.xlu0 %1196
      %vm1230 = vcmask 7168
      %v1231 = vsel %vm1230, %v172, %v356
      %v1232 = vsel %vm1230, %v173, %v358
      %v1233 = vsel %vm1230, %v175, %v360
      %v1234 = vsel %vm1230, %v176, %v362
      %v1235 = vsel %vm1230, %v178, %v364
      %v1236 = vsel %vm1230, %v179, %v366
      %v1237 = vsel %vm1230, %v181, %v368
      %v1238 = vsel %vm1230, %v182, %v370
      %v1239 = vsel %vm1230, %v184, %v372
      %v1240 = vsel %vm1230, %v185, %v374
      %v1241 = vsel %vm1230, %v187, %v376
      %v1242 = vsel %vm1230, %v188, %v378
      %v1243 = vsel %vm1230, %v190, %v380
      %v1244 = vsel %vm1230, %v191, %v382
      %v1245 = vsel %vm1230, %v193, %v384
      %v1246 = vsel %vm1230, %v194, %v386
      %v1247 = vsel %vm1230, %v196, %v388
      %v1248 = vsel %vm1230, %v197, %v390
      %v1249 = vsel %vm1230, %v199, %v392
      %v1250 = vsel %vm1230, %v200, %v394
      %v1251 = vsel %vm1230, %v202, %v396
      %v1252 = vsel %vm1230, %v203, %v398
      %v1253 = vsel %vm1230, %v205, %v400
      %v1254 = vsel %vm1230, %v206, %v402
      %v1255 = vsel %vm1230, %v208, %v404
      %v1256 = vsel %vm1230, %v209, %v406
      %v1257 = vsel %vm1230, %v211, %v408
      %v1258 = vsel %vm1230, %v212, %v410
      %v1259 = vsel %vm1230, %v214, %v412
      %v1260 = vsel %vm1230, %v215, %v414
      %v1261 = vsel %vm1230, %v217, %v416
      %v1262 = vsel %vm1230, %v218, %v418
      %vm1263 = vcmask 15360
      %v1264 = vsel %vm1263, %v1231, %v533
      %v1265 = vsel %vm1263, %v1232, %v535
      %v1266 = vsel %vm1263, %v1233, %v537
      %v1267 = vsel %vm1263, %v1234, %v539
      %v1268 = vsel %vm1263, %v1235, %v541
      %v1269 = vsel %vm1263, %v1236, %v543
      %v1270 = vsel %vm1263, %v1237, %v545
      %v1271 = vsel %vm1263, %v1238, %v547
      %v1272 = vsel %vm1263, %v1239, %v549
      %v1273 = vsel %vm1263, %v1240, %v551
      %v1274 = vsel %vm1263, %v1241, %v553
      %v1275 = vsel %vm1263, %v1242, %v555
      %v1276 = vsel %vm1263, %v1243, %v557
      %v1277 = vsel %vm1263, %v1244, %v559
      %v1278 = vsel %vm1263, %v1245, %v561
      %v1279 = vsel %vm1263, %v1246, %v563
      %v1280 = vsel %vm1263, %v1247, %v565
      %v1281 = vsel %vm1263, %v1248, %v567
      %v1282 = vsel %vm1263, %v1249, %v569
      %v1283 = vsel %vm1263, %v1250, %v571
      %v1284 = vsel %vm1263, %v1251, %v573
      %v1285 = vsel %vm1263, %v1252, %v575
      %v1286 = vsel %vm1263, %v1253, %v577
      %v1287 = vsel %vm1263, %v1254, %v579
      %v1288 = vsel %vm1263, %v1255, %v581
      %v1289 = vsel %vm1263, %v1256, %v583
      %v1290 = vsel %vm1263, %v1257, %v585
      %v1291 = vsel %vm1263, %v1258, %v587
      %v1292 = vsel %vm1263, %v1259, %v589
      %v1293 = vsel %vm1263, %v1260, %v591
      %v1294 = vsel %vm1263, %v1261, %v593
      %v1295 = vsel %vm1263, %v1262, %v595
      %vm1296 = vcmask 23552
      %v1297 = vsel %vm1296, %v1264, %v631
      %v1298 = vsel %vm1296, %v1265, %v633
      %v1299 = vsel %vm1296, %v1266, %v635
      %v1300 = vsel %vm1296, %v1267, %v637
      %v1301 = vsel %vm1296, %v1268, %v639
      %v1302 = vsel %vm1296, %v1269, %v641
      %v1303 = vsel %vm1296, %v1270, %v643
      %v1304 = vsel %vm1296, %v1271, %v645
      %v1305 = vsel %vm1296, %v1272, %v647
      %v1306 = vsel %vm1296, %v1273, %v649
      %v1307 = vsel %vm1296, %v1274, %v651
      %v1308 = vsel %vm1296, %v1275, %v653
      %v1309 = vsel %vm1296, %v1276, %v655
      %v1310 = vsel %vm1296, %v1277, %v657
      %v1311 = vsel %vm1296, %v1278, %v659
      %v1312 = vsel %vm1296, %v1279, %v661
      %v1313 = vsel %vm1296, %v1280, %v663
      %v1314 = vsel %vm1296, %v1281, %v665
      %v1315 = vsel %vm1296, %v1282, %v667
      %v1316 = vsel %vm1296, %v1283, %v669
      %v1317 = vsel %vm1296, %v1284, %v671
      %v1318 = vsel %vm1296, %v1285, %v673
      %v1319 = vsel %vm1296, %v1286, %v675
      %v1320 = vsel %vm1296, %v1287, %v677
      %v1321 = vsel %vm1296, %v1288, %v679
      %v1322 = vsel %vm1296, %v1289, %v681
      %v1323 = vsel %vm1296, %v1290, %v683
      %v1324 = vsel %vm1296, %v1291, %v685
      %v1325 = vsel %vm1296, %v1292, %v687
      %v1326 = vsel %vm1296, %v1293, %v689
      %v1327 = vsel %vm1296, %v1294, %v691
      %v1328 = vsel %vm1296, %v1295, %v693
      %vm1329 = vcmask 31744
      %v1330 = vsel %vm1329, %v1297, %v733
      %v1331 = vsel %vm1329, %v1298, %v735
      %v1332 = vsel %vm1329, %v1299, %v737
      %v1333 = vsel %vm1329, %v1300, %v739
      %v1334 = vsel %vm1329, %v1301, %v741
      %v1335 = vsel %vm1329, %v1302, %v743
      %v1336 = vsel %vm1329, %v1303, %v745
      %v1337 = vsel %vm1329, %v1304, %v747
      %v1338 = vsel %vm1329, %v1305, %v749
      %v1339 = vsel %vm1329, %v1306, %v751
      %v1340 = vsel %vm1329, %v1307, %v753
      %v1341 = vsel %vm1329, %v1308, %v755
      %v1342 = vsel %vm1329, %v1309, %v757
      %v1343 = vsel %vm1329, %v1310, %v759
      %v1344 = vsel %vm1329, %v1311, %v761
      %v1345 = vsel %vm1329, %v1312, %v763
      %v1346 = vsel %vm1329, %v1313, %v765
      %v1347 = vsel %vm1329, %v1314, %v767
      %v1348 = vsel %vm1329, %v1315, %v769
      %v1349 = vsel %vm1329, %v1316, %v771
      %v1350 = vsel %vm1329, %v1317, %v773
      %v1351 = vsel %vm1329, %v1318, %v775
      %v1352 = vsel %vm1329, %v1319, %v777
      %v1353 = vsel %vm1329, %v1320, %v779
      %v1354 = vsel %vm1329, %v1321, %v781
      %v1355 = vsel %vm1329, %v1322, %v783
      %v1356 = vsel %vm1329, %v1323, %v785
      %v1357 = vsel %vm1329, %v1324, %v787
      %v1358 = vsel %vm1329, %v1325, %v789
      %v1359 = vsel %vm1329, %v1326, %v791
      %v1360 = vsel %vm1329, %v1327, %v793
      %v1361 = vsel %vm1329, %v1328, %v795
      %vm1362 = vcmask 39936
      %v1363 = vsel %vm1362, %v1330, %v834
      %v1364 = vsel %vm1362, %v1331, %v836
      %v1365 = vsel %vm1362, %v1332, %v838
      %v1366 = vsel %vm1362, %v1333, %v840
      %v1367 = vsel %vm1362, %v1334, %v842
      %v1368 = vsel %vm1362, %v1335, %v844
      %v1369 = vsel %vm1362, %v1336, %v846
      %v1370 = vsel %vm1362, %v1337, %v848
      %v1371 = vsel %vm1362, %v1338, %v850
      %v1372 = vsel %vm1362, %v1339, %v852
      %v1373 = vsel %vm1362, %v1340, %v854
      %v1374 = vsel %vm1362, %v1341, %v856
      %v1375 = vsel %vm1362, %v1342, %v858
      %v1376 = vsel %vm1362, %v1343, %v860
      %v1377 = vsel %vm1362, %v1344, %v862
      %v1378 = vsel %vm1362, %v1345, %v864
      %v1379 = vsel %vm1362, %v1346, %v866
      %v1380 = vsel %vm1362, %v1347, %v868
      %v1381 = vsel %vm1362, %v1348, %v870
      %v1382 = vsel %vm1362, %v1349, %v872
      %v1383 = vsel %vm1362, %v1350, %v874
      %v1384 = vsel %vm1362, %v1351, %v876
      %v1385 = vsel %vm1362, %v1352, %v878
      %v1386 = vsel %vm1362, %v1353, %v880
      %v1387 = vsel %vm1362, %v1354, %v882
      %v1388 = vsel %vm1362, %v1355, %v884
      %v1389 = vsel %vm1362, %v1356, %v886
      %v1390 = vsel %vm1362, %v1357, %v888
      %v1391 = vsel %vm1362, %v1358, %v890
      %v1392 = vsel %vm1362, %v1359, %v892
      %v1393 = vsel %vm1362, %v1360, %v894
      %v1394 = vsel %vm1362, %v1361, %v896
      %vm1395 = vcmask 48128
      %v1396 = vsel %vm1395, %v1363, %v932
      %v1397 = vsel %vm1395, %v1364, %v934
      %v1398 = vsel %vm1395, %v1365, %v936
      %v1399 = vsel %vm1395, %v1366, %v938
      %v1400 = vsel %vm1395, %v1367, %v940
      %v1401 = vsel %vm1395, %v1368, %v942
      %v1402 = vsel %vm1395, %v1369, %v944
      %v1403 = vsel %vm1395, %v1370, %v946
      %v1404 = vsel %vm1395, %v1371, %v948
      %v1405 = vsel %vm1395, %v1372, %v950
      %v1406 = vsel %vm1395, %v1373, %v952
      %v1407 = vsel %vm1395, %v1374, %v954
      %v1408 = vsel %vm1395, %v1375, %v956
      %v1409 = vsel %vm1395, %v1376, %v958
      %v1410 = vsel %vm1395, %v1377, %v960
      %v1411 = vsel %vm1395, %v1378, %v962
      %v1412 = vsel %vm1395, %v1379, %v964
      %v1413 = vsel %vm1395, %v1380, %v966
      %v1414 = vsel %vm1395, %v1381, %v968
      %v1415 = vsel %vm1395, %v1382, %v970
      %v1416 = vsel %vm1395, %v1383, %v972
      %v1417 = vsel %vm1395, %v1384, %v974
      %v1418 = vsel %vm1395, %v1385, %v976
      %v1419 = vsel %vm1395, %v1386, %v978
      %v1420 = vsel %vm1395, %v1387, %v980
      %v1421 = vsel %vm1395, %v1388, %v982
      %v1422 = vsel %vm1395, %v1389, %v984
      %v1423 = vsel %vm1395, %v1390, %v986
      %v1424 = vsel %vm1395, %v1391, %v988
      %v1425 = vsel %vm1395, %v1392, %v990
      %v1426 = vsel %vm1395, %v1393, %v992
      %v1427 = vsel %vm1395, %v1394, %v994
      %vm1428 = vcmask 56320
      %v1429 = vsel %vm1428, %v1396, %v1034
      %v1430 = vsel %vm1428, %v1397, %v1036
      %v1431 = vsel %vm1428, %v1398, %v1038
      %v1432 = vsel %vm1428, %v1399, %v1040
      %v1433 = vsel %vm1428, %v1400, %v1042
      %v1434 = vsel %vm1428, %v1401, %v1044
      %v1435 = vsel %vm1428, %v1402, %v1046
      %v1436 = vsel %vm1428, %v1403, %v1048
      %v1437 = vsel %vm1428, %v1404, %v1050
      %v1438 = vsel %vm1428, %v1405, %v1052
      %v1439 = vsel %vm1428, %v1406, %v1054
      %v1440 = vsel %vm1428, %v1407, %v1056
      %v1441 = vsel %vm1428, %v1408, %v1058
      %v1442 = vsel %vm1428, %v1409, %v1060
      %v1443 = vsel %vm1428, %v1410, %v1062
      %v1444 = vsel %vm1428, %v1411, %v1064
      %v1445 = vsel %vm1428, %v1412, %v1066
      %v1446 = vsel %vm1428, %v1413, %v1068
      %v1447 = vsel %vm1428, %v1414, %v1070
      %v1448 = vsel %vm1428, %v1415, %v1072
      %v1449 = vsel %vm1428, %v1416, %v1074
      %v1450 = vsel %vm1428, %v1417, %v1076
      %v1451 = vsel %vm1428, %v1418, %v1078
      %v1452 = vsel %vm1428, %v1419, %v1080
      %v1453 = vsel %vm1428, %v1420, %v1082
      %v1454 = vsel %vm1428, %v1421, %v1084
      %v1455 = vsel %vm1428, %v1422, %v1086
      %v1456 = vsel %vm1428, %v1423, %v1088
      %v1457 = vsel %vm1428, %v1424, %v1090
      %v1458 = vsel %vm1428, %v1425, %v1092
      %v1459 = vsel %vm1428, %v1426, %v1094
      %v1460 = vsel %vm1428, %v1427, %v1096
      %vm1461 = vcmask 64512
      %v1462 = vsel %vm1461, %v1429, %v1135
      %v1463 = vsel %vm1461, %v1430, %v1137
      %v1464 = vsel %vm1461, %v1431, %v1139
      %v1465 = vsel %vm1461, %v1432, %v1141
      %v1466 = vsel %vm1461, %v1433, %v1143
      %v1467 = vsel %vm1461, %v1434, %v1145
      %v1468 = vsel %vm1461, %v1435, %v1147
      %v1469 = vsel %vm1461, %v1436, %v1149
      %v1470 = vsel %vm1461, %v1437, %v1151
      %v1471 = vsel %vm1461, %v1438, %v1153
      %v1472 = vsel %vm1461, %v1439, %v1155
      %v1473 = vsel %vm1461, %v1440, %v1157
      %v1474 = vsel %vm1461, %v1441, %v1159
      %v1475 = vsel %vm1461, %v1442, %v1161
      %v1476 = vsel %vm1461, %v1443, %v1163
      %v1477 = vsel %vm1461, %v1444, %v1165
      %v1478 = vsel %vm1461, %v1445, %v1167
      %v1479 = vsel %vm1461, %v1446, %v1169
      %v1480 = vsel %vm1461, %v1447, %v1171
      %v1481 = vsel %vm1461, %v1448, %v1173
      %v1482 = vsel %vm1461, %v1449, %v1175
      %v1483 = vsel %vm1461, %v1450, %v1177
      %v1484 = vsel %vm1461, %v1451, %v1179
      %v1485 = vsel %vm1461, %v1452, %v1181
      %v1486 = vsel %vm1461, %v1453, %v1183
      %v1487 = vsel %vm1461, %v1454, %v1185
      %v1488 = vsel %vm1461, %v1455, %v1187
      %v1489 = vsel %vm1461, %v1456, %v1189
      %v1490 = vsel %vm1461, %v1457, %v1191
      %v1491 = vsel %vm1461, %v1458, %v1193
      %v1492 = vsel %vm1461, %v1459, %v1195
      %v1493 = vsel %vm1461, %v1460, %v1197
      %v1494 = vpack.c.bf16 %v1463, %v1462
      %v1495 = vpack.c.bf16 %v1465, %v1464
      %v1496 = vpack.c.bf16 %v1467, %v1466
      %v1497 = vpack.c.bf16 %v1469, %v1468
      %v1498 = vpack.c.bf16 %v1471, %v1470
      %v1499 = vpack.c.bf16 %v1473, %v1472
      %v1500 = vpack.c.bf16 %v1475, %v1474
      %v1501 = vpack.c.bf16 %v1477, %v1476
      %v1502 = vpack.c.bf16 %v1479, %v1478
      %v1503 = vpack.c.bf16 %v1481, %v1480
      %v1504 = vpack.c.bf16 %v1483, %v1482
      %v1505 = vpack.c.bf16 %v1485, %v1484
      %v1506 = vpack.c.bf16 %v1487, %v1486
      %v1507 = vpack.c.bf16 %v1489, %v1488
      %v1508 = vpack.c.bf16 %v1491, %v1490
      %v1509 = vpack.c.bf16 %v1493, %v1492
      %v1510 = vld [vmem:[%s1] sm:$0xf]
      %v1511 = vld [vmem:[%s1 + $0x4] sm:$0x1]
      %v1512 = vld [vmem:[%s2] sm:$0x1]
      %v1514 = vlaneseq
      %v1515 = vshrl.u32 %v1514, 7
      %v1516 = vsub.s32 0, %v1515
      %v1517 = vrot.slane %v1512, %v1516
      %v1521 = vunpack.c.l.b16 %v1510
      %v1522 = vunpack.c.l.b16 %v1511
      %v1523 = vpack.c.b16 %v1522, %v1521
      %vm1524 = vcmask 72704
      %v1526 = vsel %vm1524, %v1494, 0
      %v1529 = vsel %vm1524, %v1495, 0
      %v1532 = vsel %vm1524, %v1496, 0
      %v1535 = vsel %vm1524, %v1497, 0
      %v1538 = vsel %vm1524, %v1498, 0
      %v1541 = vsel %vm1524, %v1499, 0
      %v1544 = vsel %vm1524, %v1500, 0
      %v1547 = vsel %vm1524, %v1501, 0
      %v1550 = vsel %vm1524, %v1502, 0
      %v1553 = vsel %vm1524, %v1503, 0
      %v1556 = vsel %vm1524, %v1504, 0
      %v1559 = vsel %vm1524, %v1505, 0
      %v1562 = vsel %vm1524, %v1506, 0
      %v1565 = vsel %vm1524, %v1507, 0
      %v1568 = vsel %vm1524, %v1508, 0
      %v1571 = vsel %vm1524, %v1509, 0
      %vm1573 = vcmask 1043456
      %vm1574 = vcmask 1044480
      %v1575 = vsel %vm1573, 4294967295, 65535
      %v1576 = vsel %vm1574, %v1575, 0
      %v1578 = vand.u32 %v1523, %v1576
      %1580 = vmatprep.subr.bf16.mxu0 0
      %1581 = vmatpush1.bf16.msra.mxu0 0
      %1582 = vmatprep.subr.bf16.mxu0 0
      %1583 = vmatpush1.bf16.msra.mxu0 0
      %1584 = vmatprep.subr.bf16.mxu0 0
      %1585 = vmatpush1.bf16.msra.mxu0 0
      %1586 = vmatprep.subr.bf16.mxu0 0
      %1587 = vmatpush1.bf16.msra.mxu0 0
      %1588 = vmatprep.subr.bf16.mxu0 0
      %1589 = vmatpush1.bf16.msra.mxu0 0
      %1590 = vmatprep.subr.bf16.mxu0 0
      %1591 = vmatpush1.bf16.msra.mxu0 0
      %1592 = vmatprep.subr.bf16.mxu0 0
      %1593 = vmatpush1.bf16.msra.mxu0 0
      %1594 = vmatprep.subr.bf16.mxu0 0
      %1595 = vmatpush1.bf16.msra.mxu0 %v1578
      %1596 = vmatprep.subr.bf16.mxu0 0
      %1597 = vmatpush2.bf16.msra.mxu0 0
      %1598 = vmatprep.subr.bf16.mxu0 0
      %1599 = vmatpush2.bf16.msra.mxu0 0
      %1600 = vmatprep.subr.bf16.mxu0 0
      %1601 = vmatpush2.bf16.msra.mxu0 0
      %1602 = vmatprep.subr.bf16.mxu0 0
      %1603 = vmatpush2.bf16.msra.mxu0 0
      %1604 = vmatprep.subr.bf16.mxu0 0
      %1605 = vmatpush2.bf16.msra.mxu0 0
      %1606 = vmatprep.subr.bf16.mxu0 0
      %1607 = vmatpush2.bf16.msra.mxu0 0
      %1608 = vmatprep.subr.bf16.mxu0 0
      %1609 = vmatpush2.bf16.msra.mxu0 0
      %1610 = vmatprep.subr.bf16.mxu0 0
      %1611 = vmatpush2.bf16.msra.mxu0 0
      %1612 = vmatprep.mubr.bf16.mxu0 0
      %1613 = vmatmul.mubr.bf16.gmra.mxu0 %v1526
      %v1614 = vpop.f32.mrf.mxu0
      %v1615 = vadd.f32 %v1517, %v1614
      %v1616 = vpop.f32.mrf.mxu0
      %v1617 = vpop.f32.mrf.mxu0
      %v1618 = vadd.f32 %v1517, %v1617
      %v1619 = vpop.f32.mrf.mxu0
      %1620 = vmatprep.mubr.bf16.mxu0 0
      %1621 = vmatmul.mubr.bf16.gmra.mxu0 %v1529
      %v1622 = vpop.f32.mrf.mxu0
      %v1623 = vadd.f32 %v1517, %v1622
      %v1624 = vpop.f32.mrf.mxu0
      %v1625 = vpop.f32.mrf.mxu0
      %v1626 = vadd.f32 %v1517, %v1625
      %v1627 = vpop.f32.mrf.mxu0
      %1628 = vmatprep.mubr.bf16.mxu0 0
      %1629 = vmatmul.mubr.bf16.gmra.mxu0 %v1532
      %v1630 = vpop.f32.mrf.mxu0
      %v1631 = vadd.f32 %v1517, %v1630
      %v1632 = vpop.f32.mrf.mxu0
      %v1633 = vpop.f32.mrf.mxu0
      %v1634 = vadd.f32 %v1517, %v1633
      %v1635 = vpop.f32.mrf.mxu0
      %1636 = vmatprep.mubr.bf16.mxu0 0
      %1637 = vmatmul.mubr.bf16.gmra.mxu0 %v1535
      %v1638 = vpop.f32.mrf.mxu0
      %v1639 = vadd.f32 %v1517, %v1638
      %v1640 = vpop.f32.mrf.mxu0
      %v1641 = vpop.f32.mrf.mxu0
      %v1642 = vadd.f32 %v1517, %v1641
      %v1643 = vpop.f32.mrf.mxu0
      %1644 = vmatprep.mubr.bf16.mxu0 0
      %1645 = vmatmul.mubr.bf16.gmra.mxu0 %v1538
      %v1646 = vpop.f32.mrf.mxu0
      %v1647 = vadd.f32 %v1517, %v1646
      %v1648 = vpop.f32.mrf.mxu0
      %v1649 = vpop.f32.mrf.mxu0
      %v1650 = vadd.f32 %v1517, %v1649
      %v1651 = vpop.f32.mrf.mxu0
      %1652 = vmatprep.mubr.bf16.mxu0 0
      %1653 = vmatmul.mubr.bf16.gmra.mxu0 %v1541
      %v1654 = vpop.f32.mrf.mxu0
      %v1655 = vadd.f32 %v1517, %v1654
      %v1656 = vpop.f32.mrf.mxu0
      %v1657 = vpop.f32.mrf.mxu0
      %v1658 = vadd.f32 %v1517, %v1657
      %v1659 = vpop.f32.mrf.mxu0
      %1660 = vmatprep.mubr.bf16.mxu0 0
      %1661 = vmatmul.mubr.bf16.gmra.mxu0 %v1544
      %v1662 = vpop.f32.mrf.mxu0
      %v1663 = vadd.f32 %v1517, %v1662
      %v1664 = vpop.f32.mrf.mxu0
      %v1665 = vpop.f32.mrf.mxu0
      %v1666 = vadd.f32 %v1517, %v1665
      %v1667 = vpop.f32.mrf.mxu0
      %1668 = vmatprep.mubr.bf16.mxu0 0
      %1669 = vmatmul.mubr.bf16.gmra.mxu0 %v1547
      %v1670 = vpop.f32.mrf.mxu0
      %v1671 = vadd.f32 %v1517, %v1670
      %v1672 = vpop.f32.mrf.mxu0
      %v1673 = vpop.f32.mrf.mxu0
      %v1674 = vadd.f32 %v1517, %v1673
      %v1675 = vpop.f32.mrf.mxu0
      %1676 = vmatprep.mubr.bf16.mxu0 0
      %1677 = vmatmul.mubr.bf16.gmra.mxu0 %v1550
      %v1678 = vpop.f32.mrf.mxu0
      %v1679 = vadd.f32 %v1517, %v1678
      %v1680 = vpop.f32.mrf.mxu0
      %v1681 = vpop.f32.mrf.mxu0
      %v1682 = vadd.f32 %v1517, %v1681
      %v1683 = vpop.f32.mrf.mxu0
      %1684 = vmatprep.mubr.bf16.mxu0 0
      %1685 = vmatmul.mubr.bf16.gmra.mxu0 %v1553
      %v1686 = vpop.f32.mrf.mxu0
      %v1687 = vadd.f32 %v1517, %v1686
      %v1688 = vpop.f32.mrf.mxu0
      %v1689 = vpop.f32.mrf.mxu0
      %v1690 = vadd.f32 %v1517, %v1689
      %v1691 = vpop.f32.mrf.mxu0
      %1692 = vmatprep.mubr.bf16.mxu0 0
      %1693 = vmatmul.mubr.bf16.gmra.mxu0 %v1556
      %v1694 = vpop.f32.mrf.mxu0
      %v1695 = vadd.f32 %v1517, %v1694
      %v1696 = vpop.f32.mrf.mxu0
      %v1697 = vpop.f32.mrf.mxu0
      %v1698 = vadd.f32 %v1517, %v1697
      %v1699 = vpop.f32.mrf.mxu0
      %1700 = vmatprep.mubr.bf16.mxu0 0
      %1701 = vmatmul.mubr.bf16.gmra.mxu0 %v1559
      %v1702 = vpop.f32.mrf.mxu0
      %v1703 = vadd.f32 %v1517, %v1702
      %v1704 = vpop.f32.mrf.mxu0
      %v1705 = vpop.f32.mrf.mxu0
      %v1706 = vadd.f32 %v1517, %v1705
      %v1707 = vpop.f32.mrf.mxu0
      %1708 = vmatprep.mubr.bf16.mxu0 0
      %1709 = vmatmul.mubr.bf16.gmra.mxu0 %v1562
      %v1710 = vpop.f32.mrf.mxu0
      %v1711 = vadd.f32 %v1517, %v1710
      %v1712 = vpop.f32.mrf.mxu0
      %v1713 = vpop.f32.mrf.mxu0
      %v1714 = vadd.f32 %v1517, %v1713
      %v1715 = vpop.f32.mrf.mxu0
      %1716 = vmatprep.mubr.bf16.mxu0 0
      %1717 = vmatmul.mubr.bf16.gmra.mxu0 %v1565
      %v1718 = vpop.f32.mrf.mxu0
      %v1719 = vadd.f32 %v1517, %v1718
      %v1720 = vpop.f32.mrf.mxu0
      %v1721 = vpop.f32.mrf.mxu0
      %v1722 = vadd.f32 %v1517, %v1721
      %v1723 = vpop.f32.mrf.mxu0
      %1724 = vmatprep.mubr.bf16.mxu0 0
      %1725 = vmatmul.mubr.bf16.gmra.mxu0 %v1568
      %v1726 = vpop.f32.mrf.mxu0
      %v1727 = vadd.f32 %v1517, %v1726
      %v1728 = vpop.f32.mrf.mxu0
      %v1729 = vpop.f32.mrf.mxu0
      %v1730 = vadd.f32 %v1517, %v1729
      %v1731 = vpop.f32.mrf.mxu0
      %1732 = vmatprep.mubr.bf16.mxu0 0
      %1733 = vmatmul.mubr.bf16.gmra.mxu0 %v1571
      %v1734 = vpop.f32.mrf.mxu0
      %v1735 = vadd.f32 %v1517, %v1734
      %v1736 = vpop.f32.mrf.mxu0
      %v1737 = vpop.f32.mrf.mxu0
      %v1738 = vadd.f32 %v1517, %v1737
      %v1739 = vpop.f32.mrf.mxu0
      %1740 = vdwg.mxu0
      %v1741 = vmax.f32 %v1615, 0.0
      %v1742 = vmax.f32 %v1618, 0.0
      %v1743 = vmax.f32 %v1623, 0.0
      %v1744 = vmax.f32 %v1626, 0.0
      %v1745 = vmax.f32 %v1631, 0.0
      %v1746 = vmax.f32 %v1634, 0.0
      %v1747 = vmax.f32 %v1639, 0.0
      %v1748 = vmax.f32 %v1642, 0.0
      %v1749 = vmax.f32 %v1647, 0.0
      %v1750 = vmax.f32 %v1650, 0.0
      %v1751 = vmax.f32 %v1655, 0.0
      %v1752 = vmax.f32 %v1658, 0.0
      %v1753 = vmax.f32 %v1663, 0.0
      %v1754 = vmax.f32 %v1666, 0.0
      %v1755 = vmax.f32 %v1671, 0.0
      %v1756 = vmax.f32 %v1674, 0.0
      %v1757 = vmax.f32 %v1679, 0.0
      %v1758 = vmax.f32 %v1682, 0.0
      %v1759 = vmax.f32 %v1687, 0.0
      %v1760 = vmax.f32 %v1690, 0.0
      %v1761 = vmax.f32 %v1695, 0.0
      %v1762 = vmax.f32 %v1698, 0.0
      %v1763 = vmax.f32 %v1703, 0.0
      %v1764 = vmax.f32 %v1706, 0.0
      %v1765 = vmax.f32 %v1711, 0.0
      %v1766 = vmax.f32 %v1714, 0.0
      %v1767 = vmax.f32 %v1719, 0.0
      %v1768 = vmax.f32 %v1722, 0.0
      %v1769 = vmax.f32 %v1727, 0.0
      %v1770 = vmax.f32 %v1730, 0.0
      %v1771 = vmax.f32 %v1735, 0.0
      %v1772 = vmax.f32 %v1738, 0.0
      %v1773 = vmax.f32 %v1741, %v1743
      %v1774 = vmax.f32 %v1742, %v1744
      %v1775 = vmax.f32 %v1745, %v1747
      %v1776 = vmax.f32 %v1746, %v1748
      %v1777 = vmax.f32 %v1749, %v1751
      %v1778 = vmax.f32 %v1750, %v1752
      %v1779 = vmax.f32 %v1753, %v1755
      %v1780 = vmax.f32 %v1754, %v1756
      %v1781 = vmax.f32 %v1757, %v1759
      %v1782 = vmax.f32 %v1758, %v1760
      %v1783 = vmax.f32 %v1761, %v1763
      %v1784 = vmax.f32 %v1762, %v1764
      %v1785 = vmax.f32 %v1765, %v1767
      %v1786 = vmax.f32 %v1766, %v1768
      %v1787 = vmax.f32 %v1769, %v1771
      %v1788 = vmax.f32 %v1770, %v1772
      %v1805 = vcombine.high %v1773, %v1773
      %v1807 = vunpack.c.l.s4 1983009808
      %v1808 = vunpack.c.0.s8 %v1807
      %v1809 = vlaneseq
      %v1810 = vshrl.u32 %v1809, 7
      %v1811 = vsub.s32 %v1808, %v1810
      %v1812 = vrot.slane %v1773, %v1811
      %v1814 = vunpack.c.l.s4 1983009808
      %v1815 = vunpack.c.0.s8 %v1814
      %v1816 = vlaneseq
      %v1817 = vshrl.u32 %v1816, 7
      %v1818 = vsub.s32 %v1815, %v1817
      %v1819 = vrot.slane %v1805, %v1818
      %v1820 = vcombine.high %v1812, %v1812
      %v1821 = vcombine.high %v1819, %v1819
      %v1822 = vcombine.high %v1774, %v1774
      %v1824 = vunpack.c.l.s4 1983009808
      %v1825 = vunpack.c.0.s8 %v1824
      %v1826 = vlaneseq
      %v1827 = vshrl.u32 %v1826, 7
      %v1828 = vsub.s32 %v1825, %v1827
      %v1829 = vrot.slane %v1774, %v1828
      %v1831 = vunpack.c.l.s4 1983009808
      %v1832 = vunpack.c.0.s8 %v1831
      %v1833 = vlaneseq
      %v1834 = vshrl.u32 %v1833, 7
      %v1835 = vsub.s32 %v1832, %v1834
      %v1836 = vrot.slane %v1822, %v1835
      %v1837 = vcombine.high %v1829, %v1829
      %v1838 = vcombine.high %v1836, %v1836
      %v1839 = vcombine.high %v1775, %v1775
      %v1841 = vunpack.c.l.s4 1983009808
      %v1842 = vunpack.c.0.s8 %v1841
      %v1843 = vlaneseq
      %v1844 = vshrl.u32 %v1843, 7
      %v1845 = vsub.s32 %v1842, %v1844
      %v1846 = vrot.slane %v1775, %v1845
      %v1848 = vunpack.c.l.s4 1983009808
      %v1849 = vunpack.c.0.s8 %v1848
      %v1850 = vlaneseq
      %v1851 = vshrl.u32 %v1850, 7
      %v1852 = vsub.s32 %v1849, %v1851
      %v1853 = vrot.slane %v1839, %v1852
      %v1854 = vcombine.high %v1846, %v1846
      %v1855 = vcombine.high %v1853, %v1853
      %v1856 = vcombine.high %v1776, %v1776
      %v1858 = vunpack.c.l.s4 1983009808
      %v1859 = vunpack.c.0.s8 %v1858
      %v1860 = vlaneseq
      %v1861 = vshrl.u32 %v1860, 7
      %v1862 = vsub.s32 %v1859, %v1861
      %v1863 = vrot.slane %v1776, %v1862
      %v1865 = vunpack.c.l.s4 1983009808
      %v1866 = vunpack.c.0.s8 %v1865
      %v1867 = vlaneseq
      %v1868 = vshrl.u32 %v1867, 7
      %v1869 = vsub.s32 %v1866, %v1868
      %v1870 = vrot.slane %v1856, %v1869
      %v1871 = vcombine.high %v1863, %v1863
      %v1872 = vcombine.high %v1870, %v1870
      %v1873 = vcombine.high %v1777, %v1777
      %v1875 = vunpack.c.l.s4 1983009808
      %v1876 = vunpack.c.0.s8 %v1875
      %v1877 = vlaneseq
      %v1878 = vshrl.u32 %v1877, 7
      %v1879 = vsub.s32 %v1876, %v1878
      %v1880 = vrot.slane %v1777, %v1879
      %v1882 = vunpack.c.l.s4 1983009808
      %v1883 = vunpack.c.0.s8 %v1882
      %v1884 = vlaneseq
      %v1885 = vshrl.u32 %v1884, 7
      %v1886 = vsub.s32 %v1883, %v1885
      %v1887 = vrot.slane %v1873, %v1886
      %v1888 = vcombine.high %v1880, %v1880
      %v1889 = vcombine.high %v1887, %v1887
      %v1890 = vcombine.high %v1778, %v1778
      %v1892 = vunpack.c.l.s4 1983009808
      %v1893 = vunpack.c.0.s8 %v1892
      %v1894 = vlaneseq
      %v1895 = vshrl.u32 %v1894, 7
      %v1896 = vsub.s32 %v1893, %v1895
      %v1897 = vrot.slane %v1778, %v1896
      %v1899 = vunpack.c.l.s4 1983009808
      %v1900 = vunpack.c.0.s8 %v1899
      %v1901 = vlaneseq
      %v1902 = vshrl.u32 %v1901, 7
      %v1903 = vsub.s32 %v1900, %v1902
      %v1904 = vrot.slane %v1890, %v1903
      %v1905 = vcombine.high %v1897, %v1897
      %v1906 = vcombine.high %v1904, %v1904
      %v1907 = vcombine.high %v1779, %v1779
      %v1909 = vunpack.c.l.s4 1983009808
      %v1910 = vunpack.c.0.s8 %v1909
      %v1911 = vlaneseq
      %v1912 = vshrl.u32 %v1911, 7
      %v1913 = vsub.s32 %v1910, %v1912
      %v1914 = vrot.slane %v1779, %v1913
      %v1916 = vunpack.c.l.s4 1983009808
      %v1917 = vunpack.c.0.s8 %v1916
      %v1918 = vlaneseq
      %v1919 = vshrl.u32 %v1918, 7
      %v1920 = vsub.s32 %v1917, %v1919
      %v1921 = vrot.slane %v1907, %v1920
      %v1922 = vcombine.high %v1914, %v1914
      %v1923 = vcombine.high %v1921, %v1921
      %v1924 = vcombine.high %v1780, %v1780
      %v1926 = vunpack.c.l.s4 1983009808
      %v1927 = vunpack.c.0.s8 %v1926
      %v1928 = vlaneseq
      %v1929 = vshrl.u32 %v1928, 7
      %v1930 = vsub.s32 %v1927, %v1929
      %v1931 = vrot.slane %v1780, %v1930
      %v1933 = vunpack.c.l.s4 1983009808
      %v1934 = vunpack.c.0.s8 %v1933
      %v1935 = vlaneseq
      %v1936 = vshrl.u32 %v1935, 7
      %v1937 = vsub.s32 %v1934, %v1936
      %v1938 = vrot.slane %v1924, %v1937
      %v1939 = vcombine.high %v1931, %v1931
      %v1940 = vcombine.high %v1938, %v1938
      %v1941 = vcombine.high %v1781, %v1781
      %v1943 = vunpack.c.l.s4 1983009808
      %v1944 = vunpack.c.0.s8 %v1943
      %v1945 = vlaneseq
      %v1946 = vshrl.u32 %v1945, 7
      %v1947 = vsub.s32 %v1944, %v1946
      %v1948 = vrot.slane %v1781, %v1947
      %v1950 = vunpack.c.l.s4 1983009808
      %v1951 = vunpack.c.0.s8 %v1950
      %v1952 = vlaneseq
      %v1953 = vshrl.u32 %v1952, 7
      %v1954 = vsub.s32 %v1951, %v1953
      %v1955 = vrot.slane %v1941, %v1954
      %v1956 = vcombine.high %v1948, %v1948
      %v1957 = vcombine.high %v1955, %v1955
      %v1958 = vcombine.high %v1782, %v1782
      %v1960 = vunpack.c.l.s4 1983009808
      %v1961 = vunpack.c.0.s8 %v1960
      %v1962 = vlaneseq
      %v1963 = vshrl.u32 %v1962, 7
      %v1964 = vsub.s32 %v1961, %v1963
      %v1965 = vrot.slane %v1782, %v1964
      %v1967 = vunpack.c.l.s4 1983009808
      %v1968 = vunpack.c.0.s8 %v1967
      %v1969 = vlaneseq
      %v1970 = vshrl.u32 %v1969, 7
      %v1971 = vsub.s32 %v1968, %v1970
      %v1972 = vrot.slane %v1958, %v1971
      %v1973 = vcombine.high %v1965, %v1965
      %v1974 = vcombine.high %v1972, %v1972
      %v1975 = vcombine.high %v1783, %v1783
      %v1977 = vunpack.c.l.s4 1983009808
      %v1978 = vunpack.c.0.s8 %v1977
      %v1979 = vlaneseq
      %v1980 = vshrl.u32 %v1979, 7
      %v1981 = vsub.s32 %v1978, %v1980
      %v1982 = vrot.slane %v1783, %v1981
      %v1984 = vunpack.c.l.s4 1983009808
      %v1985 = vunpack.c.0.s8 %v1984
      %v1986 = vlaneseq
      %v1987 = vshrl.u32 %v1986, 7
      %v1988 = vsub.s32 %v1985, %v1987
      %v1989 = vrot.slane %v1975, %v1988
      %v1990 = vcombine.high %v1982, %v1982
      %v1991 = vcombine.high %v1989, %v1989
      %v1992 = vcombine.high %v1784, %v1784
      %v1994 = vunpack.c.l.s4 1983009808
      %v1995 = vunpack.c.0.s8 %v1994
      %v1996 = vlaneseq
      %v1997 = vshrl.u32 %v1996, 7
      %v1998 = vsub.s32 %v1995, %v1997
      %v1999 = vrot.slane %v1784, %v1998
      %v2001 = vunpack.c.l.s4 1983009808
      %v2002 = vunpack.c.0.s8 %v2001
      %v2003 = vlaneseq
      %v2004 = vshrl.u32 %v2003, 7
      %v2005 = vsub.s32 %v2002, %v2004
      %v2006 = vrot.slane %v1992, %v2005
      %v2007 = vcombine.high %v1999, %v1999
      %v2008 = vcombine.high %v2006, %v2006
      %v2009 = vcombine.high %v1785, %v1785
      %v2011 = vunpack.c.l.s4 1983009808
      %v2012 = vunpack.c.0.s8 %v2011
      %v2013 = vlaneseq
      %v2014 = vshrl.u32 %v2013, 7
      %v2015 = vsub.s32 %v2012, %v2014
      %v2016 = vrot.slane %v1785, %v2015
      %v2018 = vunpack.c.l.s4 1983009808
      %v2019 = vunpack.c.0.s8 %v2018
      %v2020 = vlaneseq
      %v2021 = vshrl.u32 %v2020, 7
      %v2022 = vsub.s32 %v2019, %v2021
      %v2023 = vrot.slane %v2009, %v2022
      %v2024 = vcombine.high %v2016, %v2016
      %v2025 = vcombine.high %v2023, %v2023
      %v2026 = vcombine.high %v1786, %v1786
      %v2028 = vunpack.c.l.s4 1983009808
      %v2029 = vunpack.c.0.s8 %v2028
      %v2030 = vlaneseq
      %v2031 = vshrl.u32 %v2030, 7
      %v2032 = vsub.s32 %v2029, %v2031
      %v2033 = vrot.slane %v1786, %v2032
      %v2035 = vunpack.c.l.s4 1983009808
      %v2036 = vunpack.c.0.s8 %v2035
      %v2037 = vlaneseq
      %v2038 = vshrl.u32 %v2037, 7
      %v2039 = vsub.s32 %v2036, %v2038
      %v2040 = vrot.slane %v2026, %v2039
      %v2041 = vcombine.high %v2033, %v2033
      %v2042 = vcombine.high %v2040, %v2040
      %v2043 = vcombine.high %v1787, %v1787
      %v2045 = vunpack.c.l.s4 1983009808
      %v2046 = vunpack.c.0.s8 %v2045
      %v2047 = vlaneseq
      %v2048 = vshrl.u32 %v2047, 7
      %v2049 = vsub.s32 %v2046, %v2048
      %v2050 = vrot.slane %v1787, %v2049
      %v2052 = vunpack.c.l.s4 1983009808
      %v2053 = vunpack.c.0.s8 %v2052
      %v2054 = vlaneseq
      %v2055 = vshrl.u32 %v2054, 7
      %v2056 = vsub.s32 %v2053, %v2055
      %v2057 = vrot.slane %v2043, %v2056
      %v2058 = vcombine.high %v2050, %v2050
      %v2059 = vcombine.high %v2057, %v2057
      %v2060 = vcombine.high %v1788, %v1788
      %v2062 = vunpack.c.l.s4 1983009808
      %v2063 = vunpack.c.0.s8 %v2062
      %v2064 = vlaneseq
      %v2065 = vshrl.u32 %v2064, 7
      %v2066 = vsub.s32 %v2063, %v2065
      %v2067 = vrot.slane %v1788, %v2066
      %v2069 = vunpack.c.l.s4 1983009808
      %v2070 = vunpack.c.0.s8 %v2069
      %v2071 = vlaneseq
      %v2072 = vshrl.u32 %v2071, 7
      %v2073 = vsub.s32 %v2070, %v2072
      %v2074 = vrot.slane %v2060, %v2073
      %v2075 = vcombine.high %v2067, %v2067
      %v2076 = vcombine.high %v2074, %v2074
      %v2141 = vrot.slane %v1812, 7
      %v2142 = vrot.slane %v2141, 2
      %v2143 = vrot.slane %v1820, 7
      %v2144 = vrot.slane %v2143, 2
      %v2145 = vrot.slane %v1819, 7
      %v2146 = vrot.slane %v2145, 2
      %v2147 = vrot.slane %v1821, 7
      %v2148 = vrot.slane %v2147, 2
      %v2149 = vrot.slane %v1829, 7
      %v2150 = vrot.slane %v2149, 2
      %v2151 = vrot.slane %v1837, 7
      %v2152 = vrot.slane %v2151, 2
      %v2153 = vrot.slane %v1836, 7
      %v2154 = vrot.slane %v2153, 2
      %v2155 = vrot.slane %v1838, 7
      %v2156 = vrot.slane %v2155, 2
      %v2157 = vrot.slane %v1846, 7
      %v2158 = vrot.slane %v2157, 2
      %v2159 = vrot.slane %v1854, 7
      %v2160 = vrot.slane %v2159, 2
      %v2161 = vrot.slane %v1853, 7
      %v2162 = vrot.slane %v2161, 2
      %v2163 = vrot.slane %v1855, 7
      %v2164 = vrot.slane %v2163, 2
      %v2165 = vrot.slane %v1863, 7
      %v2166 = vrot.slane %v2165, 2
      %v2167 = vrot.slane %v1871, 7
      %v2168 = vrot.slane %v2167, 2
      %v2169 = vrot.slane %v1870, 7
      %v2170 = vrot.slane %v2169, 2
      %v2171 = vrot.slane %v1872, 7
      %v2172 = vrot.slane %v2171, 2
      %v2173 = vrot.slane %v1880, 7
      %v2174 = vrot.slane %v2173, 2
      %v2175 = vrot.slane %v1888, 7
      %v2176 = vrot.slane %v2175, 2
      %v2177 = vrot.slane %v1887, 7
      %v2178 = vrot.slane %v2177, 2
      %v2179 = vrot.slane %v1889, 7
      %v2180 = vrot.slane %v2179, 2
      %v2181 = vrot.slane %v1897, 7
      %v2182 = vrot.slane %v2181, 2
      %v2183 = vrot.slane %v1905, 7
      %v2184 = vrot.slane %v2183, 2
      %v2185 = vrot.slane %v1904, 7
      %v2186 = vrot.slane %v2185, 2
      %v2187 = vrot.slane %v1906, 7
      %v2188 = vrot.slane %v2187, 2
      %v2189 = vrot.slane %v1914, 7
      %v2190 = vrot.slane %v2189, 2
      %v2191 = vrot.slane %v1922, 7
      %v2192 = vrot.slane %v2191, 2
      %v2193 = vrot.slane %v1921, 7
      %v2194 = vrot.slane %v2193, 2
      %v2195 = vrot.slane %v1923, 7
      %v2196 = vrot.slane %v2195, 2
      %v2197 = vrot.slane %v1931, 7
      %v2198 = vrot.slane %v2197, 2
      %v2199 = vrot.slane %v1939, 7
      %v2200 = vrot.slane %v2199, 2
      %v2201 = vrot.slane %v1938, 7
      %v2202 = vrot.slane %v2201, 2
      %v2203 = vrot.slane %v1940, 7
      %v2204 = vrot.slane %v2203, 2
      %v2205 = vrot.slane %v1948, 7
      %v2206 = vrot.slane %v2205, 2
      %v2207 = vrot.slane %v1956, 7
      %v2208 = vrot.slane %v2207, 2
      %v2209 = vrot.slane %v1955, 7
      %v2210 = vrot.slane %v2209, 2
      %v2211 = vrot.slane %v1957, 7
      %v2212 = vrot.slane %v2211, 2
      %v2213 = vrot.slane %v1965, 7
      %v2214 = vrot.slane %v2213, 2
      %v2215 = vrot.slane %v1973, 7
      %v2216 = vrot.slane %v2215, 2
      %v2217 = vrot.slane %v1972, 7
      %v2218 = vrot.slane %v2217, 2
      %v2219 = vrot.slane %v1974, 7
      %v2220 = vrot.slane %v2219, 2
      %v2221 = vrot.slane %v1982, 7
      %v2222 = vrot.slane %v2221, 2
      %v2223 = vrot.slane %v1990, 7
      %v2224 = vrot.slane %v2223, 2
      %v2225 = vrot.slane %v1989, 7
      %v2226 = vrot.slane %v2225, 2
      %v2227 = vrot.slane %v1991, 7
      %v2228 = vrot.slane %v2227, 2
      %v2229 = vrot.slane %v1999, 7
      %v2230 = vrot.slane %v2229, 2
      %v2231 = vrot.slane %v2007, 7
      %v2232 = vrot.slane %v2231, 2
      %v2233 = vrot.slane %v2006, 7
      %v2234 = vrot.slane %v2233, 2
      %v2235 = vrot.slane %v2008, 7
      %v2236 = vrot.slane %v2235, 2
      %v2237 = vrot.slane %v2016, 7
      %v2238 = vrot.slane %v2237, 2
      %v2239 = vrot.slane %v2024, 7
      %v2240 = vrot.slane %v2239, 2
      %v2241 = vrot.slane %v2023, 7
      %v2242 = vrot.slane %v2241, 2
      %v2243 = vrot.slane %v2025, 7
      %v2244 = vrot.slane %v2243, 2
      %v2245 = vrot.slane %v2033, 7
      %v2246 = vrot.slane %v2245, 2
      %v2247 = vrot.slane %v2041, 7
      %v2248 = vrot.slane %v2247, 2
      %v2249 = vrot.slane %v2040, 7
      %v2250 = vrot.slane %v2249, 2
      %v2251 = vrot.slane %v2042, 7
      %v2252 = vrot.slane %v2251, 2
      %v2253 = vrot.slane %v2050, 7
      %v2254 = vrot.slane %v2253, 2
      %v2255 = vrot.slane %v2058, 7
      %v2256 = vrot.slane %v2255, 2
      %v2257 = vrot.slane %v2057, 7
      %v2258 = vrot.slane %v2257, 2
      %v2259 = vrot.slane %v2059, 7
      %v2260 = vrot.slane %v2259, 2
      %v2261 = vrot.slane %v2067, 7
      %v2262 = vrot.slane %v2261, 2
      %v2263 = vrot.slane %v2075, 7
      %v2264 = vrot.slane %v2263, 2
      %v2265 = vrot.slane %v2074, 7
      %v2266 = vrot.slane %v2265, 2
      %v2267 = vrot.slane %v2076, 7
      %v2268 = vrot.slane %v2267, 2
      %v2333 = vmax.f32 %v1812, %v2142
      %v2334 = vmax.f32 %v1820, %v2144
      %v2335 = vmax.f32 %v1819, %v2146
      %v2336 = vmax.f32 %v1821, %v2148
      %v2337 = vmax.f32 %v1829, %v2150
      %v2338 = vmax.f32 %v1837, %v2152
      %v2339 = vmax.f32 %v1836, %v2154
      %v2340 = vmax.f32 %v1838, %v2156
      %v2341 = vmax.f32 %v1846, %v2158
      %v2342 = vmax.f32 %v1854, %v2160
      %v2343 = vmax.f32 %v1853, %v2162
      %v2344 = vmax.f32 %v1855, %v2164
      %v2345 = vmax.f32 %v1863, %v2166
      %v2346 = vmax.f32 %v1871, %v2168
      %v2347 = vmax.f32 %v1870, %v2170
      %v2348 = vmax.f32 %v1872, %v2172
      %v2349 = vmax.f32 %v1880, %v2174
      %v2350 = vmax.f32 %v1888, %v2176
      %v2351 = vmax.f32 %v1887, %v2178
      %v2352 = vmax.f32 %v1889, %v2180
      %v2353 = vmax.f32 %v1897, %v2182
      %v2354 = vmax.f32 %v1905, %v2184
      %v2355 = vmax.f32 %v1904, %v2186
      %v2356 = vmax.f32 %v1906, %v2188
      %v2357 = vmax.f32 %v1914, %v2190
      %v2358 = vmax.f32 %v1922, %v2192
      %v2359 = vmax.f32 %v1921, %v2194
      %v2360 = vmax.f32 %v1923, %v2196
      %v2361 = vmax.f32 %v1931, %v2198
      %v2362 = vmax.f32 %v1939, %v2200
      %v2363 = vmax.f32 %v1938, %v2202
      %v2364 = vmax.f32 %v1940, %v2204
      %v2365 = vmax.f32 %v1948, %v2206
      %v2366 = vmax.f32 %v1956, %v2208
      %v2367 = vmax.f32 %v1955, %v2210
      %v2368 = vmax.f32 %v1957, %v2212
      %v2369 = vmax.f32 %v1965, %v2214
      %v2370 = vmax.f32 %v1973, %v2216
      %v2371 = vmax.f32 %v1972, %v2218
      %v2372 = vmax.f32 %v1974, %v2220
      %v2373 = vmax.f32 %v1982, %v2222
      %v2374 = vmax.f32 %v1990, %v2224
      %v2375 = vmax.f32 %v1989, %v2226
      %v2376 = vmax.f32 %v1991, %v2228
      %v2377 = vmax.f32 %v1999, %v2230
      %v2378 = vmax.f32 %v2007, %v2232
      %v2379 = vmax.f32 %v2006, %v2234
      %v2380 = vmax.f32 %v2008, %v2236
      %v2381 = vmax.f32 %v2016, %v2238
      %v2382 = vmax.f32 %v2024, %v2240
      %v2383 = vmax.f32 %v2023, %v2242
      %v2384 = vmax.f32 %v2025, %v2244
      %v2385 = vmax.f32 %v2033, %v2246
      %v2386 = vmax.f32 %v2041, %v2248
      %v2387 = vmax.f32 %v2040, %v2250
      %v2388 = vmax.f32 %v2042, %v2252
      %v2389 = vmax.f32 %v2050, %v2254
      %v2390 = vmax.f32 %v2058, %v2256
      %v2391 = vmax.f32 %v2057, %v2258
      %v2392 = vmax.f32 %v2059, %v2260
      %v2393 = vmax.f32 %v2067, %v2262
      %v2394 = vmax.f32 %v2075, %v2264
      %v2395 = vmax.f32 %v2074, %v2266
      %v2396 = vmax.f32 %v2076, %v2268
      %v2397 = vpack.c.bf16 %v2333, %v2333
      %v2398 = vpack.c.bf16 %v2334, %v2334
      %v2399 = vpack.c.bf16 %v2335, %v2335
      %v2400 = vpack.c.bf16 %v2336, %v2336
      %v2401 = vpack.c.bf16 %v2337, %v2337
      %v2402 = vpack.c.bf16 %v2338, %v2338
      %v2403 = vpack.c.bf16 %v2339, %v2339
      %v2404 = vpack.c.bf16 %v2340, %v2340
      %v2405 = vpack.c.bf16 %v2341, %v2341
      %v2406 = vpack.c.bf16 %v2342, %v2342
      %v2407 = vpack.c.bf16 %v2343, %v2343
      %v2408 = vpack.c.bf16 %v2344, %v2344
      %v2409 = vpack.c.bf16 %v2345, %v2345
      %v2410 = vpack.c.bf16 %v2346, %v2346
      %v2411 = vpack.c.bf16 %v2347, %v2347
      %v2412 = vpack.c.bf16 %v2348, %v2348
      %v2413 = vpack.c.bf16 %v2349, %v2349
      %v2414 = vpack.c.bf16 %v2350, %v2350
      %v2415 = vpack.c.bf16 %v2351, %v2351
      %v2416 = vpack.c.bf16 %v2352, %v2352
      %v2417 = vpack.c.bf16 %v2353, %v2353
      %v2418 = vpack.c.bf16 %v2354, %v2354
      %v2419 = vpack.c.bf16 %v2355, %v2355
      %v2420 = vpack.c.bf16 %v2356, %v2356
      %v2421 = vpack.c.bf16 %v2357, %v2357
      %v2422 = vpack.c.bf16 %v2358, %v2358
      %v2423 = vpack.c.bf16 %v2359, %v2359
      %v2424 = vpack.c.bf16 %v2360, %v2360
      %v2425 = vpack.c.bf16 %v2361, %v2361
      %v2426 = vpack.c.bf16 %v2362, %v2362
      %v2427 = vpack.c.bf16 %v2363, %v2363
      %v2428 = vpack.c.bf16 %v2364, %v2364
      %v2429 = vpack.c.bf16 %v2365, %v2365
      %v2430 = vpack.c.bf16 %v2366, %v2366
      %v2431 = vpack.c.bf16 %v2367, %v2367
      %v2432 = vpack.c.bf16 %v2368, %v2368
      %v2433 = vpack.c.bf16 %v2369, %v2369
      %v2434 = vpack.c.bf16 %v2370, %v2370
      %v2435 = vpack.c.bf16 %v2371, %v2371
      %v2436 = vpack.c.bf16 %v2372, %v2372
      %v2437 = vpack.c.bf16 %v2373, %v2373
      %v2438 = vpack.c.bf16 %v2374, %v2374
      %v2439 = vpack.c.bf16 %v2375, %v2375
      %v2440 = vpack.c.bf16 %v2376, %v2376
      %v2441 = vpack.c.bf16 %v2377, %v2377
      %v2442 = vpack.c.bf16 %v2378, %v2378
      %v2443 = vpack.c.bf16 %v2379, %v2379
      %v2444 = vpack.c.bf16 %v2380, %v2380
      %v2445 = vpack.c.bf16 %v2381, %v2381
      %v2446 = vpack.c.bf16 %v2382, %v2382
      %v2447 = vpack.c.bf16 %v2383, %v2383
      %v2448 = vpack.c.bf16 %v2384, %v2384
      %v2449 = vpack.c.bf16 %v2385, %v2385
      %v2450 = vpack.c.bf16 %v2386, %v2386
      %v2451 = vpack.c.bf16 %v2387, %v2387
      %v2452 = vpack.c.bf16 %v2388, %v2388
      %v2453 = vpack.c.bf16 %v2389, %v2389
      %v2454 = vpack.c.bf16 %v2390, %v2390
      %v2455 = vpack.c.bf16 %v2391, %v2391
      %v2456 = vpack.c.bf16 %v2392, %v2392
      %v2457 = vpack.c.bf16 %v2393, %v2393
      %v2458 = vpack.c.bf16 %v2394, %v2394
      %v2459 = vpack.c.bf16 %v2395, %v2395
      %v2460 = vpack.c.bf16 %v2396, %v2396
      %v2525 = vunpack.c.l.b16 %v2397
      %v2526 = vunpack.c.l.b16 %v2398
      %v2527 = vunpack.c.l.b16 %v2399
      %v2528 = vunpack.c.l.b16 %v2400
      %v2529 = vunpack.c.l.b16 %v2401
      %v2530 = vunpack.c.l.b16 %v2402
      %v2531 = vunpack.c.l.b16 %v2403
      %v2532 = vunpack.c.l.b16 %v2404
      %v2533 = vunpack.c.l.b16 %v2405
      %v2534 = vunpack.c.l.b16 %v2406
      %v2535 = vunpack.c.l.b16 %v2407
      %v2536 = vunpack.c.l.b16 %v2408
      %v2537 = vunpack.c.l.b16 %v2409
      %v2538 = vunpack.c.l.b16 %v2410
      %v2539 = vunpack.c.l.b16 %v2411
      %v2540 = vunpack.c.l.b16 %v2412
      %v2541 = vunpack.c.l.b16 %v2413
      %v2542 = vunpack.c.l.b16 %v2414
      %v2543 = vunpack.c.l.b16 %v2415
      %v2544 = vunpack.c.l.b16 %v2416
      %v2545 = vunpack.c.l.b16 %v2417
      %v2546 = vunpack.c.l.b16 %v2418
      %v2547 = vunpack.c.l.b16 %v2419
      %v2548 = vunpack.c.l.b16 %v2420
      %v2549 = vunpack.c.l.b16 %v2421
      %v2550 = vunpack.c.l.b16 %v2422
      %v2551 = vunpack.c.l.b16 %v2423
      %v2552 = vunpack.c.l.b16 %v2424
      %v2553 = vunpack.c.l.b16 %v2425
      %v2554 = vunpack.c.l.b16 %v2426
      %v2555 = vunpack.c.l.b16 %v2427
      %v2556 = vunpack.c.l.b16 %v2428
      %v2557 = vunpack.c.l.b16 %v2429
      %v2558 = vunpack.c.l.b16 %v2430
      %v2559 = vunpack.c.l.b16 %v2431
      %v2560 = vunpack.c.l.b16 %v2432
      %v2561 = vunpack.c.l.b16 %v2433
      %v2562 = vunpack.c.l.b16 %v2434
      %v2563 = vunpack.c.l.b16 %v2435
      %v2564 = vunpack.c.l.b16 %v2436
      %v2565 = vunpack.c.l.b16 %v2437
      %v2566 = vunpack.c.l.b16 %v2438
      %v2567 = vunpack.c.l.b16 %v2439
      %v2568 = vunpack.c.l.b16 %v2440
      %v2569 = vunpack.c.l.b16 %v2441
      %v2570 = vunpack.c.l.b16 %v2442
      %v2571 = vunpack.c.l.b16 %v2443
      %v2572 = vunpack.c.l.b16 %v2444
      %v2573 = vunpack.c.l.b16 %v2445
      %v2574 = vunpack.c.l.b16 %v2446
      %v2575 = vunpack.c.l.b16 %v2447
      %v2576 = vunpack.c.l.b16 %v2448
      %v2577 = vunpack.c.l.b16 %v2449
      %v2578 = vunpack.c.l.b16 %v2450
      %v2579 = vunpack.c.l.b16 %v2451
      %v2580 = vunpack.c.l.b16 %v2452
      %v2581 = vunpack.c.l.b16 %v2453
      %v2582 = vunpack.c.l.b16 %v2454
      %v2583 = vunpack.c.l.b16 %v2455
      %v2584 = vunpack.c.l.b16 %v2456
      %v2585 = vunpack.c.l.b16 %v2457
      %v2586 = vunpack.c.l.b16 %v2458
      %v2587 = vunpack.c.l.b16 %v2459
      %v2588 = vunpack.c.l.b16 %v2460
      %v2589 = vpack.c.b16 %v2525, %v2525
      %v2590 = vpack.c.b16 %v2526, %v2526
      %v2591 = vpack.c.b16 %v2527, %v2527
      %v2592 = vpack.c.b16 %v2528, %v2528
      %v2593 = vpack.c.b16 %v2529, %v2529
      %v2594 = vpack.c.b16 %v2530, %v2530
      %v2595 = vpack.c.b16 %v2531, %v2531
      %v2596 = vpack.c.b16 %v2532, %v2532
      %v2597 = vpack.c.b16 %v2533, %v2533
      %v2598 = vpack.c.b16 %v2534, %v2534
      %v2599 = vpack.c.b16 %v2535, %v2535
      %v2600 = vpack.c.b16 %v2536, %v2536
      %v2601 = vpack.c.b16 %v2537, %v2537
      %v2602 = vpack.c.b16 %v2538, %v2538
      %v2603 = vpack.c.b16 %v2539, %v2539
      %v2604 = vpack.c.b16 %v2540, %v2540
      %v2605 = vpack.c.b16 %v2541, %v2541
      %v2606 = vpack.c.b16 %v2542, %v2542
      %v2607 = vpack.c.b16 %v2543, %v2543
      %v2608 = vpack.c.b16 %v2544, %v2544
      %v2609 = vpack.c.b16 %v2545, %v2545
      %v2610 = vpack.c.b16 %v2546, %v2546
      %v2611 = vpack.c.b16 %v2547, %v2547
      %v2612 = vpack.c.b16 %v2548, %v2548
      %v2613 = vpack.c.b16 %v2549, %v2549
      %v2614 = vpack.c.b16 %v2550, %v2550
      %v2615 = vpack.c.b16 %v2551, %v2551
      %v2616 = vpack.c.b16 %v2552, %v2552
      %v2617 = vpack.c.b16 %v2553, %v2553
      %v2618 = vpack.c.b16 %v2554, %v2554
      %v2619 = vpack.c.b16 %v2555, %v2555
      %v2620 = vpack.c.b16 %v2556, %v2556
      %v2621 = vpack.c.b16 %v2557, %v2557
      %v2622 = vpack.c.b16 %v2558, %v2558
      %v2623 = vpack.c.b16 %v2559, %v2559
      %v2624 = vpack.c.b16 %v2560, %v2560
      %v2625 = vpack.c.b16 %v2561, %v2561
      %v2626 = vpack.c.b16 %v2562, %v2562
      %v2627 = vpack.c.b16 %v2563, %v2563
      %v2628 = vpack.c.b16 %v2564, %v2564
      %v2629 = vpack.c.b16 %v2565, %v2565
      %v2630 = vpack.c.b16 %v2566, %v2566
      %v2631 = vpack.c.b16 %v2567, %v2567
      %v2632 = vpack.c.b16 %v2568, %v2568
      %v2633 = vpack.c.b16 %v2569, %v2569
      %v2634 = vpack.c.b16 %v2570, %v2570
      %v2635 = vpack.c.b16 %v2571, %v2571
      %v2636 = vpack.c.b16 %v2572, %v2572
      %v2637 = vpack.c.b16 %v2573, %v2573
      %v2638 = vpack.c.b16 %v2574, %v2574
      %v2639 = vpack.c.b16 %v2575, %v2575
      %v2640 = vpack.c.b16 %v2576, %v2576
      %v2641 = vpack.c.b16 %v2577, %v2577
      %v2642 = vpack.c.b16 %v2578, %v2578
      %v2643 = vpack.c.b16 %v2579, %v2579
      %v2644 = vpack.c.b16 %v2580, %v2580
      %v2645 = vpack.c.b16 %v2581, %v2581
      %v2646 = vpack.c.b16 %v2582, %v2582
      %v2647 = vpack.c.b16 %v2583, %v2583
      %v2648 = vpack.c.b16 %v2584, %v2584
      %v2649 = vpack.c.b16 %v2585, %v2585
      %v2650 = vpack.c.b16 %v2586, %v2586
      %v2651 = vpack.c.b16 %v2587, %v2587
      %v2652 = vpack.c.b16 %v2588, %v2588
      %v2653 = vunpack.c.l.b16 %v2589
      %v2654 = vunpack.c.l.b16 %v2590
      %v2655 = vunpack.c.l.b16 %v2591
      %v2656 = vunpack.c.l.b16 %v2592
      %v2657 = vunpack.c.l.b16 %v2593
      %v2658 = vunpack.c.l.b16 %v2594
      %v2659 = vunpack.c.l.b16 %v2595
      %v2660 = vunpack.c.l.b16 %v2596
      %v2661 = vunpack.c.l.b16 %v2597
      %v2662 = vunpack.c.l.b16 %v2598
      %v2663 = vunpack.c.l.b16 %v2599
      %v2664 = vunpack.c.l.b16 %v2600
      %v2665 = vunpack.c.l.b16 %v2601
      %v2666 = vunpack.c.l.b16 %v2602
      %v2667 = vunpack.c.l.b16 %v2603
      %v2668 = vunpack.c.l.b16 %v2604
      %v2669 = vunpack.c.l.b16 %v2605
      %v2670 = vunpack.c.l.b16 %v2606
      %v2671 = vunpack.c.l.b16 %v2607
      %v2672 = vunpack.c.l.b16 %v2608
      %v2673 = vunpack.c.l.b16 %v2609
      %v2674 = vunpack.c.l.b16 %v2610
      %v2675 = vunpack.c.l.b16 %v2611
      %v2676 = vunpack.c.l.b16 %v2612
      %v2677 = vunpack.c.l.b16 %v2613
      %v2678 = vunpack.c.l.b16 %v2614
      %v2679 = vunpack.c.l.b16 %v2615
      %v2680 = vunpack.c.l.b16 %v2616
      %v2681 = vunpack.c.l.b16 %v2617
      %v2682 = vunpack.c.l.b16 %v2618
      %v2683 = vunpack.c.l.b16 %v2619
      %v2684 = vunpack.c.l.b16 %v2620
      %v2685 = vunpack.c.l.b16 %v2621
      %v2686 = vunpack.c.l.b16 %v2622
      %v2687 = vunpack.c.l.b16 %v2623
      %v2688 = vunpack.c.l.b16 %v2624
      %v2689 = vunpack.c.l.b16 %v2625
      %v2690 = vunpack.c.l.b16 %v2626
      %v2691 = vunpack.c.l.b16 %v2627
      %v2692 = vunpack.c.l.b16 %v2628
      %v2693 = vunpack.c.l.b16 %v2629
      %v2694 = vunpack.c.l.b16 %v2630
      %v2695 = vunpack.c.l.b16 %v2631
      %v2696 = vunpack.c.l.b16 %v2632
      %v2697 = vunpack.c.l.b16 %v2633
      %v2698 = vunpack.c.l.b16 %v2634
      %v2699 = vunpack.c.l.b16 %v2635
      %v2700 = vunpack.c.l.b16 %v2636
      %v2701 = vunpack.c.l.b16 %v2637
      %v2702 = vunpack.c.l.b16 %v2638
      %v2703 = vunpack.c.l.b16 %v2639
      %v2704 = vunpack.c.l.b16 %v2640
      %v2705 = vunpack.c.l.b16 %v2641
      %v2706 = vunpack.c.l.b16 %v2642
      %v2707 = vunpack.c.l.b16 %v2643
      %v2708 = vunpack.c.l.b16 %v2644
      %v2709 = vunpack.c.l.b16 %v2645
      %v2710 = vunpack.c.l.b16 %v2646
      %v2711 = vunpack.c.l.b16 %v2647
      %v2712 = vunpack.c.l.b16 %v2648
      %v2713 = vunpack.c.l.b16 %v2649
      %v2714 = vunpack.c.l.b16 %v2650
      %v2715 = vunpack.c.l.b16 %v2651
      %v2716 = vunpack.c.l.b16 %v2652
      %v2717 = vrot.slane %v2654, 7
      %vm2718 = vcmask 1041409
      %v2719 = vsel %vm2718, %v2717, %v2653
      %v2720 = vrot.slane %v2655, 6
      %vm2721 = vcmask 1042434
      %v2722 = vsel %vm2721, %v2720, %v2719
      %v2723 = vrot.slane %v2656, 5
      %vm2724 = vcmask 1043459
      %v2725 = vsel %vm2724, %v2723, %v2722
      %v2726 = vrot.slane %v2657, 4
      %vm2727 = vcmask 1044484
      %v2728 = vsel %vm2727, %v2726, %v2725
      %v2729 = vrot.slane %v2658, 3
      %vm2730 = vcmask 1045509
      %v2731 = vsel %vm2730, %v2729, %v2728
      %v2732 = vrot.slane %v2659, 2
      %vm2733 = vcmask 1046534
      %v2734 = vsel %vm2733, %v2732, %v2731
      %v2735 = vrot.slane %v2660, 1
      %vm2736 = vcmask 1047559
      %v2737 = vsel %vm2736, %v2735, %v2734
      %v2738 = vrot.slane %v2662, 7
      %v2739 = vsel %vm2718, %v2738, %v2661
      %v2740 = vrot.slane %v2663, 6
      %v2741 = vsel %vm2721, %v2740, %v2739
      %v2742 = vrot.slane %v2664, 5
      %v2743 = vsel %vm2724, %v2742, %v2741
      %v2744 = vrot.slane %v2665, 4
      %v2745 = vsel %vm2727, %v2744, %v2743
      %v2746 = vrot.slane %v2666, 3
      %v2747 = vsel %vm2730, %v2746, %v2745
      %v2748 = vrot.slane %v2667, 2
      %v2749 = vsel %vm2733, %v2748, %v2747
      %v2750 = vrot.slane %v2668, 1
      %v2751 = vsel %vm2736, %v2750, %v2749
      %v2752 = vrot.slane %v2670, 7
      %v2753 = vsel %vm2718, %v2752, %v2669
      %v2754 = vrot.slane %v2671, 6
      %v2755 = vsel %vm2721, %v2754, %v2753
      %v2756 = vrot.slane %v2672, 5
      %v2757 = vsel %vm2724, %v2756, %v2755
      %v2758 = vrot.slane %v2673, 4
      %v2759 = vsel %vm2727, %v2758, %v2757
      %v2760 = vrot.slane %v2674, 3
      %v2761 = vsel %vm2730, %v2760, %v2759
      %v2762 = vrot.slane %v2675, 2
      %v2763 = vsel %vm2733, %v2762, %v2761
      %v2764 = vrot.slane %v2676, 1
      %v2765 = vsel %vm2736, %v2764, %v2763
      %v2766 = vrot.slane %v2678, 7
      %v2767 = vsel %vm2718, %v2766, %v2677
      %v2768 = vrot.slane %v2679, 6
      %v2769 = vsel %vm2721, %v2768, %v2767
      %v2770 = vrot.slane %v2680, 5
      %v2771 = vsel %vm2724, %v2770, %v2769
      %v2772 = vrot.slane %v2681, 4
      %v2773 = vsel %vm2727, %v2772, %v2771
      %v2774 = vrot.slane %v2682, 3
      %v2775 = vsel %vm2730, %v2774, %v2773
      %v2776 = vrot.slane %v2683, 2
      %v2777 = vsel %vm2733, %v2776, %v2775
      %v2778 = vrot.slane %v2684, 1
      %v2779 = vsel %vm2736, %v2778, %v2777
      %v2780 = vrot.slane %v2686, 7
      %v2781 = vsel %vm2718, %v2780, %v2685
      %v2782 = vrot.slane %v2687, 6
      %v2783 = vsel %vm2721, %v2782, %v2781
      %v2784 = vrot.slane %v2688, 5
      %v2785 = vsel %vm2724, %v2784, %v2783
      %v2786 = vrot.slane %v2689, 4
      %v2787 = vsel %vm2727, %v2786, %v2785
      %v2788 = vrot.slane %v2690, 3
      %v2789 = vsel %vm2730, %v2788, %v2787
      %v2790 = vrot.slane %v2691, 2
      %v2791 = vsel %vm2733, %v2790, %v2789
      %v2792 = vrot.slane %v2692, 1
      %v2793 = vsel %vm2736, %v2792, %v2791
      %v2794 = vrot.slane %v2694, 7
      %v2795 = vsel %vm2718, %v2794, %v2693
      %v2796 = vrot.slane %v2695, 6
      %v2797 = vsel %vm2721, %v2796, %v2795
      %v2798 = vrot.slane %v2696, 5
      %v2799 = vsel %vm2724, %v2798, %v2797
      %v2800 = vrot.slane %v2697, 4
      %v2801 = vsel %vm2727, %v2800, %v2799
      %v2802 = vrot.slane %v2698, 3
      %v2803 = vsel %vm2730, %v2802, %v2801
      %v2804 = vrot.slane %v2699, 2
      %v2805 = vsel %vm2733, %v2804, %v2803
      %v2806 = vrot.slane %v2700, 1
      %v2807 = vsel %vm2736, %v2806, %v2805
      %v2808 = vrot.slane %v2702, 7
      %v2809 = vsel %vm2718, %v2808, %v2701
      %v2810 = vrot.slane %v2703, 6
      %v2811 = vsel %vm2721, %v2810, %v2809
      %v2812 = vrot.slane %v2704, 5
      %v2813 = vsel %vm2724, %v2812, %v2811
      %v2814 = vrot.slane %v2705, 4
      %v2815 = vsel %vm2727, %v2814, %v2813
      %v2816 = vrot.slane %v2706, 3
      %v2817 = vsel %vm2730, %v2816, %v2815
      %v2818 = vrot.slane %v2707, 2
      %v2819 = vsel %vm2733, %v2818, %v2817
      %v2820 = vrot.slane %v2708, 1
      %v2821 = vsel %vm2736, %v2820, %v2819
      %v2822 = vrot.slane %v2710, 7
      %v2823 = vsel %vm2718, %v2822, %v2709
      %v2824 = vrot.slane %v2711, 6
      %v2825 = vsel %vm2721, %v2824, %v2823
      %v2826 = vrot.slane %v2712, 5
      %v2827 = vsel %vm2724, %v2826, %v2825
      %v2828 = vrot.slane %v2713, 4
      %v2829 = vsel %vm2727, %v2828, %v2827
      %v2830 = vrot.slane %v2714, 3
      %v2831 = vsel %vm2730, %v2830, %v2829
      %v2832 = vrot.slane %v2715, 2
      %v2833 = vsel %vm2733, %v2832, %v2831
      %v2834 = vrot.slane %v2716, 1
      %v2835 = vsel %vm2736, %v2834, %v2833
      %v2836 = vpack.c.b16 %v2737, %v2737
      %v2837 = vpack.c.b16 %v2751, %v2751
      %v2838 = vpack.c.b16 %v2765, %v2765
      %v2839 = vpack.c.b16 %v2779, %v2779
      %v2840 = vpack.c.b16 %v2793, %v2793
      %v2841 = vpack.c.b16 %v2807, %v2807
      %v2842 = vpack.c.b16 %v2821, %v2821
      %v2843 = vpack.c.b16 %v2835, %v2835
      %vm2852 = vcmask 257024
      %2853 = vst.msk [vmem:[%s170] sm:$0xf] %vm2852, %v2836
      %2854 = vst.msk [vmem:[%s170 + $0x4] sm:$0xf] %vm2852, %v2837
      %2855 = vst.msk [vmem:[%s170 + $0x8] sm:$0xf] %vm2852, %v2838
      %2856 = vst.msk [vmem:[%s170 + $0xc] sm:$0xf] %vm2852, %v2839
      %2857 = vst.msk [vmem:[%s170 + $0x10] sm:$0xf] %vm2852, %v2840
      %2858 = vst.msk [vmem:[%s170 + $0x14] sm:$0xf] %vm2852, %v2841
      %2859 = vst.msk [vmem:[%s170 + $0x18] sm:$0xf] %vm2852, %v2842
      %2860 = vst.msk [vmem:[%s170 + $0x1c] sm:$0xf] %vm2852, %v2843
      %p2861 = scmp.lt.s32.totalorder %s14, 1
      %s2862 = scalar_select %p2861, %s14, 1
      %s2863 = smul.addr %s2862, 8
      %s2864 = smul.addr %s2863, 4
      %s2865 = scalar_lea.vmem %s3, %s2864
      // Predicated region
      $region33: #{network_forward.3} parent=31 // pred_check
        %p2866 = pneg %p100
      $region34: #{network_forward.3} parent=31 // pred_check_branch
        %2868 = sbr.rel (%p2866) target = $region36
      $region35: #{network_forward.3} parent=31 // pred_region
        _
      $region36: #{network_forward.3} parent=31 // pred_fallthru
        _
    $region32: #{network_forward.3} parent=5 // pred_fallthru
      _
    %p2869 = scmp.le.s32.totalorder 2, %s9
    // Predicated region
    $region37: #{network_forward.3} parent=5 // pred_check
      %p2870 = pneg %p2869
    $region38: #{network_forward.3} parent=5 // pred_check_branch
      %2872 = sbr.rel (%p2870) target = $region40
    $region39: #{network_forward.3} parent=5 // pred_region
      %s2873 = ssub.s32 %s9, 2
      // Predicated region
      $region41: #{network_forward.3} parent=39 // pred_check
        %p2874 = pneg %p106
      $region42: #{network_forward.3} parent=39 // pred_check_branch
        %2876 = sbr.rel (%p2874) target = $region44
      $region43: #{network_forward.3} parent=39 // pred_region
        %p2877 = scmp.lt.s32.totalorder %s15, 1
        %s2878 = scalar_select %p2877, %s15, 1
        %s2879 = smul.addr %s2878, 8
        %s2880 = smul.addr %s2879, 4
        %s2881 = scalar_lea.vmem %s3, %s2880
      $region44: #{network_forward.3} parent=39 // pred_fallthru
        _
    $region40: #{network_forward.3} parent=5 // pred_fallthru
      _
  $region6: #{network_forward.3} parent=0 // loop_footer
    %s13 = sadd.s32 1, %s9
  $region7: #{network_forward.3} parent=0 // loop_footer_branch
    %8 = sbr.rel target = $region3
  $region8: #{network_forward.3} parent=0 // loop_exit
    _

// kernel: network_forward.5
$region0: #{network_forward.5}
  #allocation0 [shape = 'u32[]', space=smem, size = 0x4, offset = 0x4, fixed_abs, tag = 'smem constant byte address 0x4 - core index']
  #allocation1 [shape = 'u32[144,128]{1,0:T(1,128)}', space=vmem, size = 0x12000, scoped, tag = 'internal scratch']
  %s0 = inlined_call_operand.vmem [shape: bf16[2,1024], index: 0, kind: input, shape index: {}]
  %s1 = inlined_call_operand.vmem [shape: bf16[1024,256], index: 1, kind: input, shape index: {}]
  %s2 = inlined_call_operand.vmem [shape: f32[1,256], index: 2, kind: input, shape index: {}]
  %s3 = inlined_call_operand.vmem [shape: bf16[256,10], index: 3, kind: input, shape index: {}]
  %s4 = inlined_call_operand.vmem [shape: f32[1,10], index: 4, kind: input, shape index: {}]
  %s5 = inlined_call_operand.hbm [shape: f32[2,10], index: 5, kind: output, shape index: {0}]
  %s6 = inlined_call_operand.hbm [shape: f32[2,10], index: 6, kind: output, shape index: {1}]
  %7 = xla_tuple %s5, %s6
  %s8 = sld [smem:[#allocation0]]
  $region38: #{network_forward.5} parent=0
    _
  %s10 = ssub.s32 1, %s8
  %s11 = scalar_select 0, %s10, %s8
  $region1: #{network_forward.5} parent=0
    #allocation2 [shape = 'u8[1024]{0}', space=vmem, size = 0x400, scoped, tag = 'output window, operand 0, single buffered']
    #allocation3 [shape = 's32[1]{0}', space=sflag, size = 0x4, scoped, tag = 'scoped memory for network_forward.5']
    #allocation4 [shape = 'u8[1024]{0}', space=vmem, size = 0x400, scoped, tag = 'output window, operand 1, single buffered']
    #allocation5 [shape = 's32[1]{0}', space=sflag, size = 0x4, scoped, tag = 'scoped memory for network_forward.5']
    %12 = vsyncpa [#allocation3], 0
    %13 = vsyncpa [#allocation5], 0
    // Predicated region
    $region2: #{network_forward.5} parent=1 // pred_check
      _
    $region3: #{network_forward.5} parent=1 // pred_check_branch
      %15 = sbr.rel (0) target = $region5
    $region4: #{network_forward.5} parent=1 // pred_region
      _
    $region5: #{network_forward.5} parent=1 // pred_fallthru
      _
    // Predicated region
    $region6: #{network_forward.5} parent=1 // pred_check
      _
    $region7: #{network_forward.5} parent=1 // pred_check_branch
      %17 = sbr.rel (0) target = $region9
    $region8: #{network_forward.5} parent=1 // pred_region
      _
    $region9: #{network_forward.5} parent=1 // pred_fallthru
      _
    // Predicated region
    $region10: #{network_forward.5} parent=1 // pred_check
      _
    $region11: #{network_forward.5} parent=1 // pred_check_branch
      %19 = sbr.rel (0) target = $region13
    $region12: #{network_forward.5} parent=1 // pred_region
      _
    $region13: #{network_forward.5} parent=1 // pred_fallthru
      _
    // Predicated region
    $region14: #{network_forward.5} parent=1 // pred_check
      _
    $region15: #{network_forward.5} parent=1 // pred_check_branch
      %21 = sbr.rel (0) target = $region17
    $region16: #{network_forward.5} parent=1 // pred_region
      _
    $region17: #{network_forward.5} parent=1 // pred_fallthru
      _
    // Predicated region
    $region18: #{network_forward.5} parent=1 // pred_check
      _
    $region19: #{network_forward.5} parent=1 // pred_check_branch
      %23 = sbr.rel (0) target = $region21
    $region20: #{network_forward.5} parent=1 // pred_region
      _
    $region21: #{network_forward.5} parent=1 // pred_fallthru
      _
    %v25 = vld [vmem:[%s0] sm:$0xff]
    %v26 = vld [vmem:[%s1] sm:$0xff]
    %v27 = vld [vmem:[%s1 + $0x8] sm:$0xff]
    %v28 = vld [vmem:[%s1 + $0x10] sm:$0xff]
    %v29 = vld [vmem:[%s1 + $0x18] sm:$0xff]
    %v30 = vld [vmem:[%s1 + $0x20] sm:$0xff]
    %v31 = vld [vmem:[%s1 + $0x28] sm:$0xff]
    %v32 = vld [vmem:[%s1 + $0x30] sm:$0xff]
    %v33 = vld [vmem:[%s1 + $0x38] sm:$0xff]
    %v34 = vld [vmem:[%s1 + $0x40] sm:$0xff]
    %v35 = vld [vmem:[%s1 + $0x48] sm:$0xff]
    %v36 = vld [vmem:[%s1 + $0x50] sm:$0xff]
    %v37 = vld [vmem:[%s1 + $0x58] sm:$0xff]
    %v38 = vld [vmem:[%s1 + $0x60] sm:$0xff]
    %v39 = vld [vmem:[%s1 + $0x68] sm:$0xff]
    %v40 = vld [vmem:[%s1 + $0x70] sm:$0xff]
    %v41 = vld [vmem:[%s1 + $0x78] sm:$0xff]
    %v42 = vld [vmem:[%s1 + $0x80] sm:$0xff]
    %v43 = vld [vmem:[%s1 + $0x88] sm:$0xff]
    %v44 = vld [vmem:[%s1 + $0x90] sm:$0xff]
    %v45 = vld [vmem:[%s1 + $0x98] sm:$0xff]
    %v46 = vld [vmem:[%s1 + $0xa0] sm:$0xff]
    %v47 = vld [vmem:[%s1 + $0xa8] sm:$0xff]
    %v48 = vld [vmem:[%s1 + $0xb0] sm:$0xff]
    %v49 = vld [vmem:[%s1 + $0xb8] sm:$0xff]
    %v50 = vld [vmem:[%s1 + $0xc0] sm:$0xff]
    %v51 = vld [vmem:[%s1 + $0xc8] sm:$0xff]
    %v52 = vld [vmem:[%s1 + $0xd0] sm:$0xff]
    %v53 = vld [vmem:[%s1 + $0xd8] sm:$0xff]
    %v54 = vld [vmem:[%s1 + $0xe0] sm:$0xff]
    %v55 = vld [vmem:[%s1 + $0xe8] sm:$0xff]
    %v56 = vld [vmem:[%s1 + $0xf0] sm:$0xff]
    %v57 = vld [vmem:[%s1 + $0xf8] sm:$0xff]
    %v58 = vld [vmem:[%s1 + $0x100] sm:$0xff]
    %v59 = vld [vmem:[%s1 + $0x108] sm:$0xff]
    %v60 = vld [vmem:[%s1 + $0x110] sm:$0xff]
    %v61 = vld [vmem:[%s1 + $0x118] sm:$0xff]
    %v62 = vld [vmem:[%s1 + $0x120] sm:$0xff]
    %v63 = vld [vmem:[%s1 + $0x128] sm:$0xff]
    %v64 = vld [vmem:[%s1 + $0x130] sm:$0xff]
    %v65 = vld [vmem:[%s1 + $0x138] sm:$0xff]
    %v66 = vld [vmem:[%s1 + $0x140] sm:$0xff]
    %v67 = vld [vmem:[%s1 + $0x148] sm:$0xff]
    %v68 = vld [vmem:[%s1 + $0x150] sm:$0xff]
    %v69 = vld [vmem:[%s1 + $0x158] sm:$0xff]
    %v70 = vld [vmem:[%s1 + $0x160] sm:$0xff]
    %v71 = vld [vmem:[%s1 + $0x168] sm:$0xff]
    %v72 = vld [vmem:[%s1 + $0x170] sm:$0xff]
    %v73 = vld [vmem:[%s1 + $0x178] sm:$0xff]
    %v74 = vld [vmem:[%s1 + $0x180] sm:$0xff]
    %v75 = vld [vmem:[%s1 + $0x188] sm:$0xff]
    %v76 = vld [vmem:[%s1 + $0x190] sm:$0xff]
    %v77 = vld [vmem:[%s1 + $0x198] sm:$0xff]
    %v78 = vld [vmem:[%s1 + $0x1a0] sm:$0xff]
    %v79 = vld [vmem:[%s1 + $0x1a8] sm:$0xff]
    %v80 = vld [vmem:[%s1 + $0x1b0] sm:$0xff]
    %v81 = vld [vmem:[%s1 + $0x1b8] sm:$0xff]
    %v82 = vld [vmem:[%s1 + $0x1c0] sm:$0xff]
    %v83 = vld [vmem:[%s1 + $0x1c8] sm:$0xff]
    %v84 = vld [vmem:[%s1 + $0x1d0] sm:$0xff]
    %v85 = vld [vmem:[%s1 + $0x1d8] sm:$0xff]
    %v86 = vld [vmem:[%s1 + $0x1e0] sm:$0xff]
    %v87 = vld [vmem:[%s1 + $0x1e8] sm:$0xff]
    %v88 = vld [vmem:[%s1 + $0x1f0] sm:$0xff]
    %v89 = vld [vmem:[%s1 + $0x1f8] sm:$0xff]
    %v90 = vld [vmem:[%s1 + $0x200] sm:$0xff]
    %v91 = vld [vmem:[%s1 + $0x208] sm:$0xff]
    %v92 = vld [vmem:[%s1 + $0x210] sm:$0xff]
    %v93 = vld [vmem:[%s1 + $0x218] sm:$0xff]
    %v94 = vld [vmem:[%s1 + $0x220] sm:$0xff]
    %v95 = vld [vmem:[%s1 + $0x228] sm:$0xff]
    %v96 = vld [vmem:[%s1 + $0x230] sm:$0xff]
    %v97 = vld [vmem:[%s1 + $0x238] sm:$0xff]
    %v98 = vld [vmem:[%s1 + $0x240] sm:$0xff]
    %v99 = vld [vmem:[%s1 + $0x248] sm:$0xff]
    %v100 = vld [vmem:[%s1 + $0x250] sm:$0xff]
    %v101 = vld [vmem:[%s1 + $0x258] sm:$0xff]
    %v102 = vld [vmem:[%s1 + $0x260] sm:$0xff]
    %v103 = vld [vmem:[%s1 + $0x268] sm:$0xff]
    %v104 = vld [vmem:[%s1 + $0x270] sm:$0xff]
    %v105 = vld [vmem:[%s1 + $0x278] sm:$0xff]
    %v106 = vld [vmem:[%s1 + $0x280] sm:$0xff]
    %v107 = vld [vmem:[%s1 + $0x288] sm:$0xff]
    %v108 = vld [vmem:[%s1 + $0x290] sm:$0xff]
    %v109 = vld [vmem:[%s1 + $0x298] sm:$0xff]
    %v110 = vld [vmem:[%s1 + $0x2a0] sm:$0xff]
    %v111 = vld [vmem:[%s1 + $0x2a8] sm:$0xff]
    %v112 = vld [vmem:[%s1 + $0x2b0] sm:$0xff]
    %v113 = vld [vmem:[%s1 + $0x2b8] sm:$0xff]
    %v114 = vld [vmem:[%s1 + $0x2c0] sm:$0xff]
    %v115 = vld [vmem:[%s1 + $0x2c8] sm:$0xff]
    %v116 = vld [vmem:[%s1 + $0x2d0] sm:$0xff]
    %v117 = vld [vmem:[%s1 + $0x2d8] sm:$0xff]
    %v118 = vld [vmem:[%s1 + $0x2e0] sm:$0xff]
    %v119 = vld [vmem:[%s1 + $0x2e8] sm:$0xff]
    %v120 = vld [vmem:[%s1 + $0x2f0] sm:$0xff]
    %v121 = vld [vmem:[%s1 + $0x2f8] sm:$0xff]
    %v122 = vld [vmem:[%s1 + $0x300] sm:$0xff]
    %v123 = vld [vmem:[%s1 + $0x308] sm:$0xff]
    %v124 = vld [vmem:[%s1 + $0x310] sm:$0xff]
    %v125 = vld [vmem:[%s1 + $0x318] sm:$0xff]
    %v126 = vld [vmem:[%s1 + $0x320] sm:$0xff]
    %v127 = vld [vmem:[%s1 + $0x328] sm:$0xff]
    %v128 = vld [vmem:[%s1 + $0x330] sm:$0xff]
    %v129 = vld [vmem:[%s1 + $0x338] sm:$0xff]
    %v130 = vld [vmem:[%s1 + $0x340] sm:$0xff]
    %v131 = vld [vmem:[%s1 + $0x348] sm:$0xff]
    %v132 = vld [vmem:[%s1 + $0x350] sm:$0xff]
    %v133 = vld [vmem:[%s1 + $0x358] sm:$0xff]
    %v134 = vld [vmem:[%s1 + $0x360] sm:$0xff]
    %v135 = vld [vmem:[%s1 + $0x368] sm:$0xff]
    %v136 = vld [vmem:[%s1 + $0x370] sm:$0xff]
    %v137 = vld [vmem:[%s1 + $0x378] sm:$0xff]
    %v138 = vld [vmem:[%s1 + $0x380] sm:$0xff]
    %v139 = vld [vmem:[%s1 + $0x388] sm:$0xff]
    %v140 = vld [vmem:[%s1 + $0x390] sm:$0xff]
    %v141 = vld [vmem:[%s1 + $0x398] sm:$0xff]
    %v142 = vld [vmem:[%s1 + $0x3a0] sm:$0xff]
    %v143 = vld [vmem:[%s1 + $0x3a8] sm:$0xff]
    %v144 = vld [vmem:[%s1 + $0x3b0] sm:$0xff]
    %v145 = vld [vmem:[%s1 + $0x3b8] sm:$0xff]
    %v146 = vld [vmem:[%s1 + $0x3c0] sm:$0xff]
    %v147 = vld [vmem:[%s1 + $0x3c8] sm:$0xff]
    %v148 = vld [vmem:[%s1 + $0x3d0] sm:$0xff]
    %v149 = vld [vmem:[%s1 + $0x3d8] sm:$0xff]
    %v150 = vld [vmem:[%s1 + $0x3e0] sm:$0xff]
    %v151 = vld [vmem:[%s1 + $0x3e8] sm:$0xff]
    %v152 = vld [vmem:[%s1 + $0x3f0] sm:$0xff]
    %v153 = vld [vmem:[%s1 + $0x3f8] sm:$0xff]
    %v154 = vld [vmem:[%s2] sm:$0x3]
    %v156 = vlaneseq
    %v157 = vshrl.u32 %v156, 7
    %v158 = vsub.s32 0, %v157
    %v159 = vrot.slane %v154, %v158
    %v160 = vlaneseq
    %v161 = vshrl.u32 %v160, 7
    %v162 = vsub.s32 1, %v161
    %v163 = vrot.slane %v154, %v162
    %v167 = vcombine.high %v25, %v25
    %v169 = vunpack.c.l.s4 1966171168
    %v170 = vunpack.c.0.s8 %v169
    %v171 = vlaneseq
    %v172 = vshrl.u32 %v171, 7
    %v173 = vsub.s32 %v170, %v172
    %v174 = vrot.slane %v25, %v173
    %v176 = vunpack.c.l.s4 1966171168
    %v177 = vunpack.c.0.s8 %v176
    %v178 = vlaneseq
    %v179 = vshrl.u32 %v178, 7
    %v180 = vsub.s32 %v177, %v179
    %v181 = vrot.slane %v167, %v180
    %v182 = vcombine.high %v174, %v174
    %v183 = vcombine.high %v181, %v181
    %v185 = vunpack.c.l.s4 1966171168
    %v186 = vunpack.c.0.s8 %v185
    %v187 = vlaneseq
    %v188 = vshrl.u32 %v187, 7
    %v189 = vsub.s32 %v186, %v188
    %v190 = vrot.slane %v174, %v189
    %v192 = vunpack.c.l.s4 1966171168
    %v193 = vunpack.c.0.s8 %v192
    %v194 = vlaneseq
    %v195 = vshrl.u32 %v194, 7
    %v196 = vsub.s32 %v193, %v195
    %v197 = vrot.slane %v181, %v196
    %v199 = vunpack.c.l.s4 1966171168
    %v200 = vunpack.c.0.s8 %v199
    %v201 = vlaneseq
    %v202 = vshrl.u32 %v201, 7
    %v203 = vsub.s32 %v200, %v202
    %v204 = vrot.slane %v182, %v203
    %v206 = vunpack.c.l.s4 1966171168
    %v207 = vunpack.c.0.s8 %v206
    %v208 = vlaneseq
    %v209 = vshrl.u32 %v208, 7
    %v210 = vsub.s32 %v207, %v209
    %v211 = vrot.slane %v183, %v210
    %v212 = vcombine.high %v190, %v190
    %v213 = vcombine.high %v197, %v197
    %v214 = vcombine.high %v204, %v204
    %v215 = vcombine.high %v211, %v211
    %v352 = vunpack.c.l.b16 %v26
    %v353 = vunpack.c.h.b16 %v26
    %v354 = vunpack.c.l.b16 %v27
    %v355 = vunpack.c.h.b16 %v27
    %v356 = vunpack.c.l.b16 %v28
    %v357 = vunpack.c.h.b16 %v28
    %v358 = vunpack.c.l.b16 %v29
    %v359 = vunpack.c.h.b16 %v29
    %v360 = vunpack.c.l.b16 %v30
    %v361 = vunpack.c.h.b16 %v30
    %v362 = vunpack.c.l.b16 %v31
    %v363 = vunpack.c.h.b16 %v31
    %v364 = vunpack.c.l.b16 %v32
    %v365 = vunpack.c.h.b16 %v32
    %v366 = vunpack.c.l.b16 %v33
    %v367 = vunpack.c.h.b16 %v33
    %v368 = vunpack.c.l.b16 %v34
    %v369 = vunpack.c.h.b16 %v34
    %v370 = vunpack.c.l.b16 %v35
    %v371 = vunpack.c.h.b16 %v35
    %v372 = vunpack.c.l.b16 %v36
    %v373 = vunpack.c.h.b16 %v36
    %v374 = vunpack.c.l.b16 %v37
    %v375 = vunpack.c.h.b16 %v37
    %v376 = vunpack.c.l.b16 %v38
    %v377 = vunpack.c.h.b16 %v38
    %v378 = vunpack.c.l.b16 %v39
    %v379 = vunpack.c.h.b16 %v39
    %v380 = vunpack.c.l.b16 %v40
    %v381 = vunpack.c.h.b16 %v40
    %v382 = vunpack.c.l.b16 %v41
    %v383 = vunpack.c.h.b16 %v41
    %v384 = vunpack.c.l.b16 %v42
    %v385 = vunpack.c.h.b16 %v42
    %v386 = vunpack.c.l.b16 %v43
    %v387 = vunpack.c.h.b16 %v43
    %v388 = vunpack.c.l.b16 %v44
    %v389 = vunpack.c.h.b16 %v44
    %v390 = vunpack.c.l.b16 %v45
    %v391 = vunpack.c.h.b16 %v45
    %v392 = vunpack.c.l.b16 %v46
    %v393 = vunpack.c.h.b16 %v46
    %v394 = vunpack.c.l.b16 %v47
    %v395 = vunpack.c.h.b16 %v47
    %v396 = vunpack.c.l.b16 %v48
    %v397 = vunpack.c.h.b16 %v48
    %v398 = vunpack.c.l.b16 %v49
    %v399 = vunpack.c.h.b16 %v49
    %v400 = vunpack.c.l.b16 %v50
    %v401 = vunpack.c.h.b16 %v50
    %v402 = vunpack.c.l.b16 %v51
    %v403 = vunpack.c.h.b16 %v51
    %v404 = vunpack.c.l.b16 %v52
    %v405 = vunpack.c.h.b16 %v52
    %v406 = vunpack.c.l.b16 %v53
    %v407 = vunpack.c.h.b16 %v53
    %v408 = vunpack.c.l.b16 %v54
    %v409 = vunpack.c.h.b16 %v54
    %v410 = vunpack.c.l.b16 %v55
    %v411 = vunpack.c.h.b16 %v55
    %v412 = vunpack.c.l.b16 %v56
    %v413 = vunpack.c.h.b16 %v56
    %v414 = vunpack.c.l.b16 %v57
    %v415 = vunpack.c.h.b16 %v57
    %v416 = vunpack.c.l.b16 %v58
    %v417 = vunpack.c.h.b16 %v58
    %v418 = vunpack.c.l.b16 %v59
    %v419 = vunpack.c.h.b16 %v59
    %v420 = vunpack.c.l.b16 %v60
    %v421 = vunpack.c.h.b16 %v60
    %v422 = vunpack.c.l.b16 %v61
    %v423 = vunpack.c.h.b16 %v61
    %v424 = vunpack.c.l.b16 %v62
    %v425 = vunpack.c.h.b16 %v62
    %v426 = vunpack.c.l.b16 %v63
    %v427 = vunpack.c.h.b16 %v63
    %v428 = vunpack.c.l.b16 %v64
    %v429 = vunpack.c.h.b16 %v64
    %v430 = vunpack.c.l.b16 %v65
    %v431 = vunpack.c.h.b16 %v65
    %v432 = vunpack.c.l.b16 %v66
    %v433 = vunpack.c.h.b16 %v66
    %v434 = vunpack.c.l.b16 %v67
    %v435 = vunpack.c.h.b16 %v67
    %v436 = vunpack.c.l.b16 %v68
    %v437 = vunpack.c.h.b16 %v68
    %v438 = vunpack.c.l.b16 %v69
    %v439 = vunpack.c.h.b16 %v69
    %v440 = vunpack.c.l.b16 %v70
    %v441 = vunpack.c.h.b16 %v70
    %v442 = vunpack.c.l.b16 %v71
    %v443 = vunpack.c.h.b16 %v71
    %v444 = vunpack.c.l.b16 %v72
    %v445 = vunpack.c.h.b16 %v72
    %v446 = vunpack.c.l.b16 %v73
    %v447 = vunpack.c.h.b16 %v73
    %v448 = vunpack.c.l.b16 %v74
    %v449 = vunpack.c.h.b16 %v74
    %v450 = vunpack.c.l.b16 %v75
    %v451 = vunpack.c.h.b16 %v75
    %v452 = vunpack.c.l.b16 %v76
    %v453 = vunpack.c.h.b16 %v76
    %v454 = vunpack.c.l.b16 %v77
    %v455 = vunpack.c.h.b16 %v77
    %v456 = vunpack.c.l.b16 %v78
    %v457 = vunpack.c.h.b16 %v78
    %v458 = vunpack.c.l.b16 %v79
    %v459 = vunpack.c.h.b16 %v79
    %v460 = vunpack.c.l.b16 %v80
    %v461 = vunpack.c.h.b16 %v80
    %v462 = vunpack.c.l.b16 %v81
    %v463 = vunpack.c.h.b16 %v81
    %v464 = vunpack.c.l.b16 %v82
    %v465 = vunpack.c.h.b16 %v82
    %v466 = vunpack.c.l.b16 %v83
    %v467 = vunpack.c.h.b16 %v83
    %v468 = vunpack.c.l.b16 %v84
    %v469 = vunpack.c.h.b16 %v84
    %v470 = vunpack.c.l.b16 %v85
    %v471 = vunpack.c.h.b16 %v85
    %v472 = vunpack.c.l.b16 %v86
    %v473 = vunpack.c.h.b16 %v86
    %v474 = vunpack.c.l.b16 %v87
    %v475 = vunpack.c.h.b16 %v87
    %v476 = vunpack.c.l.b16 %v88
    %v477 = vunpack.c.h.b16 %v88
    %v478 = vunpack.c.l.b16 %v89
    %v479 = vunpack.c.h.b16 %v89
    %v480 = vunpack.c.l.b16 %v90
    %v481 = vunpack.c.h.b16 %v90
    %v482 = vunpack.c.l.b16 %v91
    %v483 = vunpack.c.h.b16 %v91
    %v484 = vunpack.c.l.b16 %v92
    %v485 = vunpack.c.h.b16 %v92
    %v486 = vunpack.c.l.b16 %v93
    %v487 = vunpack.c.h.b16 %v93
    %v488 = vunpack.c.l.b16 %v94
    %v489 = vunpack.c.h.b16 %v94
    %v490 = vunpack.c.l.b16 %v95
    %v491 = vunpack.c.h.b16 %v95
    %v492 = vunpack.c.l.b16 %v96
    %v493 = vunpack.c.h.b16 %v96
    %v494 = vunpack.c.l.b16 %v97
    %v495 = vunpack.c.h.b16 %v97
    %v496 = vunpack.c.l.b16 %v98
    %v497 = vunpack.c.h.b16 %v98
    %v498 = vunpack.c.l.b16 %v99
    %v499 = vunpack.c.h.b16 %v99
    %v500 = vunpack.c.l.b16 %v100
    %v501 = vunpack.c.h.b16 %v100
    %v502 = vunpack.c.l.b16 %v101
    %v503 = vunpack.c.h.b16 %v101
    %v504 = vunpack.c.l.b16 %v102
    %v505 = vunpack.c.h.b16 %v102
    %v506 = vunpack.c.l.b16 %v103
    %v507 = vunpack.c.h.b16 %v103
    %v508 = vunpack.c.l.b16 %v104
    %v509 = vunpack.c.h.b16 %v104
    %v510 = vunpack.c.l.b16 %v105
    %v511 = vunpack.c.h.b16 %v105
    %v512 = vunpack.c.l.b16 %v106
    %v513 = vunpack.c.h.b16 %v106
    %v514 = vunpack.c.l.b16 %v107
    %v515 = vunpack.c.h.b16 %v107
    %v516 = vunpack.c.l.b16 %v108
    %v517 = vunpack.c.h.b16 %v108
    %v518 = vunpack.c.l.b16 %v109
    %v519 = vunpack.c.h.b16 %v109
    %v520 = vunpack.c.l.b16 %v110
    %v521 = vunpack.c.h.b16 %v110
    %v522 = vunpack.c.l.b16 %v111
    %v523 = vunpack.c.h.b16 %v111
    %v524 = vunpack.c.l.b16 %v112
    %v525 = vunpack.c.h.b16 %v112
    %v526 = vunpack.c.l.b16 %v113
    %v527 = vunpack.c.h.b16 %v113
    %v528 = vunpack.c.l.b16 %v114
    %v529 = vunpack.c.h.b16 %v114
    %v530 = vunpack.c.l.b16 %v115
    %v531 = vunpack.c.h.b16 %v115
    %v532 = vunpack.c.l.b16 %v116
    %v533 = vunpack.c.h.b16 %v116
    %v534 = vunpack.c.l.b16 %v117
    %v535 = vunpack.c.h.b16 %v117
    %v536 = vunpack.c.l.b16 %v118
    %v537 = vunpack.c.h.b16 %v118
    %v538 = vunpack.c.l.b16 %v119
    %v539 = vunpack.c.h.b16 %v119
    %v540 = vunpack.c.l.b16 %v120
    %v541 = vunpack.c.h.b16 %v120
    %v542 = vunpack.c.l.b16 %v121
    %v543 = vunpack.c.h.b16 %v121
    %v544 = vunpack.c.l.b16 %v122
    %v545 = vunpack.c.h.b16 %v122
    %v546 = vunpack.c.l.b16 %v123
    %v547 = vunpack.c.h.b16 %v123
    %v548 = vunpack.c.l.b16 %v124
    %v549 = vunpack.c.h.b16 %v124
    %v550 = vunpack.c.l.b16 %v125
    %v551 = vunpack.c.h.b16 %v125
    %v552 = vunpack.c.l.b16 %v126
    %v553 = vunpack.c.h.b16 %v126
    %v554 = vunpack.c.l.b16 %v127
    %v555 = vunpack.c.h.b16 %v127
    %v556 = vunpack.c.l.b16 %v128
    %v557 = vunpack.c.h.b16 %v128
    %v558 = vunpack.c.l.b16 %v129
    %v559 = vunpack.c.h.b16 %v129
    %v560 = vunpack.c.l.b16 %v130
    %v561 = vunpack.c.h.b16 %v130
    %v562 = vunpack.c.l.b16 %v131
    %v563 = vunpack.c.h.b16 %v131
    %v564 = vunpack.c.l.b16 %v132
    %v565 = vunpack.c.h.b16 %v132
    %v566 = vunpack.c.l.b16 %v133
    %v567 = vunpack.c.h.b16 %v133
    %v568 = vunpack.c.l.b16 %v134
    %v569 = vunpack.c.h.b16 %v134
    %v570 = vunpack.c.l.b16 %v135
    %v571 = vunpack.c.h.b16 %v135
    %v572 = vunpack.c.l.b16 %v136
    %v573 = vunpack.c.h.b16 %v136
    %v574 = vunpack.c.l.b16 %v137
    %v575 = vunpack.c.h.b16 %v137
    %v576 = vunpack.c.l.b16 %v138
    %v577 = vunpack.c.h.b16 %v138
    %v578 = vunpack.c.l.b16 %v139
    %v579 = vunpack.c.h.b16 %v139
    %v580 = vunpack.c.l.b16 %v140
    %v581 = vunpack.c.h.b16 %v140
    %v582 = vunpack.c.l.b16 %v141
    %v583 = vunpack.c.h.b16 %v141
    %v584 = vunpack.c.l.b16 %v142
    %v585 = vunpack.c.h.b16 %v142
    %v586 = vunpack.c.l.b16 %v143
    %v587 = vunpack.c.h.b16 %v143
    %v588 = vunpack.c.l.b16 %v144
    %v589 = vunpack.c.h.b16 %v144
    %v590 = vunpack.c.l.b16 %v145
    %v591 = vunpack.c.h.b16 %v145
    %v592 = vunpack.c.l.b16 %v146
    %v593 = vunpack.c.h.b16 %v146
    %v594 = vunpack.c.l.b16 %v147
    %v595 = vunpack.c.h.b16 %v147
    %v596 = vunpack.c.l.b16 %v148
    %v597 = vunpack.c.h.b16 %v148
    %v598 = vunpack.c.l.b16 %v149
    %v599 = vunpack.c.h.b16 %v149
    %v600 = vunpack.c.l.b16 %v150
    %v601 = vunpack.c.h.b16 %v150
    %v602 = vunpack.c.l.b16 %v151
    %v603 = vunpack.c.h.b16 %v151
    %v604 = vunpack.c.l.b16 %v152
    %v605 = vunpack.c.h.b16 %v152
    %v606 = vunpack.c.l.b16 %v153
    %v607 = vunpack.c.h.b16 %v153
    %v608 = vpack.c.b16 %v354, %v352
    %v609 = vpack.c.b16 %v355, %v353
    %v610 = vpack.c.b16 %v358, %v356
    %v611 = vpack.c.b16 %v359, %v357
    %v612 = vpack.c.b16 %v362, %v360
    %v613 = vpack.c.b16 %v363, %v361
    %v614 = vpack.c.b16 %v366, %v364
    %v615 = vpack.c.b16 %v367, %v365
    %v616 = vpack.c.b16 %v370, %v368
    %v617 = vpack.c.b16 %v371, %v369
    %v618 = vpack.c.b16 %v374, %v372
    %v619 = vpack.c.b16 %v375, %v373
    %v620 = vpack.c.b16 %v378, %v376
    %v621 = vpack.c.b16 %v379, %v377
    %v622 = vpack.c.b16 %v382, %v380
    %v623 = vpack.c.b16 %v383, %v381
    %v624 = vpack.c.b16 %v386, %v384
    %v625 = vpack.c.b16 %v387, %v385
    %v626 = vpack.c.b16 %v390, %v388
    %v627 = vpack.c.b16 %v391, %v389
    %v628 = vpack.c.b16 %v394, %v392
    %v629 = vpack.c.b16 %v395, %v393
    %v630 = vpack.c.b16 %v398, %v396
    %v631 = vpack.c.b16 %v399, %v397
    %v632 = vpack.c.b16 %v402, %v400
    %v633 = vpack.c.b16 %v403, %v401
    %v634 = vpack.c.b16 %v406, %v404
    %v635 = vpack.c.b16 %v407, %v405
    %v636 = vpack.c.b16 %v410, %v408
    %v637 = vpack.c.b16 %v411, %v409
    %v638 = vpack.c.b16 %v414, %v412
    %v639 = vpack.c.b16 %v415, %v413
    %v640 = vpack.c.b16 %v418, %v416
    %v641 = vpack.c.b16 %v419, %v417
    %v642 = vpack.c.b16 %v422, %v420
    %v643 = vpack.c.b16 %v423, %v421
    %v644 = vpack.c.b16 %v426, %v424
    %v645 = vpack.c.b16 %v427, %v425
    %v646 = vpack.c.b16 %v430, %v428
    %v647 = vpack.c.b16 %v431, %v429
    %v648 = vpack.c.b16 %v434, %v432
    %v649 = vpack.c.b16 %v435, %v433
    %v650 = vpack.c.b16 %v438, %v436
    %v651 = vpack.c.b16 %v439, %v437
    %v652 = vpack.c.b16 %v442, %v440
    %v653 = vpack.c.b16 %v443, %v441
    %v654 = vpack.c.b16 %v446, %v444
    %v655 = vpack.c.b16 %v447, %v445
    %v656 = vpack.c.b16 %v450, %v448
    %v657 = vpack.c.b16 %v451, %v449
    %v658 = vpack.c.b16 %v454, %v452
    %v659 = vpack.c.b16 %v455, %v453
    %v660 = vpack.c.b16 %v458, %v456
    %v661 = vpack.c.b16 %v459, %v457
    %v662 = vpack.c.b16 %v462, %v460
    %v663 = vpack.c.b16 %v463, %v461
    %v664 = vpack.c.b16 %v466, %v464
    %v665 = vpack.c.b16 %v467, %v465
    %v666 = vpack.c.b16 %v470, %v468
    %v667 = vpack.c.b16 %v471, %v469
    %v668 = vpack.c.b16 %v474, %v472
    %v669 = vpack.c.b16 %v475, %v473
    %v670 = vpack.c.b16 %v478, %v476
    %v671 = vpack.c.b16 %v479, %v477
    %v672 = vpack.c.b16 %v482, %v480
    %v673 = vpack.c.b16 %v483, %v481
    %v674 = vpack.c.b16 %v486, %v484
    %v675 = vpack.c.b16 %v487, %v485
    %v676 = vpack.c.b16 %v490, %v488
    %v677 = vpack.c.b16 %v491, %v489
    %v678 = vpack.c.b16 %v494, %v492
    %v679 = vpack.c.b16 %v495, %v493
    %v680 = vpack.c.b16 %v498, %v496
    %v681 = vpack.c.b16 %v499, %v497
    %v682 = vpack.c.b16 %v502, %v500
    %v683 = vpack.c.b16 %v503, %v501
    %v684 = vpack.c.b16 %v506, %v504
    %v685 = vpack.c.b16 %v507, %v505
    %v686 = vpack.c.b16 %v510, %v508
    %v687 = vpack.c.b16 %v511, %v509
    %v688 = vpack.c.b16 %v514, %v512
    %v689 = vpack.c.b16 %v515, %v513
    %v690 = vpack.c.b16 %v518, %v516
    %v691 = vpack.c.b16 %v519, %v517
    %v692 = vpack.c.b16 %v522, %v520
    %v693 = vpack.c.b16 %v523, %v521
    %v694 = vpack.c.b16 %v526, %v524
    %v695 = vpack.c.b16 %v527, %v525
    %v696 = vpack.c.b16 %v530, %v528
    %v697 = vpack.c.b16 %v531, %v529
    %v698 = vpack.c.b16 %v534, %v532
    %v699 = vpack.c.b16 %v535, %v533
    %v700 = vpack.c.b16 %v538, %v536
    %v701 = vpack.c.b16 %v539, %v537
    %v702 = vpack.c.b16 %v542, %v540
    %v703 = vpack.c.b16 %v543, %v541
    %v704 = vpack.c.b16 %v546, %v544
    %v705 = vpack.c.b16 %v547, %v545
    %v706 = vpack.c.b16 %v550, %v548
    %v707 = vpack.c.b16 %v551, %v549
    %v708 = vpack.c.b16 %v554, %v552
    %v709 = vpack.c.b16 %v555, %v553
    %v710 = vpack.c.b16 %v558, %v556
    %v711 = vpack.c.b16 %v559, %v557
    %v712 = vpack.c.b16 %v562, %v560
    %v713 = vpack.c.b16 %v563, %v561
    %v714 = vpack.c.b16 %v566, %v564
    %v715 = vpack.c.b16 %v567, %v565
    %v716 = vpack.c.b16 %v570, %v568
    %v717 = vpack.c.b16 %v571, %v569
    %v718 = vpack.c.b16 %v574, %v572
    %v719 = vpack.c.b16 %v575, %v573
    %v720 = vpack.c.b16 %v578, %v576
    %v721 = vpack.c.b16 %v579, %v577
    %v722 = vpack.c.b16 %v582, %v580
    %v723 = vpack.c.b16 %v583, %v581
    %v724 = vpack.c.b16 %v586, %v584
    %v725 = vpack.c.b16 %v587, %v585
    %v726 = vpack.c.b16 %v590, %v588
    %v727 = vpack.c.b16 %v591, %v589
    %v728 = vpack.c.b16 %v594, %v592
    %v729 = vpack.c.b16 %v595, %v593
    %v730 = vpack.c.b16 %v598, %v596
    %v731 = vpack.c.b16 %v599, %v597
    %v732 = vpack.c.b16 %v602, %v600
    %v733 = vpack.c.b16 %v603, %v601
    %v734 = vpack.c.b16 %v606, %v604
    %v735 = vpack.c.b16 %v607, %v605
    %864 = vmatprep.subr.bf16.mxu0 %v623
    %865 = vmatpush1.bf16.msra.mxu0 %v622
    %866 = vmatprep.subr.bf16.mxu0 %v621
    %867 = vmatpush1.bf16.msra.mxu0 %v620
    %868 = vmatprep.subr.bf16.mxu0 %v619
    %869 = vmatpush1.bf16.msra.mxu0 %v618
    %870 = vmatprep.subr.bf16.mxu0 %v617
    %871 = vmatpush1.bf16.msra.mxu0 %v616
    %872 = vmatprep.subr.bf16.mxu0 %v615
    %873 = vmatpush1.bf16.msra.mxu0 %v614
    %874 = vmatprep.subr.bf16.mxu0 %v613
    %875 = vmatpush1.bf16.msra.mxu0 %v612
    %876 = vmatprep.subr.bf16.mxu0 %v611
    %877 = vmatpush1.bf16.msra.mxu0 %v610
    %878 = vmatprep.subr.bf16.mxu0 %v609
    %879 = vmatpush1.bf16.msra.mxu0 %v608
    %880 = vmatprep.subr.bf16.mxu0 %v639
    %881 = vmatpush2.bf16.msra.mxu0 %v638
    %882 = vmatprep.subr.bf16.mxu0 %v637
    %883 = vmatpush2.bf16.msra.mxu0 %v636
    %884 = vmatprep.subr.bf16.mxu0 %v635
    %885 = vmatpush2.bf16.msra.mxu0 %v634
    %886 = vmatprep.subr.bf16.mxu0 %v633
    %887 = vmatpush2.bf16.msra.mxu0 %v632
    %888 = vmatprep.subr.bf16.mxu0 %v631
    %889 = vmatpush2.bf16.msra.mxu0 %v630
    %890 = vmatprep.subr.bf16.mxu0 %v629
    %891 = vmatpush2.bf16.msra.mxu0 %v628
    %892 = vmatprep.subr.bf16.mxu0 %v627
    %893 = vmatpush2.bf16.msra.mxu0 %v626
    %894 = vmatprep.subr.bf16.mxu0 %v625
    %895 = vmatpush2.bf16.msra.mxu0 %v624
    %896 = vmatprep.mubr.bf16.mxu0 %v204
    %897 = vmatmul.mubr.bf16.gmra.mxu0 %v190
    %v898 = vpop.f32.mrf.mxu0
    %v899 = vadd.f32 %v159, %v898
    %v900 = vpop.f32.mrf.mxu0
    %v901 = vadd.f32 %v163, %v900
    %v902 = vpop.f32.mrf.mxu0
    %v903 = vpop.f32.mrf.mxu0
    %904 = vdwg.mxu0
    %905 = vmatprep.subr.bf16.mxu0 %v655
    %906 = vmatpush1.bf16.msra.mxu0 %v654
    %907 = vmatprep.subr.bf16.mxu0 %v653
    %908 = vmatpush1.bf16.msra.mxu0 %v652
    %909 = vmatprep.subr.bf16.mxu0 %v651
    %910 = vmatpush1.bf16.msra.mxu0 %v650
    %911 = vmatprep.subr.bf16.mxu0 %v649
    %912 = vmatpush1.bf16.msra.mxu0 %v648
    %913 = vmatprep.subr.bf16.mxu0 %v647
    %914 = vmatpush1.bf16.msra.mxu0 %v646
    %915 = vmatprep.subr.bf16.mxu0 %v645
    %916 = vmatpush1.bf16.msra.mxu0 %v644
    %917 = vmatprep.subr.bf16.mxu0 %v643
    %918 = vmatpush1.bf16.msra.mxu0 %v642
    %919 = vmatprep.subr.bf16.mxu0 %v641
    %920 = vmatpush1.bf16.msra.mxu0 %v640
    %921 = vmatprep.subr.bf16.mxu0 %v671
    %922 = vmatpush2.bf16.msra.mxu0 %v670
    %923 = vmatprep.subr.bf16.mxu0 %v669
    %924 = vmatpush2.bf16.msra.mxu0 %v668
    %925 = vmatprep.subr.bf16.mxu0 %v667
    %926 = vmatpush2.bf16.msra.mxu0 %v666
    %927 = vmatprep.subr.bf16.mxu0 %v665
    %928 = vmatpush2.bf16.msra.mxu0 %v664
    %929 = vmatprep.subr.bf16.mxu0 %v663
    %930 = vmatpush2.bf16.msra.mxu0 %v662
    %931 = vmatprep.subr.bf16.mxu0 %v661
    %932 = vmatpush2.bf16.msra.mxu0 %v660
    %933 = vmatprep.subr.bf16.mxu0 %v659
    %934 = vmatpush2.bf16.msra.mxu0 %v658
    %935 = vmatprep.subr.bf16.mxu0 %v657
    %936 = vmatpush2.bf16.msra.mxu0 %v656
    %937 = vmatprep.mubr.bf16.mxu0 %v214
    %938 = vmatmul.mubr.bf16.gmra.mxu0 %v212
    %v939 = vpop.f32.mrf.mxu0
    %v940 = vadd.f32 %v899, %v939
    %v941 = vpop.f32.mrf.mxu0
    %v942 = vadd.f32 %v901, %v941
    %v943 = vpop.f32.mrf.mxu0
    %v944 = vpop.f32.mrf.mxu0
    %945 = vdwg.mxu0
    %946 = vmatprep.subr.bf16.mxu0 %v687
    %947 = vmatpush1.bf16.msra.mxu0 %v686
    %948 = vmatprep.subr.bf16.mxu0 %v685
    %949 = vmatpush1.bf16.msra.mxu0 %v684
    %950 = vmatprep.subr.bf16.mxu0 %v683
    %951 = vmatpush1.bf16.msra.mxu0 %v682
    %952 = vmatprep.subr.bf16.mxu0 %v681
    %953 = vmatpush1.bf16.msra.mxu0 %v680
    %954 = vmatprep.subr.bf16.mxu0 %v679
    %955 = vmatpush1.bf16.msra.mxu0 %v678
    %956 = vmatprep.subr.bf16.mxu0 %v677
    %957 = vmatpush1.bf16.msra.mxu0 %v676
    %958 = vmatprep.subr.bf16.mxu0 %v675
    %959 = vmatpush1.bf16.msra.mxu0 %v674
    %960 = vmatprep.subr.bf16.mxu0 %v673
    %961 = vmatpush1.bf16.msra.mxu0 %v672
    %962 = vmatprep.subr.bf16.mxu0 %v703
    %963 = vmatpush2.bf16.msra.mxu0 %v702
    %964 = vmatprep.subr.bf16.mxu0 %v701
    %965 = vmatpush2.bf16.msra.mxu0 %v700
    %966 = vmatprep.subr.bf16.mxu0 %v699
    %967 = vmatpush2.bf16.msra.mxu0 %v698
    %968 = vmatprep.subr.bf16.mxu0 %v697
    %969 = vmatpush2.bf16.msra.mxu0 %v696
    %970 = vmatprep.subr.bf16.mxu0 %v695
    %971 = vmatpush2.bf16.msra.mxu0 %v694
    %972 = vmatprep.subr.bf16.mxu0 %v693
    %973 = vmatpush2.bf16.msra.mxu0 %v692
    %974 = vmatprep.subr.bf16.mxu0 %v691
    %975 = vmatpush2.bf16.msra.mxu0 %v690
    %976 = vmatprep.subr.bf16.mxu0 %v689
    %977 = vmatpush2.bf16.msra.mxu0 %v688
    %978 = vmatprep.mubr.bf16.mxu0 %v211
    %979 = vmatmul.mubr.bf16.gmra.mxu0 %v197
    %v980 = vpop.f32.mrf.mxu0
    %v981 = vadd.f32 %v940, %v980
    %v982 = vpop.f32.mrf.mxu0
    %v983 = vadd.f32 %v942, %v982
    %v984 = vpop.f32.mrf.mxu0
    %v985 = vpop.f32.mrf.mxu0
    %986 = vdwg.mxu0
    %987 = vmatprep.subr.bf16.mxu0 %v719
    %988 = vmatpush1.bf16.msra.mxu0 %v718
    %989 = vmatprep.subr.bf16.mxu0 %v717
    %990 = vmatpush1.bf16.msra.mxu0 %v716
    %991 = vmatprep.subr.bf16.mxu0 %v715
    %992 = vmatpush1.bf16.msra.mxu0 %v714
    %993 = vmatprep.subr.bf16.mxu0 %v713
    %994 = vmatpush1.bf16.msra.mxu0 %v712
    %995 = vmatprep.subr.bf16.mxu0 %v711
    %996 = vmatpush1.bf16.msra.mxu0 %v710
    %997 = vmatprep.subr.bf16.mxu0 %v709
    %998 = vmatpush1.bf16.msra.mxu0 %v708
    %999 = vmatprep.subr.bf16.mxu0 %v707
    %1000 = vmatpush1.bf16.msra.mxu0 %v706
    %1001 = vmatprep.subr.bf16.mxu0 %v705
    %1002 = vmatpush1.bf16.msra.mxu0 %v704
    %1003 = vmatprep.subr.bf16.mxu0 %v735
    %1004 = vmatpush2.bf16.msra.mxu0 %v734
    %1005 = vmatprep.subr.bf16.mxu0 %v733
    %1006 = vmatpush2.bf16.msra.mxu0 %v732
    %1007 = vmatprep.subr.bf16.mxu0 %v731
    %1008 = vmatpush2.bf16.msra.mxu0 %v730
    %1009 = vmatprep.subr.bf16.mxu0 %v729
    %1010 = vmatpush2.bf16.msra.mxu0 %v728
    %1011 = vmatprep.subr.bf16.mxu0 %v727
    %1012 = vmatpush2.bf16.msra.mxu0 %v726
    %1013 = vmatprep.subr.bf16.mxu0 %v725
    %1014 = vmatpush2.bf16.msra.mxu0 %v724
    %1015 = vmatprep.subr.bf16.mxu0 %v723
    %1016 = vmatpush2.bf16.msra.mxu0 %v722
    %1017 = vmatprep.subr.bf16.mxu0 %v721
    %1018 = vmatpush2.bf16.msra.mxu0 %v720
    %1019 = vmatprep.mubr.bf16.mxu0 %v215
    %1020 = vmatmul.mubr.bf16.gmra.mxu0 %v213
    %v1021 = vpop.f32.mrf.mxu0
    %v1022 = vadd.f32 %v981, %v1021
    %v1023 = vpop.f32.mrf.mxu0
    %v1024 = vadd.f32 %v983, %v1023
    %v1025 = vpop.f32.mrf.mxu0
    %v1026 = vpop.f32.mrf.mxu0
    %1027 = vdwg.mxu0
    %v1028 = vmax.f32 %v1022, 0.0
    %v1029 = vmax.f32 %v1024, 0.0
    %v1030 = vpack.c.bf16 %v1028, %v1028
    %v1031 = vpack.c.bf16 %v1029, %v1029
    %v1032 = vld [vmem:[%s3] sm:$0xf]
    %v1033 = vld [vmem:[%s3 + $0x4] sm:$0xf]
    %v1034 = vld [vmem:[%s3 + $0x8] sm:$0xf]
    %v1035 = vld [vmem:[%s3 + $0xc] sm:$0xf]
    %v1036 = vld [vmem:[%s3 + $0x10] sm:$0xf]
    %v1037 = vld [vmem:[%s3 + $0x14] sm:$0xf]
    %v1038 = vld [vmem:[%s3 + $0x18] sm:$0xf]
    %v1039 = vld [vmem:[%s3 + $0x1c] sm:$0xf]
    %v1040 = vld [vmem:[%s3 + $0x20] sm:$0xf]
    %v1041 = vld [vmem:[%s3 + $0x24] sm:$0xf]
    %v1042 = vld [vmem:[%s3 + $0x28] sm:$0xf]
    %v1043 = vld [vmem:[%s3 + $0x2c] sm:$0xf]
    %v1044 = vld [vmem:[%s3 + $0x30] sm:$0xf]
    %v1045 = vld [vmem:[%s3 + $0x34] sm:$0xf]
    %v1046 = vld [vmem:[%s3 + $0x38] sm:$0xf]
    %v1047 = vld [vmem:[%s3 + $0x3c] sm:$0xf]
    %v1048 = vld [vmem:[%s3 + $0x40] sm:$0xf]
    %v1049 = vld [vmem:[%s3 + $0x44] sm:$0xf]
    %v1050 = vld [vmem:[%s3 + $0x48] sm:$0xf]
    %v1051 = vld [vmem:[%s3 + $0x4c] sm:$0xf]
    %v1052 = vld [vmem:[%s3 + $0x50] sm:$0xf]
    %v1053 = vld [vmem:[%s3 + $0x54] sm:$0xf]
    %v1054 = vld [vmem:[%s3 + $0x58] sm:$0xf]
    %v1055 = vld [vmem:[%s3 + $0x5c] sm:$0xf]
    %v1056 = vld [vmem:[%s3 + $0x60] sm:$0xf]
    %v1057 = vld [vmem:[%s3 + $0x64] sm:$0xf]
    %v1058 = vld [vmem:[%s3 + $0x68] sm:$0xf]
    %v1059 = vld [vmem:[%s3 + $0x6c] sm:$0xf]
    %v1060 = vld [vmem:[%s3 + $0x70] sm:$0xf]
    %v1061 = vld [vmem:[%s3 + $0x74] sm:$0xf]
    %v1062 = vld [vmem:[%s3 + $0x78] sm:$0xf]
    %v1063 = vld [vmem:[%s3 + $0x7c] sm:$0xf]
    %v1064 = vld [vmem:[%s4] sm:$0x1]
    %v1066 = vlaneseq
    %v1067 = vshrl.u32 %v1066, 7
    %v1068 = vsub.s32 0, %v1067
    %v1069 = vrot.slane %v1064, %v1068
    %v1103 = vunpack.c.l.b16 %v1032
    %v1104 = vunpack.c.l.b16 %v1033
    %v1105 = vunpack.c.l.b16 %v1034
    %v1106 = vunpack.c.l.b16 %v1035
    %v1107 = vunpack.c.l.b16 %v1036
    %v1108 = vunpack.c.l.b16 %v1037
    %v1109 = vunpack.c.l.b16 %v1038
    %v1110 = vunpack.c.l.b16 %v1039
    %v1111 = vunpack.c.l.b16 %v1040
    %v1112 = vunpack.c.l.b16 %v1041
    %v1113 = vunpack.c.l.b16 %v1042
    %v1114 = vunpack.c.l.b16 %v1043
    %v1115 = vunpack.c.l.b16 %v1044
    %v1116 = vunpack.c.l.b16 %v1045
    %v1117 = vunpack.c.l.b16 %v1046
    %v1118 = vunpack.c.l.b16 %v1047
    %v1119 = vunpack.c.l.b16 %v1048
    %v1120 = vunpack.c.l.b16 %v1049
    %v1121 = vunpack.c.l.b16 %v1050
    %v1122 = vunpack.c.l.b16 %v1051
    %v1123 = vunpack.c.l.b16 %v1052
    %v1124 = vunpack.c.l.b16 %v1053
    %v1125 = vunpack.c.l.b16 %v1054
    %v1126 = vunpack.c.l.b16 %v1055
    %v1127 = vunpack.c.l.b16 %v1056
    %v1128 = vunpack.c.l.b16 %v1057
    %v1129 = vunpack.c.l.b16 %v1058
    %v1130 = vunpack.c.l.b16 %v1059
    %v1131 = vunpack.c.l.b16 %v1060
    %v1132 = vunpack.c.l.b16 %v1061
    %v1133 = vunpack.c.l.b16 %v1062
    %v1134 = vunpack.c.l.b16 %v1063
    %v1135 = vpack.c.b16 %v1104, %v1103
    %v1136 = vpack.c.b16 %v1106, %v1105
    %v1137 = vpack.c.b16 %v1108, %v1107
    %v1138 = vpack.c.b16 %v1110, %v1109
    %v1139 = vpack.c.b16 %v1112, %v1111
    %v1140 = vpack.c.b16 %v1114, %v1113
    %v1141 = vpack.c.b16 %v1116, %v1115
    %v1142 = vpack.c.b16 %v1118, %v1117
    %v1143 = vpack.c.b16 %v1120, %v1119
    %v1144 = vpack.c.b16 %v1122, %v1121
    %v1145 = vpack.c.b16 %v1124, %v1123
    %v1146 = vpack.c.b16 %v1126, %v1125
    %v1147 = vpack.c.b16 %v1128, %v1127
    %v1148 = vpack.c.b16 %v1130, %v1129
    %v1149 = vpack.c.b16 %v1132, %v1131
    %v1150 = vpack.c.b16 %v1134, %v1133
    %1167 = vmatprep.subr.bf16.mxu0 0
    %1168 = vmatpush1.bf16.msra.mxu0 %v1142
    %1169 = vmatprep.subr.bf16.mxu0 0
    %1170 = vmatpush1.bf16.msra.mxu0 %v1141
    %1171 = vmatprep.subr.bf16.mxu0 0
    %1172 = vmatpush1.bf16.msra.mxu0 %v1140
    %1173 = vmatprep.subr.bf16.mxu0 0
    %1174 = vmatpush1.bf16.msra.mxu0 %v1139
    %1175 = vmatprep.subr.bf16.mxu0 0
    %1176 = vmatpush1.bf16.msra.mxu0 %v1138
    %1177 = vmatprep.subr.bf16.mxu0 0
    %1178 = vmatpush1.bf16.msra.mxu0 %v1137
    %1179 = vmatprep.subr.bf16.mxu0 0
    %1180 = vmatpush1.bf16.msra.mxu0 %v1136
    %1181 = vmatprep.subr.bf16.mxu0 0
    %1182 = vmatpush1.bf16.msra.mxu0 %v1135
    %1183 = vmatprep.subr.bf16.mxu0 0
    %1184 = vmatpush2.bf16.msra.mxu0 %v1150
    %1185 = vmatprep.subr.bf16.mxu0 0
    %1186 = vmatpush2.bf16.msra.mxu0 %v1149
    %1187 = vmatprep.subr.bf16.mxu0 0
    %1188 = vmatpush2.bf16.msra.mxu0 %v1148
    %1189 = vmatprep.subr.bf16.mxu0 0
    %1190 = vmatpush2.bf16.msra.mxu0 %v1147
    %1191 = vmatprep.subr.bf16.mxu0 0
    %1192 = vmatpush2.bf16.msra.mxu0 %v1146
    %1193 = vmatprep.subr.bf16.mxu0 0
    %1194 = vmatpush2.bf16.msra.mxu0 %v1145
    %1195 = vmatprep.subr.bf16.mxu0 0
    %1196 = vmatpush2.bf16.msra.mxu0 %v1144
    %1197 = vmatprep.subr.bf16.mxu0 0
    %1198 = vmatpush2.bf16.msra.mxu0 %v1143
    %1199 = vmatprep.mubr.bf16.mxu0 %v1031
    %1200 = vmatmul.mubr.bf16.gmra.mxu0 %v1030
    %v1201 = vpop.f32.mrf.mxu0
    %v1202 = vadd.f32 %v1069, %v1201
    %v1203 = vpop.f32.mrf.mxu0
    %v1204 = vpop.f32.mrf.mxu0
    %v1205 = vpop.f32.mrf.mxu0
    %1206 = vdwg.mxu0
    %vm1207 = vcmask 74752
    %1208 = vst.msk [vmem:[#allocation2] sm:$0x3] %vm1207, %v1202
    %v1209 = vsel %vm1207, %v1202, -inf
    %1210 = vmax.xlane.f32.xlu0 %v1209
    %v1211 = vpop.xlane.xlu0 %1210
    %v1212 = vsub.f32 %v1202, %v1211
    %v1213 = vmul.f32 %v1212, 1.442695
    %v1214 = vpow.pop %v1213
    %v1215 = vsel %vm1207, %v1214, 0.0
    %1216 = vadd.xlane.f32.xlu0 %v1215
    %v1217 = vpop.xlane.xlu0 %1216
    %v1218 = vrcp.pop %v1217
    %v1219 = vmul.f32 %v1214, %v1218
    %1220 = vst.msk [vmem:[#allocation4] sm:$0x3] %vm1207, %v1219
    // Predicated region
    $region22: #{network_forward.5} parent=1 // pred_check
      _
    $region23: #{network_forward.5} parent=1 // pred_check_branch
      %1222 = sbr.rel (0) target = $region25
    $region24: #{network_forward.5} parent=1 // pred_region
      %s1224 = ssub.s32 32, 32
      %1225 = vsyncadd [#allocation3], %s1224
      %s1227 = sshll.u32 [#allocation2], 4
      %s1228 = int_to_ptr.vmem [resolvable:$true] %s1227
      %1230 = dma.vmem_to_hbm [thread:$0]  %s1228, 32, %s5, [#allocation3]
    $region25: #{network_forward.5} parent=1 // pred_fallthru
      _
    // Predicated region
    $region26: #{network_forward.5} parent=1 // pred_check
      _
    $region27: #{network_forward.5} parent=1 // pred_check_branch
      %1232 = sbr.rel (0) target = $region29
    $region28: #{network_forward.5} parent=1 // pred_region
      %s1234 = ssub.s32 32, 32
      %1235 = vsyncadd [#allocation5], %s1234
      %s1237 = sshll.u32 [#allocation4], 4
      %s1238 = int_to_ptr.vmem [resolvable:$true] %s1237
      %1240 = dma.vmem_to_hbm [thread:$0]  %s1238, 32, %s6, [#allocation5]
    $region29: #{network_forward.5} parent=1 // pred_fallthru
      _
    // Predicated region
    $region30: #{network_forward.5} parent=1 // pred_check
      _
    $region31: #{network_forward.5} parent=1 // pred_check_branch
      %1242 = sbr.rel (0) target = $region33
    $region32: #{network_forward.5} parent=1 // pred_region
      %1243 = dma.done [#allocation3], 32
    $region33: #{network_forward.5} parent=1 // pred_fallthru
      _
    // Predicated region
    $region34: #{network_forward.5} parent=1 // pred_check
      _
    $region35: #{network_forward.5} parent=1 // pred_check_branch
      %1245 = sbr.rel (0) target = $region37
    $region36: #{network_forward.5} parent=1 // pred_region
      %1246 = dma.done [#allocation5], 32
    $region37: #{network_forward.5} parent=1 // pred_fallthru
      _
    %1247 = vsyncpa [#allocation3], 1
    %1248 = vsyncpa [#allocation5], 1

</llo_original>
